<compile_context>
chip_gen: v7x
topology: tpu7x:2x2x1
jax: 0.10.0
libtpu: 0.0.40
codegen_flags: <defaults>
</compile_context>

<pallas_src>
import functools
import sys

import jax
import jax.numpy as jnp
from jax import lax
from jax.experimental import pallas as pl
from jax.experimental.pallas import tpu as pltpu

NEG_INF = -1e30  # additive key-padding bias (PyTorch uses -inf; finite value avoids NaNs)


def _softmax_ref(s):
    s = s - jnp.max(s, axis=-1, keepdims=True)
    e = jnp.exp(s)
    return e / jnp.sum(e, axis=-1, keepdims=True)


def encoder_layer_kernel(xq_ref, xkv_ref, mem_ref, maskb_ref,
                         wq2_ref, bq2_ref,
                         wkv_s_ref, bkv_s_ref, wkv_c_ref, bkv_c_ref,
                         wo2_ref, bo_ref,
                         g1_ref, be1_ref,
                         w1_ref, bf1_ref, w2_ref, bf2_ref,
                         g2_ref, be2_ref,
                         o_ref,
                         kvs_ref, kvc_ref, ctx_ref,
                         *, num_heads, head_dim):
    f32 = jnp.float32
    bf16 = jnp.bfloat16
    H = num_heads * head_dim

    # ---- Per-batch K/V projection hoist: only at the first q-tile of each batch ----
    @pl.when(pl.program_id(1) == 0)
    def _():
        kvs_ref[...] = (jnp.dot(xkv_ref[0], wkv_s_ref[...], preferred_element_type=f32)
                        + bkv_s_ref[...]).astype(bf16)      # (S, 2H) = [k_self | v_self]
        kvc_ref[...] = (jnp.dot(mem_ref[0], wkv_c_ref[...], preferred_element_type=f32)
                        + bkv_c_ref[...]).astype(bf16)      # (S, 2H) = [k_cross | v_cross]

    xq = xq_ref[0]        # (TQ, H) query tile, f32 (kept f32 for residual / LN)
    maskb = maskb_ref[0]  # (1, S)  f32 additive key-padding bias

    # Fused Q projection for self + cross; 1/sqrt(head_dim) folded into wq2/bq2 in the wrapper.
    qq = jnp.dot(xq.astype(bf16), wq2_ref[...], preferred_element_type=f32) + bq2_ref[...]
    qq_b = qq.astype(bf16)           # cast once; sliced per head below

    kvs = kvs_ref[...]               # (S, 2H) bf16
    kvc = kvc_ref[...]               # (S, 2H) bf16

    dnum = (((1,), (1,)), ((), ()))  # q @ k^T without materializing a transpose

    def softmax_f32(s):
        m = jnp.max(s, axis=-1, keepdims=True)
        e = jnp.exp(s - m)
        return e * pl.reciprocal(jnp.sum(e, axis=-1, keepdims=True), approx=True)

    def head_ctx(q_h, k_h, v_h):
        # scores / softmax in f32; mask added to the f32 accumulated scores.
        s = lax.dot_general(q_h, k_h, dnum, preferred_element_type=f32) + maskb
        p = softmax_f32(s)
        return jnp.dot(p.astype(bf16), v_h, preferred_element_type=f32).astype(bf16)

    # Static loop over heads; contexts are written into one (TQ, 2H) bf16 scratch so the
    # output projection is a single full-K matmul (no K=head_dim matmuls, no f32 accum adds).
    for h in range(num_heads):
        lo, hi = h * head_dim, (h + 1) * head_dim
        ctx_ref[:, lo:hi] = head_ctx(qq_b[:, lo:hi],
                                     kvs[:, lo:hi], kvs[:, H + lo:H + hi])       # self head
        ctx_ref[:, H + lo:H + hi] = head_ctx(qq_b[:, H + lo:H + hi],
                                             kvc[:, lo:hi], kvc[:, H + lo:H + hi])  # cross head

    # One (TQ,2H)x(2H,H) out-projection; beta / (1-beta) folded into wo2, single combined bias.
    att = jnp.dot(ctx_ref[...], wo2_ref[...], preferred_element_type=f32) + bo_ref[...]

    def layernorm(y, g, b):
        mu = jnp.mean(y, axis=-1, keepdims=True)
        var = jnp.mean((y - mu) ** 2, axis=-1, keepdims=True)
        return (y - mu) * lax.rsqrt(var + 1e-5) * g + b

    y1 = layernorm(att + xq, g1_ref[...], be1_ref[...])
    h1 = jnp.maximum(
        jnp.dot(y1.astype(bf16), w1_ref[...], preferred_element_type=f32) + bf1_ref[...], 0.0)
    ff = jnp.dot(h1.astype(bf16), w2_ref[...], preferred_element_type=f32) + bf2_ref[...]
    out = layernorm(ff + y1, g2_ref[...], be2_ref[...])
    o_ref[...] = out[None, :, :]


def transformer_encoder_layer(x, mem, src_mask, params, *, num_heads, beta=0.5):
    B, S, H = x.shape
    head_dim = H // num_heads
    f32, bf16 = jnp.float32, jnp.bfloat16
    scale = 1.0 / (head_dim ** 0.5)

    # key_padding_mask = ~src_mask  -> positions where src_mask is False get NEG_INF.
    # (Finite NEG_INF: fully-masked rows give a uniform distribution instead of PyTorch's NaN.)
    maskb = jnp.where(src_mask, 0.0, NEG_INF).astype(f32).reshape(B, 1, S)

    # ---- wrapper-side weight repacking (once, outside the kernel) ----
    winp_s, binp_s = params["winp_s"], params["binp_s"]
    winp_c, binp_c = params["winp_c"], params["binp_c"]
    # [q_self | q_cross] with the 1/sqrt(head_dim) scale folded into weight AND bias.
    wq2 = (scale * jnp.concatenate([winp_s[:, :H], winp_c[:, :H]], axis=1)).astype(bf16)  # (H,2H)
    bq2 = (scale * jnp.concatenate([binp_s[:, :H], binp_c[:, :H]], axis=1)).astype(f32)   # (1,2H)
    wkv_s = winp_s[:, H:].astype(bf16)   # (H, 2H) = [Wk_self | Wv_self]
    bkv_s = binp_s[:, H:].astype(f32)
    wkv_c = winp_c[:, H:].astype(bf16)   # (H, 2H) = [Wk_cross | Wv_cross]
    bkv_c = binp_c[:, H:].astype(f32)
    # beta mix folded into a single stacked output projection (2H, H) + one f32 bias.
    wo2 = jnp.concatenate([beta * params["wo_s"], (1.0 - beta) * params["wo_c"]],
                          axis=0).astype(bf16)
    bo = (beta * params["bo_s"] + (1.0 - beta) * params["bo_c"]).astype(f32)
    w1, bf1 = params["w1"].astype(bf16), params["bf1"].astype(f32)
    w2, bf2 = params["w2"].astype(bf16), params["bf2"].astype(f32)
    g1, be1 = params["g1"].astype(f32), params["be1"].astype(f32)
    g2, be2 = params["g2"].astype(f32), params["be2"].astype(f32)

    weights = [wq2, bq2, wkv_s, bkv_s, wkv_c, bkv_c, wo2, bo,
               g1, be1, w1, bf1, w2, bf2, g2, be2]

    # Query tiling: bounds the live (TQ, S) score / (TQ, F) FFN working set per grid step.
    # TODO(synk): on v6e/v5e (128 MiB VMEM) sweep TQ up to 256-512 for long sequences.
    TQ = 128 if S % 128 == 0 else S
    grid = (B, S // TQ)

    kernel = functools.partial(encoder_layer_kernel, num_heads=num_heads, head_dim=head_dim)
    xq = x.astype(f32)      # query path stays f32 (residual / LayerNorm)
    xkv = x.astype(bf16)    # KV sources only ever feed the MXU -> stream as bf16
    memb = mem.astype(bf16)

    scratch_shapes = [
        pltpu.VMEM((S, 2 * H), bf16),    # hoisted [k_self | v_self]  (persists across q-tiles)
        pltpu.VMEM((S, 2 * H), bf16),    # hoisted [k_cross | v_cross]
        pltpu.VMEM((TQ, 2 * H), bf16),   # per-head contexts gathered for one out-proj matmul
    ]

    def _call(weight_mode):
        def wspec(shape):
            nd = len(shape)
            imap = lambda b, q, _nd=nd: (0,) * _nd
            if weight_mode is None:
                return pl.BlockSpec(shape, imap)
            return pl.BlockSpec(shape, imap, pipeline_mode=weight_mode)

        in_specs = [
            pl.BlockSpec((1, TQ, H), lambda b, q: (b, q, 0)),   # query tile (f32)
            pl.BlockSpec((1, S, H), lambda b, q: (b, 0, 0)),    # self-attn k/v source (bf16)
            pl.BlockSpec((1, S, H), lambda b, q: (b, 0, 0)),    # cross-attn k/v source (bf16)
            pl.BlockSpec((1, 1, S), lambda b, q: (b, 0, 0)),    # key-padding bias
        ] + [wspec(w.shape) for w in weights]

        out = pl.pallas_call(
            kernel,
            out_shape=jax.ShapeDtypeStruct((B, S, H), f32),
            grid_spec=pltpu.PrefetchScalarGridSpec(
                num_scalar_prefetch=0,
                grid=grid,
                in_specs=in_specs,
                out_specs=pl.BlockSpec((1, TQ, H), lambda b, q: (b, q, 0)),
                scratch_shapes=scratch_shapes,
            ),
            compiler_params=pltpu.CompilerParams(
                # batch axis parallel (megacore sharding); q axis must be sequential so the
                # per-batch hoisted KV scratch stays valid across q-tiles.
                dimension_semantics=("parallel", "arbitrary"),
                vmem_limit_bytes=48 * 1024 * 1024,   # headroom on v7x's 64 MiB physical VMEM
            ),
        )(xq, xkv, memb, maskb, *weights)
        return jax.block_until_ready(out)

    # Weights have constant index maps: single-buffer them to halve resident weight VMEM.
    buffered = getattr(pl, "Buffered", None)
    if buffered is not None:
        try:
            return _call(buffered(1))
        except Exception as e:  # pipeline_mode unsupported in this build -> log & fall back
            print(f"pipeline_mode=Buffered(1) rejected ({type(e).__name__}: {e}); "
                  "falling back to default double-buffered weights", file=sys.stderr)
    return _call(None)


def reference(x, mem, src_mask, p, num_heads, beta):
    """Pure-JAX f32 reference replicating the PyTorch forward (eval mode)."""
    B, S, H = x.shape
    hd = H // num_heads
    maskb = jnp.where(src_mask, 0.0, NEG_INF)[:, None, None, :]

    def mha(xq, xkv, winp, binp, wo, bo):
        q = xq @ winp[:, :H] + binp[0, :H]
        k = xkv @ winp[:, H:2 * H] + binp[0, H:2 * H]
        v = xkv @ winp[:, 2 * H:] + binp[0, 2 * H:]
        qh = q.reshape(B, S, num_heads, hd).transpose(0, 2, 1, 3)
        kh = k.reshape(B, S, num_heads, hd).transpose(0, 2, 1, 3)
        vh = v.reshape(B, S, num_heads, hd).transpose(0, 2, 1, 3)
        s = jnp.einsum('bhqd,bhkd->bhqk', qh, kh) / (hd ** 0.5) + maskb
        pr = _softmax_ref(s)
        o = jnp.einsum('bhqk,bhkd->bhqd', pr, vh).transpose(0, 2, 1, 3).reshape(B, S, H)
        return o @ wo + bo[0]

    so = mha(x, x, p["winp_s"], p["binp_s"], p["wo_s"], p["bo_s"])
    co = mha(x, mem, p["winp_c"], p["binp_c"], p["wo_c"], p["bo_c"])
    att = beta * so + (1 - beta) * co

    def ln(y, g, b):
        mu = y.mean(-1, keepdims=True)
        var = ((y - mu) ** 2).mean(-1, keepdims=True)
        return (y - mu) / jnp.sqrt(var + 1e-5) * g[0] + b[0]

    y1 = ln(att + x, p["g1"], p["be1"])
    ff = jnp.maximum(y1 @ p["w1"] + p["bf1"][0], 0.0) @ p["w2"] + p["bf2"][0]
    return ln(ff + y1, p["g2"], p["be2"])


def init_params(key, H, F):
    ks = jax.random.split(key, 8)
    s = 0.1
    return {
        "winp_s": s * jax.random.normal(ks[0], (H, 3 * H), jnp.float32),
        "binp_s": s * jax.random.normal(ks[1], (1, 3 * H), jnp.float32),
        "wo_s":   s * jax.random.normal(ks[2], (H, H), jnp.float32),
        "bo_s":   s * jax.random.normal(ks[3], (1, H), jnp.float32),
        "winp_c": s * jax.random.normal(ks[4], (H, 3 * H), jnp.float32),
        "binp_c": s * jax.random.normal(ks[5], (1, 3 * H), jnp.float32),
        "wo_c":   s * jax.random.normal(ks[6], (H, H), jnp.float32),
        "bo_c":   s * jax.random.normal(ks[7], (1, H), jnp.float32),
        "g1": jnp.ones((1, H), jnp.float32), "be1": jnp.zeros((1, H), jnp.float32),
        "w1": s * jax.random.normal(jax.random.fold_in(key, 100), (H, F), jnp.float32),
        "bf1": s * jax.random.normal(jax.random.fold_in(key, 101), (1, F), jnp.float32),
        "w2": s * jax.random.normal(jax.random.fold_in(key, 102), (F, H), jnp.float32),
        "bf2": s * jax.random.normal(jax.random.fold_in(key, 103), (1, H), jnp.float32),
        "g2": jnp.ones((1, H), jnp.float32), "be2": jnp.zeros((1, H), jnp.float32),
    }


if __name__ == "__main__":
    B, S, H, NH, F = 2, 8, 32, 4, 64  # small shapes consistent with the module
    BETA = 0.5

    key = jax.random.PRNGKey(0)
    kx, km, kp = jax.random.split(key, 3)
    x = jax.random.normal(kx, (B, S, H), jnp.float32)      # e_k_l_minus_1
    mem = jax.random.normal(km, (B, S, H), jnp.float32)    # e_k_minus_1
    # src_mask: True = valid token. Batch 0 fully valid, batch 1 has 3 padded tail tokens.
    src_mask = jnp.array([[True] * S, [True] * (S - 3) + [False] * 3], dtype=bool)

    params = init_params(kp, H, F)

    out = transformer_encoder_layer(x, mem, src_mask, params, num_heads=NH, beta=BETA)
    out = jax.block_until_ready(out)

    ref = reference(x, mem, src_mask, params, NH, BETA)
    assert out.shape == (B, S, H)
    err = float(jnp.max(jnp.abs(out - ref)))
    # bf16 MXU operands + EUP approx-reciprocal softmax => looser tolerance vs the f32 reference.
    assert jnp.allclose(out, ref, rtol=5e-2, atol=5e-2), f"max abs err {err}"

    print("KERNEL_OK")
</pallas_src>

<mosaic_0001>
module attributes {stable_mosaic.version = 11 : i64} {
  func.func @encoder_layer_kernel(%arg0: i32, %arg1: i32, %arg2: memref<1x8x32xf32, #tpu.memory_space<vmem>>, %arg3: memref<1x8x32xbf16, #tpu.memory_space<vmem>>, %arg4: memref<1x8x32xbf16, #tpu.memory_space<vmem>>, %arg5: memref<1x1x8xf32, #tpu.memory_space<vmem>>, %arg6: memref<32x64xbf16, #tpu.memory_space<vmem>>, %arg7: memref<1x64xf32, #tpu.memory_space<vmem>>, %arg8: memref<32x64xbf16, #tpu.memory_space<vmem>>, %arg9: memref<1x64xf32, #tpu.memory_space<vmem>>, %arg10: memref<32x64xbf16, #tpu.memory_space<vmem>>, %arg11: memref<1x64xf32, #tpu.memory_space<vmem>>, %arg12: memref<64x32xbf16, #tpu.memory_space<vmem>>, %arg13: memref<1x32xf32, #tpu.memory_space<vmem>>, %arg14: memref<1x32xf32, #tpu.memory_space<vmem>>, %arg15: memref<1x32xf32, #tpu.memory_space<vmem>>, %arg16: memref<32x64xbf16, #tpu.memory_space<vmem>>, %arg17: memref<1x64xf32, #tpu.memory_space<vmem>>, %arg18: memref<64x32xbf16, #tpu.memory_space<vmem>>, %arg19: memref<1x32xf32, #tpu.memory_space<vmem>>, %arg20: memref<1x32xf32, #tpu.memory_space<vmem>>, %arg21: memref<1x32xf32, #tpu.memory_space<vmem>>, %arg22: memref<1x8x32xf32, #tpu.memory_space<vmem>>, %arg23: memref<8x64xbf16, #tpu.memory_space<vmem>>, %arg24: memref<8x64xbf16, #tpu.memory_space<vmem>>, %arg25: memref<8x64xbf16, #tpu.memory_space<vmem>>) attributes {dimension_semantics = [#tpu.dimension_semantics<parallel>, #tpu.dimension_semantics<arbitrary>], iteration_bounds = array<i64: 2, 1>, scalar_prefetch = 0 : i64, scratch_operands = 3 : i64, tpu.core_type = #tpu.core_type<tc>, window_params = [{transform_indices = @transform_0, window_bounds = array<i64: 1, 8, 32>}, {transform_indices = @transform_1, window_bounds = array<i64: 1, 8, 32>}, {transform_indices = @transform_2, window_bounds = array<i64: 1, 8, 32>}, {transform_indices = @transform_3, window_bounds = array<i64: 1, 1, 8>}, {pipeline_mode = #tpu.pipeline_mode<synchronous>, transform_indices = @transform_4, window_bounds = array<i64: 32, 64>}, {pipeline_mode = #tpu.pipeline_mode<synchronous>, transform_indices = @transform_5, window_bounds = array<i64: 1, 64>}, {pipeline_mode = #tpu.pipeline_mode<synchronous>, transform_indices = @transform_6, window_bounds = array<i64: 32, 64>}, {pipeline_mode = #tpu.pipeline_mode<synchronous>, transform_indices = @transform_7, window_bounds = array<i64: 1, 64>}, {pipeline_mode = #tpu.pipeline_mode<synchronous>, transform_indices = @transform_8, window_bounds = array<i64: 32, 64>}, {pipeline_mode = #tpu.pipeline_mode<synchronous>, transform_indices = @transform_9, window_bounds = array<i64: 1, 64>}, {pipeline_mode = #tpu.pipeline_mode<synchronous>, transform_indices = @transform_10, window_bounds = array<i64: 64, 32>}, {pipeline_mode = #tpu.pipeline_mode<synchronous>, transform_indices = @transform_11, window_bounds = array<i64: 1, 32>}, {pipeline_mode = #tpu.pipeline_mode<synchronous>, transform_indices = @transform_12, window_bounds = array<i64: 1, 32>}, {pipeline_mode = #tpu.pipeline_mode<synchronous>, transform_indices = @transform_13, window_bounds = array<i64: 1, 32>}, {pipeline_mode = #tpu.pipeline_mode<synchronous>, transform_indices = @transform_14, window_bounds = array<i64: 32, 64>}, {pipeline_mode = #tpu.pipeline_mode<synchronous>, transform_indices = @transform_15, window_bounds = array<i64: 1, 64>}, {pipeline_mode = #tpu.pipeline_mode<synchronous>, transform_indices = @transform_16, window_bounds = array<i64: 64, 32>}, {pipeline_mode = #tpu.pipeline_mode<synchronous>, transform_indices = @transform_17, window_bounds = array<i64: 1, 32>}, {pipeline_mode = #tpu.pipeline_mode<synchronous>, transform_indices = @transform_18, window_bounds = array<i64: 1, 32>}, {pipeline_mode = #tpu.pipeline_mode<synchronous>, transform_indices = @transform_19, window_bounds = array<i64: 1, 32>}, {transform_indices = @transform_20, window_bounds = array<i64: 1, 8, 32>}]} {
    %c0_i32 = arith.constant 0 : i32
    %0 = arith.cmpi eq, %arg1, %c0_i32 : i32
    %1 = arith.extui %0 : i1 to i32
    %c0_i32_0 = arith.constant 0 : i32
    %2 = arith.cmpi ne, %1, %c0_i32_0 : i32
    scf.if %2 {
      %c0_94 = arith.constant 0 : index
      %c0_95 = arith.constant 0 : index
      %c0_96 = arith.constant 0 : index
      %248 = vector.load %arg3[%c0_94, %c0_95, %c0_96] : memref<1x8x32xbf16, #tpu.memory_space<vmem>>, vector<1x8x32xbf16>
      %249 = vector.shape_cast %248 : vector<1x8x32xbf16> to vector<8x32xbf16>
      %c0_97 = arith.constant 0 : index
      %c0_98 = arith.constant 0 : index
      %250 = vector.load %arg8[%c0_97, %c0_98] : memref<32x64xbf16, #tpu.memory_space<vmem>>, vector<32x64xbf16>
      %cst_99 = arith.constant dense<0.000000e+00> : vector<8x64xf32>
      %251 = tpu.matmul %249, %250, %cst_99 {dimension_numbers = #tpu.dot_dimension_numbers<[1], [0], [0], [1], [0, 0, 1, 1], [], []>} : vector<8x32xbf16>, vector<32x64xbf16>, vector<8x64xf32> -> vector<8x64xf32>
      %c0_100 = arith.constant 0 : index
      %c0_101 = arith.constant 0 : index
      %252 = vector.load %arg9[%c0_100, %c0_101] : memref<1x64xf32, #tpu.memory_space<vmem>>, vector<1x64xf32>
      %253 = vector.broadcast %252 : vector<1x64xf32> to vector<8x64xf32>
      %254 = arith.addf %251, %253 : vector<8x64xf32>
      %255 = arith.truncf %254 : vector<8x64xf32> to vector<8x64xbf16>
      %c0_102 = arith.constant 0 : index
      %c0_103 = arith.constant 0 : index
      %256 = vector.load %arg23[%c0_102, %c0_103] : memref<8x64xbf16, #tpu.memory_space<vmem>>, vector<8x64xbf16>
      tpu.vector_store %arg23[%c0_102, %c0_103], %255 {strides = array<i32>} : memref<8x64xbf16, #tpu.memory_space<vmem>>, vector<8x64xbf16>,
      %c0_104 = arith.constant 0 : index
      %c0_105 = arith.constant 0 : index
      %c0_106 = arith.constant 0 : index
      %257 = vector.load %arg4[%c0_104, %c0_105, %c0_106] : memref<1x8x32xbf16, #tpu.memory_space<vmem>>, vector<1x8x32xbf16>
      %258 = vector.shape_cast %257 : vector<1x8x32xbf16> to vector<8x32xbf16>
      %c0_107 = arith.constant 0 : index
      %c0_108 = arith.constant 0 : index
      %259 = vector.load %arg10[%c0_107, %c0_108] : memref<32x64xbf16, #tpu.memory_space<vmem>>, vector<32x64xbf16>
      %cst_109 = arith.constant dense<0.000000e+00> : vector<8x64xf32>
      %260 = tpu.matmul %258, %259, %cst_109 {dimension_numbers = #tpu.dot_dimension_numbers<[1], [0], [0], [1], [0, 0, 1, 1], [], []>} : vector<8x32xbf16>, vector<32x64xbf16>, vector<8x64xf32> -> vector<8x64xf32>
      %c0_110 = arith.constant 0 : index
      %c0_111 = arith.constant 0 : index
      %261 = vector.load %arg11[%c0_110, %c0_111] : memref<1x64xf32, #tpu.memory_space<vmem>>, vector<1x64xf32>
      %262 = vector.broadcast %261 : vector<1x64xf32> to vector<8x64xf32>
      %263 = arith.addf %260, %262 : vector<8x64xf32>
      %264 = arith.truncf %263 : vector<8x64xf32> to vector<8x64xbf16>
      %c0_112 = arith.constant 0 : index
      %c0_113 = arith.constant 0 : index
      %265 = vector.load %arg24[%c0_112, %c0_113] : memref<8x64xbf16, #tpu.memory_space<vmem>>, vector<8x64xbf16>
      tpu.vector_store %arg24[%c0_112, %c0_113], %264 {strides = array<i32>} : memref<8x64xbf16, #tpu.memory_space<vmem>>, vector<8x64xbf16>,
    } else {
    }
    %c0 = arith.constant 0 : index
    %c0_1 = arith.constant 0 : index
    %c0_2 = arith.constant 0 : index
    %3 = vector.load %arg2[%c0, %c0_1, %c0_2] : memref<1x8x32xf32, #tpu.memory_space<vmem>>, vector<1x8x32xf32>
    %4 = vector.shape_cast %3 : vector<1x8x32xf32> to vector<8x32xf32>
    %c0_3 = arith.constant 0 : index
    %c0_4 = arith.constant 0 : index
    %c0_5 = arith.constant 0 : index
    %5 = vector.load %arg5[%c0_3, %c0_4, %c0_5] : memref<1x1x8xf32, #tpu.memory_space<vmem>>, vector<1x1x8xf32>
    %6 = vector.shape_cast %5 : vector<1x1x8xf32> to vector<1x8xf32>
    %7 = arith.truncf %4 : vector<8x32xf32> to vector<8x32xbf16>
    %c0_6 = arith.constant 0 : index
    %c0_7 = arith.constant 0 : index
    %8 = vector.load %arg6[%c0_6, %c0_7] : memref<32x64xbf16, #tpu.memory_space<vmem>>, vector<32x64xbf16>
    %cst = arith.constant dense<0.000000e+00> : vector<8x64xf32>
    %9 = tpu.matmul %7, %8, %cst {dimension_numbers = #tpu.dot_dimension_numbers<[1], [0], [0], [1], [0, 0, 1, 1], [], []>} : vector<8x32xbf16>, vector<32x64xbf16>, vector<8x64xf32> -> vector<8x64xf32>
    %c0_8 = arith.constant 0 : index
    %c0_9 = arith.constant 0 : index
    %10 = vector.load %arg7[%c0_8, %c0_9] : memref<1x64xf32, #tpu.memory_space<vmem>>, vector<1x64xf32>
    %11 = vector.broadcast %10 : vector<1x64xf32> to vector<8x64xf32>
    %12 = arith.addf %9, %11 : vector<8x64xf32>
    %13 = arith.truncf %12 : vector<8x64xf32> to vector<8x64xbf16>
    %c0_10 = arith.constant 0 : index
    %c0_11 = arith.constant 0 : index
    %14 = vector.load %arg23[%c0_10, %c0_11] : memref<8x64xbf16, #tpu.memory_space<vmem>>, vector<8x64xbf16>
    %c0_12 = arith.constant 0 : index
    %c0_13 = arith.constant 0 : index
    %15 = vector.load %arg24[%c0_12, %c0_13] : memref<8x64xbf16, #tpu.memory_space<vmem>>, vector<8x64xbf16>
    %16 = vector.extract_strided_slice %13 {offsets = [0, 0], sizes = [8, 8], strides = [1, 1]} : vector<8x64xbf16> to vector<8x8xbf16>
    %17 = vector.extract_strided_slice %14 {offsets = [0, 0], sizes = [8, 8], strides = [1, 1]} : vector<8x64xbf16> to vector<8x8xbf16>
    %18 = vector.extract_strided_slice %14 {offsets = [0, 32], sizes = [8, 8], strides = [1, 1]} : vector<8x64xbf16> to vector<8x8xbf16>
    %cst_14 = arith.constant dense<0.000000e+00> : vector<8x8xf32>
    %19 = tpu.matmul %16, %17, %cst_14 {dimension_numbers = #tpu.dot_dimension_numbers<[1], [1], [0], [0], [0, 0, 1, 0], [], []>} : vector<8x8xbf16>, vector<8x8xbf16>, vector<8x8xf32> -> vector<8x8xf32>
    %20 = vector.broadcast %6 : vector<1x8xf32> to vector<8x8xf32>
    %21 = arith.addf %19, %20 : vector<8x8xf32>
    %cst_15 = arith.constant dense<0xFF800000> : vector<8xf32>
    %22 = vector.multi_reduction <maximumf>, %21, %cst_15 [1] : vector<8x8xf32> to vector<8xf32>
    %23 = vector.shape_cast %22 : vector<8xf32> to vector<8x1xf32>
    %24 = vector.broadcast %23 : vector<8x1xf32> to vector<8x8xf32>
    %25 = arith.subf %21, %24 : vector<8x8xf32>
    %26 = math.exp %25 : vector<8x8xf32>
    %cst_16 = arith.constant dense<0.000000e+00> : vector<8xf32>
    %27 = vector.multi_reduction <add>, %26, %cst_16 [1] : vector<8x8xf32> to vector<8xf32>
    %28 = vector.shape_cast %27 : vector<8xf32> to vector<8x1xf32>
    %29 = tpu.reciprocal %28 {approx = true} : vector<8x1xf32> -> vector<8x1xf32>
    %30 = vector.broadcast %29 : vector<8x1xf32> to vector<8x8xf32>
    %31 = arith.mulf %26, %30 : vector<8x8xf32>
    %32 = arith.truncf %31 : vector<8x8xf32> to vector<8x8xbf16>
    %cst_17 = arith.constant dense<0.000000e+00> : vector<8x8xf32>
    %33 = tpu.matmul %32, %18, %cst_17 {dimension_numbers = #tpu.dot_dimension_numbers<[1], [0], [0], [1], [0, 0, 1, 1], [], []>} : vector<8x8xbf16>, vector<8x8xbf16>, vector<8x8xf32> -> vector<8x8xf32>
    %34 = arith.truncf %33 : vector<8x8xf32> to vector<8x8xbf16>
    %c0_18 = arith.constant 0 : index
    %c0_19 = arith.constant 0 : index
    %35 = vector.load %arg25[%c0_18, %c0_19] : memref<8x64xbf16, #tpu.memory_space<vmem>>, vector<8x8xbf16>
    tpu.vector_store %arg25[%c0_18, %c0_19], %34 {strides = array<i32>} : memref<8x64xbf16, #tpu.memory_space<vmem>>, vector<8x8xbf16>,
    %36 = vector.extract_strided_slice %13 {offsets = [0, 32], sizes = [8, 8], strides = [1, 1]} : vector<8x64xbf16> to vector<8x8xbf16>
    %37 = vector.extract_strided_slice %15 {offsets = [0, 0], sizes = [8, 8], strides = [1, 1]} : vector<8x64xbf16> to vector<8x8xbf16>
    %38 = vector.extract_strided_slice %15 {offsets = [0, 32], sizes = [8, 8], strides = [1, 1]} : vector<8x64xbf16> to vector<8x8xbf16>
    %cst_20 = arith.constant dense<0.000000e+00> : vector<8x8xf32>
    %39 = tpu.matmul %36, %37, %cst_20 {dimension_numbers = #tpu.dot_dimension_numbers<[1], [1], [0], [0], [0, 0, 1, 0], [], []>} : vector<8x8xbf16>, vector<8x8xbf16>, vector<8x8xf32> -> vector<8x8xf32>
    %40 = vector.broadcast %6 : vector<1x8xf32> to vector<8x8xf32>
    %41 = arith.addf %39, %40 : vector<8x8xf32>
    %cst_21 = arith.constant dense<0xFF800000> : vector<8xf32>
    %42 = vector.multi_reduction <maximumf>, %41, %cst_21 [1] : vector<8x8xf32> to vector<8xf32>
    %43 = vector.shape_cast %42 : vector<8xf32> to vector<8x1xf32>
    %44 = vector.broadcast %43 : vector<8x1xf32> to vector<8x8xf32>
    %45 = arith.subf %41, %44 : vector<8x8xf32>
    %46 = math.exp %45 : vector<8x8xf32>
    %cst_22 = arith.constant dense<0.000000e+00> : vector<8xf32>
    %47 = vector.multi_reduction <add>, %46, %cst_22 [1] : vector<8x8xf32> to vector<8xf32>
    %48 = vector.shape_cast %47 : vector<8xf32> to vector<8x1xf32>
    %49 = tpu.reciprocal %48 {approx = true} : vector<8x1xf32> -> vector<8x1xf32>
    %50 = vector.broadcast %49 : vector<8x1xf32> to vector<8x8xf32>
    %51 = arith.mulf %46, %50 : vector<8x8xf32>
    %52 = arith.truncf %51 : vector<8x8xf32> to vector<8x8xbf16>
    %cst_23 = arith.constant dense<0.000000e+00> : vector<8x8xf32>
    %53 = tpu.matmul %52, %38, %cst_23 {dimension_numbers = #tpu.dot_dimension_numbers<[1], [0], [0], [1], [0, 0, 1, 1], [], []>} : vector<8x8xbf16>, vector<8x8xbf16>, vector<8x8xf32> -> vector<8x8xf32>
    %54 = arith.truncf %53 : vector<8x8xf32> to vector<8x8xbf16>
    %c0_24 = arith.constant 0 : index
    %c32 = arith.constant 32 : index
    %55 = vector.load %arg25[%c0_24, %c32] : memref<8x64xbf16, #tpu.memory_space<vmem>>, vector<8x8xbf16>
    tpu.vector_store %arg25[%c0_24, %c32], %54 {strides = array<i32>} : memref<8x64xbf16, #tpu.memory_space<vmem>>, vector<8x8xbf16>,
    %56 = vector.extract_strided_slice %13 {offsets = [0, 8], sizes = [8, 8], strides = [1, 1]} : vector<8x64xbf16> to vector<8x8xbf16>
    %57 = vector.extract_strided_slice %14 {offsets = [0, 8], sizes = [8, 8], strides = [1, 1]} : vector<8x64xbf16> to vector<8x8xbf16>
    %58 = vector.extract_strided_slice %14 {offsets = [0, 40], sizes = [8, 8], strides = [1, 1]} : vector<8x64xbf16> to vector<8x8xbf16>
    %cst_25 = arith.constant dense<0.000000e+00> : vector<8x8xf32>
    %59 = tpu.matmul %56, %57, %cst_25 {dimension_numbers = #tpu.dot_dimension_numbers<[1], [1], [0], [0], [0, 0, 1, 0], [], []>} : vector<8x8xbf16>, vector<8x8xbf16>, vector<8x8xf32> -> vector<8x8xf32>
    %60 = vector.broadcast %6 : vector<1x8xf32> to vector<8x8xf32>
    %61 = arith.addf %59, %60 : vector<8x8xf32>
    %cst_26 = arith.constant dense<0xFF800000> : vector<8xf32>
    %62 = vector.multi_reduction <maximumf>, %61, %cst_26 [1] : vector<8x8xf32> to vector<8xf32>
    %63 = vector.shape_cast %62 : vector<8xf32> to vector<8x1xf32>
    %64 = vector.broadcast %63 : vector<8x1xf32> to vector<8x8xf32>
    %65 = arith.subf %61, %64 : vector<8x8xf32>
    %66 = math.exp %65 : vector<8x8xf32>
    %cst_27 = arith.constant dense<0.000000e+00> : vector<8xf32>
    %67 = vector.multi_reduction <add>, %66, %cst_27 [1] : vector<8x8xf32> to vector<8xf32>
    %68 = vector.shape_cast %67 : vector<8xf32> to vector<8x1xf32>
    %69 = tpu.reciprocal %68 {approx = true} : vector<8x1xf32> -> vector<8x1xf32>
    %70 = vector.broadcast %69 : vector<8x1xf32> to vector<8x8xf32>
    %71 = arith.mulf %66, %70 : vector<8x8xf32>
    %72 = arith.truncf %71 : vector<8x8xf32> to vector<8x8xbf16>
    %cst_28 = arith.constant dense<0.000000e+00> : vector<8x8xf32>
    %73 = tpu.matmul %72, %58, %cst_28 {dimension_numbers = #tpu.dot_dimension_numbers<[1], [0], [0], [1], [0, 0, 1, 1], [], []>} : vector<8x8xbf16>, vector<8x8xbf16>, vector<8x8xf32> -> vector<8x8xf32>
    %74 = arith.truncf %73 : vector<8x8xf32> to vector<8x8xbf16>
    %c0_29 = arith.constant 0 : index
    %c8 = arith.constant 8 : index
    %75 = vector.load %arg25[%c0_29, %c8] : memref<8x64xbf16, #tpu.memory_space<vmem>>, vector<8x8xbf16>
    tpu.vector_store %arg25[%c0_29, %c8], %74 {strides = array<i32>} : memref<8x64xbf16, #tpu.memory_space<vmem>>, vector<8x8xbf16>,
    %76 = vector.extract_strided_slice %13 {offsets = [0, 40], sizes = [8, 8], strides = [1, 1]} : vector<8x64xbf16> to vector<8x8xbf16>
    %77 = vector.extract_strided_slice %15 {offsets = [0, 8], sizes = [8, 8], strides = [1, 1]} : vector<8x64xbf16> to vector<8x8xbf16>
    %78 = vector.extract_strided_slice %15 {offsets = [0, 40], sizes = [8, 8], strides = [1, 1]} : vector<8x64xbf16> to vector<8x8xbf16>
    %cst_30 = arith.constant dense<0.000000e+00> : vector<8x8xf32>
    %79 = tpu.matmul %76, %77, %cst_30 {dimension_numbers = #tpu.dot_dimension_numbers<[1], [1], [0], [0], [0, 0, 1, 0], [], []>} : vector<8x8xbf16>, vector<8x8xbf16>, vector<8x8xf32> -> vector<8x8xf32>
    %80 = vector.broadcast %6 : vector<1x8xf32> to vector<8x8xf32>
    %81 = arith.addf %79, %80 : vector<8x8xf32>
    %cst_31 = arith.constant dense<0xFF800000> : vector<8xf32>
    %82 = vector.multi_reduction <maximumf>, %81, %cst_31 [1] : vector<8x8xf32> to vector<8xf32>
    %83 = vector.shape_cast %82 : vector<8xf32> to vector<8x1xf32>
    %84 = vector.broadcast %83 : vector<8x1xf32> to vector<8x8xf32>
    %85 = arith.subf %81, %84 : vector<8x8xf32>
    %86 = math.exp %85 : vector<8x8xf32>
    %cst_32 = arith.constant dense<0.000000e+00> : vector<8xf32>
    %87 = vector.multi_reduction <add>, %86, %cst_32 [1] : vector<8x8xf32> to vector<8xf32>
    %88 = vector.shape_cast %87 : vector<8xf32> to vector<8x1xf32>
    %89 = tpu.reciprocal %88 {approx = true} : vector<8x1xf32> -> vector<8x1xf32>
    %90 = vector.broadcast %89 : vector<8x1xf32> to vector<8x8xf32>
    %91 = arith.mulf %86, %90 : vector<8x8xf32>
    %92 = arith.truncf %91 : vector<8x8xf32> to vector<8x8xbf16>
    %cst_33 = arith.constant dense<0.000000e+00> : vector<8x8xf32>
    %93 = tpu.matmul %92, %78, %cst_33 {dimension_numbers = #tpu.dot_dimension_numbers<[1], [0], [0], [1], [0, 0, 1, 1], [], []>} : vector<8x8xbf16>, vector<8x8xbf16>, vector<8x8xf32> -> vector<8x8xf32>
    %94 = arith.truncf %93 : vector<8x8xf32> to vector<8x8xbf16>
    %c0_34 = arith.constant 0 : index
    %c40 = arith.constant 40 : index
    %95 = vector.load %arg25[%c0_34, %c40] : memref<8x64xbf16, #tpu.memory_space<vmem>>, vector<8x8xbf16>
    tpu.vector_store %arg25[%c0_34, %c40], %94 {strides = array<i32>} : memref<8x64xbf16, #tpu.memory_space<vmem>>, vector<8x8xbf16>,
    %96 = vector.extract_strided_slice %13 {offsets = [0, 16], sizes = [8, 8], strides = [1, 1]} : vector<8x64xbf16> to vector<8x8xbf16>
    %97 = vector.extract_strided_slice %14 {offsets = [0, 16], sizes = [8, 8], strides = [1, 1]} : vector<8x64xbf16> to vector<8x8xbf16>
    %98 = vector.extract_strided_slice %14 {offsets = [0, 48], sizes = [8, 8], strides = [1, 1]} : vector<8x64xbf16> to vector<8x8xbf16>
    %cst_35 = arith.constant dense<0.000000e+00> : vector<8x8xf32>
    %99 = tpu.matmul %96, %97, %cst_35 {dimension_numbers = #tpu.dot_dimension_numbers<[1], [1], [0], [0], [0, 0, 1, 0], [], []>} : vector<8x8xbf16>, vector<8x8xbf16>, vector<8x8xf32> -> vector<8x8xf32>
    %100 = vector.broadcast %6 : vector<1x8xf32> to vector<8x8xf32>
    %101 = arith.addf %99, %100 : vector<8x8xf32>
    %cst_36 = arith.constant dense<0xFF800000> : vector<8xf32>
    %102 = vector.multi_reduction <maximumf>, %101, %cst_36 [1] : vector<8x8xf32> to vector<8xf32>
    %103 = vector.shape_cast %102 : vector<8xf32> to vector<8x1xf32>
    %104 = vector.broadcast %103 : vector<8x1xf32> to vector<8x8xf32>
    %105 = arith.subf %101, %104 : vector<8x8xf32>
    %106 = math.exp %105 : vector<8x8xf32>
    %cst_37 = arith.constant dense<0.000000e+00> : vector<8xf32>
    %107 = vector.multi_reduction <add>, %106, %cst_37 [1] : vector<8x8xf32> to vector<8xf32>
    %108 = vector.shape_cast %107 : vector<8xf32> to vector<8x1xf32>
    %109 = tpu.reciprocal %108 {approx = true} : vector<8x1xf32> -> vector<8x1xf32>
    %110 = vector.broadcast %109 : vector<8x1xf32> to vector<8x8xf32>
    %111 = arith.mulf %106, %110 : vector<8x8xf32>
    %112 = arith.truncf %111 : vector<8x8xf32> to vector<8x8xbf16>
    %cst_38 = arith.constant dense<0.000000e+00> : vector<8x8xf32>
    %113 = tpu.matmul %112, %98, %cst_38 {dimension_numbers = #tpu.dot_dimension_numbers<[1], [0], [0], [1], [0, 0, 1, 1], [], []>} : vector<8x8xbf16>, vector<8x8xbf16>, vector<8x8xf32> -> vector<8x8xf32>
    %114 = arith.truncf %113 : vector<8x8xf32> to vector<8x8xbf16>
    %c0_39 = arith.constant 0 : index
    %c16 = arith.constant 16 : index
    %115 = vector.load %arg25[%c0_39, %c16] : memref<8x64xbf16, #tpu.memory_space<vmem>>, vector<8x8xbf16>
    tpu.vector_store %arg25[%c0_39, %c16], %114 {strides = array<i32>} : memref<8x64xbf16, #tpu.memory_space<vmem>>, vector<8x8xbf16>,
    %116 = vector.extract_strided_slice %13 {offsets = [0, 48], sizes = [8, 8], strides = [1, 1]} : vector<8x64xbf16> to vector<8x8xbf16>
    %117 = vector.extract_strided_slice %15 {offsets = [0, 16], sizes = [8, 8], strides = [1, 1]} : vector<8x64xbf16> to vector<8x8xbf16>
    %118 = vector.extract_strided_slice %15 {offsets = [0, 48], sizes = [8, 8], strides = [1, 1]} : vector<8x64xbf16> to vector<8x8xbf16>
    %cst_40 = arith.constant dense<0.000000e+00> : vector<8x8xf32>
    %119 = tpu.matmul %116, %117, %cst_40 {dimension_numbers = #tpu.dot_dimension_numbers<[1], [1], [0], [0], [0, 0, 1, 0], [], []>} : vector<8x8xbf16>, vector<8x8xbf16>, vector<8x8xf32> -> vector<8x8xf32>
    %120 = vector.broadcast %6 : vector<1x8xf32> to vector<8x8xf32>
    %121 = arith.addf %119, %120 : vector<8x8xf32>
    %cst_41 = arith.constant dense<0xFF800000> : vector<8xf32>
    %122 = vector.multi_reduction <maximumf>, %121, %cst_41 [1] : vector<8x8xf32> to vector<8xf32>
    %123 = vector.shape_cast %122 : vector<8xf32> to vector<8x1xf32>
    %124 = vector.broadcast %123 : vector<8x1xf32> to vector<8x8xf32>
    %125 = arith.subf %121, %124 : vector<8x8xf32>
    %126 = math.exp %125 : vector<8x8xf32>
    %cst_42 = arith.constant dense<0.000000e+00> : vector<8xf32>
    %127 = vector.multi_reduction <add>, %126, %cst_42 [1] : vector<8x8xf32> to vector<8xf32>
    %128 = vector.shape_cast %127 : vector<8xf32> to vector<8x1xf32>
    %129 = tpu.reciprocal %128 {approx = true} : vector<8x1xf32> -> vector<8x1xf32>
    %130 = vector.broadcast %129 : vector<8x1xf32> to vector<8x8xf32>
    %131 = arith.mulf %126, %130 : vector<8x8xf32>
    %132 = arith.truncf %131 : vector<8x8xf32> to vector<8x8xbf16>
    %cst_43 = arith.constant dense<0.000000e+00> : vector<8x8xf32>
    %133 = tpu.matmul %132, %118, %cst_43 {dimension_numbers = #tpu.dot_dimension_numbers<[1], [0], [0], [1], [0, 0, 1, 1], [], []>} : vector<8x8xbf16>, vector<8x8xbf16>, vector<8x8xf32> -> vector<8x8xf32>
    %134 = arith.truncf %133 : vector<8x8xf32> to vector<8x8xbf16>
    %c0_44 = arith.constant 0 : index
    %c48 = arith.constant 48 : index
    %135 = vector.load %arg25[%c0_44, %c48] : memref<8x64xbf16, #tpu.memory_space<vmem>>, vector<8x8xbf16>
    tpu.vector_store %arg25[%c0_44, %c48], %134 {strides = array<i32>} : memref<8x64xbf16, #tpu.memory_space<vmem>>, vector<8x8xbf16>,
    %136 = vector.extract_strided_slice %13 {offsets = [0, 24], sizes = [8, 8], strides = [1, 1]} : vector<8x64xbf16> to vector<8x8xbf16>
    %137 = vector.extract_strided_slice %14 {offsets = [0, 24], sizes = [8, 8], strides = [1, 1]} : vector<8x64xbf16> to vector<8x8xbf16>
    %138 = vector.extract_strided_slice %14 {offsets = [0, 56], sizes = [8, 8], strides = [1, 1]} : vector<8x64xbf16> to vector<8x8xbf16>
    %cst_45 = arith.constant dense<0.000000e+00> : vector<8x8xf32>
    %139 = tpu.matmul %136, %137, %cst_45 {dimension_numbers = #tpu.dot_dimension_numbers<[1], [1], [0], [0], [0, 0, 1, 0], [], []>} : vector<8x8xbf16>, vector<8x8xbf16>, vector<8x8xf32> -> vector<8x8xf32>
    %140 = vector.broadcast %6 : vector<1x8xf32> to vector<8x8xf32>
    %141 = arith.addf %139, %140 : vector<8x8xf32>
    %cst_46 = arith.constant dense<0xFF800000> : vector<8xf32>
    %142 = vector.multi_reduction <maximumf>, %141, %cst_46 [1] : vector<8x8xf32> to vector<8xf32>
    %143 = vector.shape_cast %142 : vector<8xf32> to vector<8x1xf32>
    %144 = vector.broadcast %143 : vector<8x1xf32> to vector<8x8xf32>
    %145 = arith.subf %141, %144 : vector<8x8xf32>
    %146 = math.exp %145 : vector<8x8xf32>
    %cst_47 = arith.constant dense<0.000000e+00> : vector<8xf32>
    %147 = vector.multi_reduction <add>, %146, %cst_47 [1] : vector<8x8xf32> to vector<8xf32>
    %148 = vector.shape_cast %147 : vector<8xf32> to vector<8x1xf32>
    %149 = tpu.reciprocal %148 {approx = true} : vector<8x1xf32> -> vector<8x1xf32>
    %150 = vector.broadcast %149 : vector<8x1xf32> to vector<8x8xf32>
    %151 = arith.mulf %146, %150 : vector<8x8xf32>
    %152 = arith.truncf %151 : vector<8x8xf32> to vector<8x8xbf16>
    %cst_48 = arith.constant dense<0.000000e+00> : vector<8x8xf32>
    %153 = tpu.matmul %152, %138, %cst_48 {dimension_numbers = #tpu.dot_dimension_numbers<[1], [0], [0], [1], [0, 0, 1, 1], [], []>} : vector<8x8xbf16>, vector<8x8xbf16>, vector<8x8xf32> -> vector<8x8xf32>
    %154 = arith.truncf %153 : vector<8x8xf32> to vector<8x8xbf16>
    %c0_49 = arith.constant 0 : index
    %c24 = arith.constant 24 : index
    %155 = vector.load %arg25[%c0_49, %c24] : memref<8x64xbf16, #tpu.memory_space<vmem>>, vector<8x8xbf16>
    tpu.vector_store %arg25[%c0_49, %c24], %154 {strides = array<i32>} : memref<8x64xbf16, #tpu.memory_space<vmem>>, vector<8x8xbf16>,
    %156 = vector.extract_strided_slice %13 {offsets = [0, 56], sizes = [8, 8], strides = [1, 1]} : vector<8x64xbf16> to vector<8x8xbf16>
    %157 = vector.extract_strided_slice %15 {offsets = [0, 24], sizes = [8, 8], strides = [1, 1]} : vector<8x64xbf16> to vector<8x8xbf16>
    %158 = vector.extract_strided_slice %15 {offsets = [0, 56], sizes = [8, 8], strides = [1, 1]} : vector<8x64xbf16> to vector<8x8xbf16>
    %cst_50 = arith.constant dense<0.000000e+00> : vector<8x8xf32>
    %159 = tpu.matmul %156, %157, %cst_50 {dimension_numbers = #tpu.dot_dimension_numbers<[1], [1], [0], [0], [0, 0, 1, 0], [], []>} : vector<8x8xbf16>, vector<8x8xbf16>, vector<8x8xf32> -> vector<8x8xf32>
    %160 = vector.broadcast %6 : vector<1x8xf32> to vector<8x8xf32>
    %161 = arith.addf %159, %160 : vector<8x8xf32>
    %cst_51 = arith.constant dense<0xFF800000> : vector<8xf32>
    %162 = vector.multi_reduction <maximumf>, %161, %cst_51 [1] : vector<8x8xf32> to vector<8xf32>
    %163 = vector.shape_cast %162 : vector<8xf32> to vector<8x1xf32>
    %164 = vector.broadcast %163 : vector<8x1xf32> to vector<8x8xf32>
    %165 = arith.subf %161, %164 : vector<8x8xf32>
    %166 = math.exp %165 : vector<8x8xf32>
    %cst_52 = arith.constant dense<0.000000e+00> : vector<8xf32>
    %167 = vector.multi_reduction <add>, %166, %cst_52 [1] : vector<8x8xf32> to vector<8xf32>
    %168 = vector.shape_cast %167 : vector<8xf32> to vector<8x1xf32>
    %169 = tpu.reciprocal %168 {approx = true} : vector<8x1xf32> -> vector<8x1xf32>
    %170 = vector.broadcast %169 : vector<8x1xf32> to vector<8x8xf32>
    %171 = arith.mulf %166, %170 : vector<8x8xf32>
    %172 = arith.truncf %171 : vector<8x8xf32> to vector<8x8xbf16>
    %cst_53 = arith.constant dense<0.000000e+00> : vector<8x8xf32>
    %173 = tpu.matmul %172, %158, %cst_53 {dimension_numbers = #tpu.dot_dimension_numbers<[1], [0], [0], [1], [0, 0, 1, 1], [], []>} : vector<8x8xbf16>, vector<8x8xbf16>, vector<8x8xf32> -> vector<8x8xf32>
    %174 = arith.truncf %173 : vector<8x8xf32> to vector<8x8xbf16>
    %c0_54 = arith.constant 0 : index
    %c56 = arith.constant 56 : index
    %175 = vector.load %arg25[%c0_54, %c56] : memref<8x64xbf16, #tpu.memory_space<vmem>>, vector<8x8xbf16>
    tpu.vector_store %arg25[%c0_54, %c56], %174 {strides = array<i32>} : memref<8x64xbf16, #tpu.memory_space<vmem>>, vector<8x8xbf16>,
    %c0_55 = arith.constant 0 : index
    %c0_56 = arith.constant 0 : index
    %176 = vector.load %arg25[%c0_55, %c0_56] : memref<8x64xbf16, #tpu.memory_space<vmem>>, vector<8x64xbf16>
    %c0_57 = arith.constant 0 : index
    %c0_58 = arith.constant 0 : index
    %177 = vector.load %arg12[%c0_57, %c0_58] : memref<64x32xbf16, #tpu.memory_space<vmem>>, vector<64x32xbf16>
    %cst_59 = arith.constant dense<0.000000e+00> : vector<8x32xf32>
    %178 = tpu.matmul %176, %177, %cst_59 {dimension_numbers = #tpu.dot_dimension_numbers<[1], [0], [0], [1], [0, 0, 1, 1], [], []>} : vector<8x64xbf16>, vector<64x32xbf16>, vector<8x32xf32> -> vector<8x32xf32>
    %c0_60 = arith.constant 0 : index
    %c0_61 = arith.constant 0 : index
    %179 = vector.load %arg13[%c0_60, %c0_61] : memref<1x32xf32, #tpu.memory_space<vmem>>, vector<1x32xf32>
    %180 = vector.broadcast %179 : vector<1x32xf32> to vector<8x32xf32>
    %181 = arith.addf %178, %180 : vector<8x32xf32>
    %182 = arith.addf %181, %4 : vector<8x32xf32>
    %c0_62 = arith.constant 0 : index
    %c0_63 = arith.constant 0 : index
    %183 = vector.load %arg14[%c0_62, %c0_63] : memref<1x32xf32, #tpu.memory_space<vmem>>, vector<1x32xf32>
    %c0_64 = arith.constant 0 : index
    %c0_65 = arith.constant 0 : index
    %184 = vector.load %arg15[%c0_64, %c0_65] : memref<1x32xf32, #tpu.memory_space<vmem>>, vector<1x32xf32>
    %cst_66 = arith.constant dense<0.000000e+00> : vector<8xf32>
    %185 = vector.multi_reduction <add>, %182, %cst_66 [1] : vector<8x32xf32> to vector<8xf32>
    %186 = vector.shape_cast %185 : vector<8xf32> to vector<8x1xf32>
    %cst_67 = arith.constant 3.200000e+01 : f32
    %187 = vector.broadcast %cst_67 : f32 to vector<8x1xf32>
    %188 = arith.divf %186, %187 : vector<8x1xf32>
    %189 = vector.broadcast %188 : vector<8x1xf32> to vector<8x32xf32>
    %190 = arith.subf %182, %189 : vector<8x32xf32>
    %191 = arith.mulf %190, %190 : vector<8x32xf32>
    %cst_68 = arith.constant dense<0.000000e+00> : vector<8xf32>
    %192 = vector.multi_reduction <add>, %191, %cst_68 [1] : vector<8x32xf32> to vector<8xf32>
    %193 = vector.shape_cast %192 : vector<8xf32> to vector<8x1xf32>
    %cst_69 = arith.constant 3.200000e+01 : f32
    %194 = vector.broadcast %cst_69 : f32 to vector<8x1xf32>
    %195 = arith.divf %193, %194 : vector<8x1xf32>
    %196 = vector.broadcast %188 : vector<8x1xf32> to vector<8x32xf32>
    %197 = arith.subf %182, %196 : vector<8x32xf32>
    %cst_70 = arith.constant 9.99999974E-6 : f32
    %198 = vector.broadcast %cst_70 : f32 to vector<8x1xf32>
    %199 = arith.addf %195, %198 : vector<8x1xf32>
    %200 = math.rsqrt %199 : vector<8x1xf32>
    %201 = vector.broadcast %200 : vector<8x1xf32> to vector<8x32xf32>
    %202 = arith.mulf %197, %201 : vector<8x32xf32>
    %203 = vector.broadcast %183 : vector<1x32xf32> to vector<8x32xf32>
    %204 = arith.mulf %202, %203 : vector<8x32xf32>
    %205 = vector.broadcast %184 : vector<1x32xf32> to vector<8x32xf32>
    %206 = arith.addf %204, %205 : vector<8x32xf32>
    %207 = arith.truncf %206 : vector<8x32xf32> to vector<8x32xbf16>
    %c0_71 = arith.constant 0 : index
    %c0_72 = arith.constant 0 : index
    %208 = vector.load %arg16[%c0_71, %c0_72] : memref<32x64xbf16, #tpu.memory_space<vmem>>, vector<32x64xbf16>
    %cst_73 = arith.constant dense<0.000000e+00> : vector<8x64xf32>
    %209 = tpu.matmul %207, %208, %cst_73 {dimension_numbers = #tpu.dot_dimension_numbers<[1], [0], [0], [1], [0, 0, 1, 1], [], []>} : vector<8x32xbf16>, vector<32x64xbf16>, vector<8x64xf32> -> vector<8x64xf32>
    %c0_74 = arith.constant 0 : index
    %c0_75 = arith.constant 0 : index
    %210 = vector.load %arg17[%c0_74, %c0_75] : memref<1x64xf32, #tpu.memory_space<vmem>>, vector<1x64xf32>
    %211 = vector.broadcast %210 : vector<1x64xf32> to vector<8x64xf32>
    %212 = arith.addf %209, %211 : vector<8x64xf32>
    %cst_76 = arith.constant 0.000000e+00 : f32
    %213 = vector.broadcast %cst_76 : f32 to vector<8x64xf32>
    %214 = arith.maximumf %212, %213 : vector<8x64xf32>
    %215 = arith.truncf %214 : vector<8x64xf32> to vector<8x64xbf16>
    %c0_77 = arith.constant 0 : index
    %c0_78 = arith.constant 0 : index
    %216 = vector.load %arg18[%c0_77, %c0_78] : memref<64x32xbf16, #tpu.memory_space<vmem>>, vector<64x32xbf16>
    %cst_79 = arith.constant dense<0.000000e+00> : vector<8x32xf32>
    %217 = tpu.matmul %215, %216, %cst_79 {dimension_numbers = #tpu.dot_dimension_numbers<[1], [0], [0], [1], [0, 0, 1, 1], [], []>} : vector<8x64xbf16>, vector<64x32xbf16>, vector<8x32xf32> -> vector<8x32xf32>
    %c0_80 = arith.constant 0 : index
    %c0_81 = arith.constant 0 : index
    %218 = vector.load %arg19[%c0_80, %c0_81] : memref<1x32xf32, #tpu.memory_space<vmem>>, vector<1x32xf32>
    %219 = vector.broadcast %218 : vector<1x32xf32> to vector<8x32xf32>
    %220 = arith.addf %217, %219 : vector<8x32xf32>
    %221 = arith.addf %220, %206 : vector<8x32xf32>
    %c0_82 = arith.constant 0 : index
    %c0_83 = arith.constant 0 : index
    %222 = vector.load %arg20[%c0_82, %c0_83] : memref<1x32xf32, #tpu.memory_space<vmem>>, vector<1x32xf32>
    %c0_84 = arith.constant 0 : index
    %c0_85 = arith.constant 0 : index
    %223 = vector.load %arg21[%c0_84, %c0_85] : memref<1x32xf32, #tpu.memory_space<vmem>>, vector<1x32xf32>
    %cst_86 = arith.constant dense<0.000000e+00> : vector<8xf32>
    %224 = vector.multi_reduction <add>, %221, %cst_86 [1] : vector<8x32xf32> to vector<8xf32>
    %225 = vector.shape_cast %224 : vector<8xf32> to vector<8x1xf32>
    %cst_87 = arith.constant 3.200000e+01 : f32
    %226 = vector.broadcast %cst_87 : f32 to vector<8x1xf32>
    %227 = arith.divf %225, %226 : vector<8x1xf32>
    %228 = vector.broadcast %227 : vector<8x1xf32> to vector<8x32xf32>
    %229 = arith.subf %221, %228 : vector<8x32xf32>
    %230 = arith.mulf %229, %229 : vector<8x32xf32>
    %cst_88 = arith.constant dense<0.000000e+00> : vector<8xf32>
    %231 = vector.multi_reduction <add>, %230, %cst_88 [1] : vector<8x32xf32> to vector<8xf32>
    %232 = vector.shape_cast %231 : vector<8xf32> to vector<8x1xf32>
    %cst_89 = arith.constant 3.200000e+01 : f32
    %233 = vector.broadcast %cst_89 : f32 to vector<8x1xf32>
    %234 = arith.divf %232, %233 : vector<8x1xf32>
    %235 = vector.broadcast %227 : vector<8x1xf32> to vector<8x32xf32>
    %236 = arith.subf %221, %235 : vector<8x32xf32>
    %cst_90 = arith.constant 9.99999974E-6 : f32
    %237 = vector.broadcast %cst_90 : f32 to vector<8x1xf32>
    %238 = arith.addf %234, %237 : vector<8x1xf32>
    %239 = math.rsqrt %238 : vector<8x1xf32>
    %240 = vector.broadcast %239 : vector<8x1xf32> to vector<8x32xf32>
    %241 = arith.mulf %236, %240 : vector<8x32xf32>
    %242 = vector.broadcast %222 : vector<1x32xf32> to vector<8x32xf32>
    %243 = arith.mulf %241, %242 : vector<8x32xf32>
    %244 = vector.broadcast %223 : vector<1x32xf32> to vector<8x32xf32>
    %245 = arith.addf %243, %244 : vector<8x32xf32>
    %246 = vector.shape_cast %245 : vector<8x32xf32> to vector<1x8x32xf32>
    %c0_91 = arith.constant 0 : index
    %c0_92 = arith.constant 0 : index
    %c0_93 = arith.constant 0 : index
    %247 = vector.load %arg22[%c0_91, %c0_92, %c0_93] : memref<1x8x32xf32, #tpu.memory_space<vmem>>, vector<1x8x32xf32>
    tpu.vector_store %arg22[%c0_91, %c0_92, %c0_93], %246 {strides = array<i32>} : memref<1x8x32xf32, #tpu.memory_space<vmem>>, vector<1x8x32xf32>,
    return
  }
  func.func @transform_0(%arg0: i32, %arg1: i32) -> (i32, i32, i32) {
    %c0_i32 = arith.constant 0 : i32
    %c0_i32_0 = arith.constant 0 : i32
    return %arg0, %arg1, %c0_i32 : i32, i32, i32
  }
  func.func @transform_1(%arg0: i32, %arg1: i32) -> (i32, i32, i32) {
    %c0_i32 = arith.constant 0 : i32
    %c0_i32_0 = arith.constant 0 : i32
    %c0_i32_1 = arith.constant 0 : i32
    return %arg0, %c0_i32, %c0_i32_0 : i32, i32, i32
  }
  func.func @transform_2(%arg0: i32, %arg1: i32) -> (i32, i32, i32) {
    %c0_i32 = arith.constant 0 : i32
    %c0_i32_0 = arith.constant 0 : i32
    %c0_i32_1 = arith.constant 0 : i32
    return %arg0, %c0_i32, %c0_i32_0 : i32, i32, i32
  }
  func.func @transform_3(%arg0: i32, %arg1: i32) -> (i32, i32, i32) {
    %c0_i32 = arith.constant 0 : i32
    %c0_i32_0 = arith.constant 0 : i32
    %c0_i32_1 = arith.constant 0 : i32
    return %arg0, %c0_i32, %c0_i32_0 : i32, i32, i32
  }
  func.func @transform_4(%arg0: i32, %arg1: i32) -> (i32, i32) {
    %c0_i32 = arith.constant 0 : i32
    %c0_i32_0 = arith.constant 0 : i32
    %c0_i32_1 = arith.constant 0 : i32
    return %c0_i32, %c0_i32_0 : i32, i32
  }
  func.func @transform_5(%arg0: i32, %arg1: i32) -> (i32, i32) {
    %c0_i32 = arith.constant 0 : i32
    %c0_i32_0 = arith.constant 0 : i32
    %c0_i32_1 = arith.constant 0 : i32
    return %c0_i32, %c0_i32_0 : i32, i32
  }
  func.func @transform_6(%arg0: i32, %arg1: i32) -> (i32, i32) {
    %c0_i32 = arith.constant 0 : i32
    %c0_i32_0 = arith.constant 0 : i32
    %c0_i32_1 = arith.constant 0 : i32
    return %c0_i32, %c0_i32_0 : i32, i32
  }
  func.func @transform_7(%arg0: i32, %arg1: i32) -> (i32, i32) {
    %c0_i32 = arith.constant 0 : i32
    %c0_i32_0 = arith.constant 0 : i32
    %c0_i32_1 = arith.constant 0 : i32
    return %c0_i32, %c0_i32_0 : i32, i32
  }
  func.func @transform_8(%arg0: i32, %arg1: i32) -> (i32, i32) {
    %c0_i32 = arith.constant 0 : i32
    %c0_i32_0 = arith.constant 0 : i32
    %c0_i32_1 = arith.constant 0 : i32
    return %c0_i32, %c0_i32_0 : i32, i32
  }
  func.func @transform_9(%arg0: i32, %arg1: i32) -> (i32, i32) {
    %c0_i32 = arith.constant 0 : i32
    %c0_i32_0 = arith.constant 0 : i32
    %c0_i32_1 = arith.constant 0 : i32
    return %c0_i32, %c0_i32_0 : i32, i32
  }
  func.func @transform_10(%arg0: i32, %arg1: i32) -> (i32, i32) {
    %c0_i32 = arith.constant 0 : i32
    %c0_i32_0 = arith.constant 0 : i32
    %c0_i32_1 = arith.constant 0 : i32
    return %c0_i32, %c0_i32_0 : i32, i32
  }
  func.func @transform_11(%arg0: i32, %arg1: i32) -> (i32, i32) {
    %c0_i32 = arith.constant 0 : i32
    %c0_i32_0 = arith.constant 0 : i32
    %c0_i32_1 = arith.constant 0 : i32
    return %c0_i32, %c0_i32_0 : i32, i32
  }
  func.func @transform_12(%arg0: i32, %arg1: i32) -> (i32, i32) {
    %c0_i32 = arith.constant 0 : i32
    %c0_i32_0 = arith.constant 0 : i32
    %c0_i32_1 = arith.constant 0 : i32
    return %c0_i32, %c0_i32_0 : i32, i32
  }
  func.func @transform_13(%arg0: i32, %arg1: i32) -> (i32, i32) {
    %c0_i32 = arith.constant 0 : i32
    %c0_i32_0 = arith.constant 0 : i32
    %c0_i32_1 = arith.constant 0 : i32
    return %c0_i32, %c0_i32_0 : i32, i32
  }
  func.func @transform_14(%arg0: i32, %arg1: i32) -> (i32, i32) {
    %c0_i32 = arith.constant 0 : i32
    %c0_i32_0 = arith.constant 0 : i32
    %c0_i32_1 = arith.constant 0 : i32
    return %c0_i32, %c0_i32_0 : i32, i32
  }
  func.func @transform_15(%arg0: i32, %arg1: i32) -> (i32, i32) {
    %c0_i32 = arith.constant 0 : i32
    %c0_i32_0 = arith.constant 0 : i32
    %c0_i32_1 = arith.constant 0 : i32
    return %c0_i32, %c0_i32_0 : i32, i32
  }
  func.func @transform_16(%arg0: i32, %arg1: i32) -> (i32, i32) {
    %c0_i32 = arith.constant 0 : i32
    %c0_i32_0 = arith.constant 0 : i32
    %c0_i32_1 = arith.constant 0 : i32
    return %c0_i32, %c0_i32_0 : i32, i32
  }
  func.func @transform_17(%arg0: i32, %arg1: i32) -> (i32, i32) {
    %c0_i32 = arith.constant 0 : i32
    %c0_i32_0 = arith.constant 0 : i32
    %c0_i32_1 = arith.constant 0 : i32
    return %c0_i32, %c0_i32_0 : i32, i32
  }
  func.func @transform_18(%arg0: i32, %arg1: i32) -> (i32, i32) {
    %c0_i32 = arith.constant 0 : i32
    %c0_i32_0 = arith.constant 0 : i32
    %c0_i32_1 = arith.constant 0 : i32
    return %c0_i32, %c0_i32_0 : i32, i32
  }
  func.func @transform_19(%arg0: i32, %arg1: i32) -> (i32, i32) {
    %c0_i32 = arith.constant 0 : i32
    %c0_i32_0 = arith.constant 0 : i32
    %c0_i32_1 = arith.constant 0 : i32
    return %c0_i32, %c0_i32_0 : i32, i32
  }
  func.func @transform_20(%arg0: i32, %arg1: i32) -> (i32, i32, i32) {
    %c0_i32 = arith.constant 0 : i32
    %c0_i32_0 = arith.constant 0 : i32
    return %arg0, %arg1, %c0_i32 : i32, i32, i32
  }
}

module attributes {stable_mosaic.version = 11 : i64} {
  func.func @encoder_layer_kernel(%arg0: i32, %arg1: i32, %arg2: memref<1x8x32xf32, #tpu.memory_space<vmem>>, %arg3: memref<1x8x32xbf16, #tpu.memory_space<vmem>>, %arg4: memref<1x8x32xbf16, #tpu.memory_space<vmem>>, %arg5: memref<1x1x8xf32, #tpu.memory_space<vmem>>, %arg6: memref<32x64xbf16, #tpu.memory_space<vmem>>, %arg7: memref<1x64xf32, #tpu.memory_space<vmem>>, %arg8: memref<32x64xbf16, #tpu.memory_space<vmem>>, %arg9: memref<1x64xf32, #tpu.memory_space<vmem>>, %arg10: memref<32x64xbf16, #tpu.memory_space<vmem>>, %arg11: memref<1x64xf32, #tpu.memory_space<vmem>>, %arg12: memref<64x32xbf16, #tpu.memory_space<vmem>>, %arg13: memref<1x32xf32, #tpu.memory_space<vmem>>, %arg14: memref<1x32xf32, #tpu.memory_space<vmem>>, %arg15: memref<1x32xf32, #tpu.memory_space<vmem>>, %arg16: memref<32x64xbf16, #tpu.memory_space<vmem>>, %arg17: memref<1x64xf32, #tpu.memory_space<vmem>>, %arg18: memref<64x32xbf16, #tpu.memory_space<vmem>>, %arg19: memref<1x32xf32, #tpu.memory_space<vmem>>, %arg20: memref<1x32xf32, #tpu.memory_space<vmem>>, %arg21: memref<1x32xf32, #tpu.memory_space<vmem>>, %arg22: memref<1x8x32xf32, #tpu.memory_space<vmem>>, %arg23: memref<8x64xbf16, #tpu.memory_space<vmem>>, %arg24: memref<8x64xbf16, #tpu.memory_space<vmem>>, %arg25: memref<8x64xbf16, #tpu.memory_space<vmem>>) attributes {dimension_semantics = [#tpu.dimension_semantics<parallel>, #tpu.dimension_semantics<arbitrary>], iteration_bounds = array<i64: 2, 1>, scalar_prefetch = 0 : i64, scratch_operands = 3 : i64, tpu.core_type = #tpu.core_type<tc>, window_params = [{transform_indices = @transform_0, window_bounds = array<i64: 1, 8, 32>}, {transform_indices = @transform_1, window_bounds = array<i64: 1, 8, 32>}, {transform_indices = @transform_2, window_bounds = array<i64: 1, 8, 32>}, {transform_indices = @transform_3, window_bounds = array<i64: 1, 1, 8>}, {pipeline_mode = #tpu.pipeline_mode<synchronous>, transform_indices = @transform_4, window_bounds = array<i64: 32, 64>}, {pipeline_mode = #tpu.pipeline_mode<synchronous>, transform_indices = @transform_5, window_bounds = array<i64: 1, 64>}, {pipeline_mode = #tpu.pipeline_mode<synchronous>, transform_indices = @transform_6, window_bounds = array<i64: 32, 64>}, {pipeline_mode = #tpu.pipeline_mode<synchronous>, transform_indices = @transform_7, window_bounds = array<i64: 1, 64>}, {pipeline_mode = #tpu.pipeline_mode<synchronous>, transform_indices = @transform_8, window_bounds = array<i64: 32, 64>}, {pipeline_mode = #tpu.pipeline_mode<synchronous>, transform_indices = @transform_9, window_bounds = array<i64: 1, 64>}, {pipeline_mode = #tpu.pipeline_mode<synchronous>, transform_indices = @transform_10, window_bounds = array<i64: 64, 32>}, {pipeline_mode = #tpu.pipeline_mode<synchronous>, transform_indices = @transform_11, window_bounds = array<i64: 1, 32>}, {pipeline_mode = #tpu.pipeline_mode<synchronous>, transform_indices = @transform_12, window_bounds = array<i64: 1, 32>}, {pipeline_mode = #tpu.pipeline_mode<synchronous>, transform_indices = @transform_13, window_bounds = array<i64: 1, 32>}, {pipeline_mode = #tpu.pipeline_mode<synchronous>, transform_indices = @transform_14, window_bounds = array<i64: 32, 64>}, {pipeline_mode = #tpu.pipeline_mode<synchronous>, transform_indices = @transform_15, window_bounds = array<i64: 1, 64>}, {pipeline_mode = #tpu.pipeline_mode<synchronous>, transform_indices = @transform_16, window_bounds = array<i64: 64, 32>}, {pipeline_mode = #tpu.pipeline_mode<synchronous>, transform_indices = @transform_17, window_bounds = array<i64: 1, 32>}, {pipeline_mode = #tpu.pipeline_mode<synchronous>, transform_indices = @transform_18, window_bounds = array<i64: 1, 32>}, {pipeline_mode = #tpu.pipeline_mode<synchronous>, transform_indices = @transform_19, window_bounds = array<i64: 1, 32>}, {transform_indices = @transform_20, window_bounds = array<i64: 1, 8, 32>}]} {
    %c0_i32 = arith.constant 0 : i32
    %0 = arith.cmpi eq, %arg1, %c0_i32 : i32
    %1 = arith.extui %0 : i1 to i32
    %c0_i32_0 = arith.constant 0 : i32
    %2 = arith.cmpi ne, %1, %c0_i32_0 : i32
    scf.if %2 {
      %c0_94 = arith.constant 0 : index
      %c0_95 = arith.constant 0 : index
      %c0_96 = arith.constant 0 : index
      %248 = vector.load %arg3[%c0_94, %c0_95, %c0_96] : memref<1x8x32xbf16, #tpu.memory_space<vmem>>, vector<1x8x32xbf16>
      %249 = vector.shape_cast %248 : vector<1x8x32xbf16> to vector<8x32xbf16>
      %c0_97 = arith.constant 0 : index
      %c0_98 = arith.constant 0 : index
      %250 = vector.load %arg8[%c0_97, %c0_98] : memref<32x64xbf16, #tpu.memory_space<vmem>>, vector<32x64xbf16>
      %cst_99 = arith.constant dense<0.000000e+00> : vector<8x64xf32>
      %251 = tpu.matmul %249, %250, %cst_99 {dimension_numbers = #tpu.dot_dimension_numbers<[1], [0], [0], [1], [0, 0, 1, 1], [], []>} : vector<8x32xbf16>, vector<32x64xbf16>, vector<8x64xf32> -> vector<8x64xf32>
      %c0_100 = arith.constant 0 : index
      %c0_101 = arith.constant 0 : index
      %252 = vector.load %arg9[%c0_100, %c0_101] : memref<1x64xf32, #tpu.memory_space<vmem>>, vector<1x64xf32>
      %253 = vector.broadcast %252 : vector<1x64xf32> to vector<8x64xf32>
      %254 = arith.addf %251, %253 : vector<8x64xf32>
      %255 = arith.truncf %254 : vector<8x64xf32> to vector<8x64xbf16>
      %c0_102 = arith.constant 0 : index
      %c0_103 = arith.constant 0 : index
      %256 = vector.load %arg23[%c0_102, %c0_103] : memref<8x64xbf16, #tpu.memory_space<vmem>>, vector<8x64xbf16>
      tpu.vector_store %arg23[%c0_102, %c0_103], %255 {strides = array<i32>} : memref<8x64xbf16, #tpu.memory_space<vmem>>, vector<8x64xbf16>,
      %c0_104 = arith.constant 0 : index
      %c0_105 = arith.constant 0 : index
      %c0_106 = arith.constant 0 : index
      %257 = vector.load %arg4[%c0_104, %c0_105, %c0_106] : memref<1x8x32xbf16, #tpu.memory_space<vmem>>, vector<1x8x32xbf16>
      %258 = vector.shape_cast %257 : vector<1x8x32xbf16> to vector<8x32xbf16>
      %c0_107 = arith.constant 0 : index
      %c0_108 = arith.constant 0 : index
      %259 = vector.load %arg10[%c0_107, %c0_108] : memref<32x64xbf16, #tpu.memory_space<vmem>>, vector<32x64xbf16>
      %cst_109 = arith.constant dense<0.000000e+00> : vector<8x64xf32>
      %260 = tpu.matmul %258, %259, %cst_109 {dimension_numbers = #tpu.dot_dimension_numbers<[1], [0], [0], [1], [0, 0, 1, 1], [], []>} : vector<8x32xbf16>, vector<32x64xbf16>, vector<8x64xf32> -> vector<8x64xf32>
      %c0_110 = arith.constant 0 : index
      %c0_111 = arith.constant 0 : index
      %261 = vector.load %arg11[%c0_110, %c0_111] : memref<1x64xf32, #tpu.memory_space<vmem>>, vector<1x64xf32>
      %262 = vector.broadcast %261 : vector<1x64xf32> to vector<8x64xf32>
      %263 = arith.addf %260, %262 : vector<8x64xf32>
      %264 = arith.truncf %263 : vector<8x64xf32> to vector<8x64xbf16>
      %c0_112 = arith.constant 0 : index
      %c0_113 = arith.constant 0 : index
      %265 = vector.load %arg24[%c0_112, %c0_113] : memref<8x64xbf16, #tpu.memory_space<vmem>>, vector<8x64xbf16>
      tpu.vector_store %arg24[%c0_112, %c0_113], %264 {strides = array<i32>} : memref<8x64xbf16, #tpu.memory_space<vmem>>, vector<8x64xbf16>,
    } else {
    }
    %c0 = arith.constant 0 : index
    %c0_1 = arith.constant 0 : index
    %c0_2 = arith.constant 0 : index
    %3 = vector.load %arg2[%c0, %c0_1, %c0_2] : memref<1x8x32xf32, #tpu.memory_space<vmem>>, vector<1x8x32xf32>
    %4 = vector.shape_cast %3 : vector<1x8x32xf32> to vector<8x32xf32>
    %c0_3 = arith.constant 0 : index
    %c0_4 = arith.constant 0 : index
    %c0_5 = arith.constant 0 : index
    %5 = vector.load %arg5[%c0_3, %c0_4, %c0_5] : memref<1x1x8xf32, #tpu.memory_space<vmem>>, vector<1x1x8xf32>
    %6 = vector.shape_cast %5 : vector<1x1x8xf32> to vector<1x8xf32>
    %7 = arith.truncf %4 : vector<8x32xf32> to vector<8x32xbf16>
    %c0_6 = arith.constant 0 : index
    %c0_7 = arith.constant 0 : index
    %8 = vector.load %arg6[%c0_6, %c0_7] : memref<32x64xbf16, #tpu.memory_space<vmem>>, vector<32x64xbf16>
    %cst = arith.constant dense<0.000000e+00> : vector<8x64xf32>
    %9 = tpu.matmul %7, %8, %cst {dimension_numbers = #tpu.dot_dimension_numbers<[1], [0], [0], [1], [0, 0, 1, 1], [], []>} : vector<8x32xbf16>, vector<32x64xbf16>, vector<8x64xf32> -> vector<8x64xf32>
    %c0_8 = arith.constant 0 : index
    %c0_9 = arith.constant 0 : index
    %10 = vector.load %arg7[%c0_8, %c0_9] : memref<1x64xf32, #tpu.memory_space<vmem>>, vector<1x64xf32>
    %11 = vector.broadcast %10 : vector<1x64xf32> to vector<8x64xf32>
    %12 = arith.addf %9, %11 : vector<8x64xf32>
    %13 = arith.truncf %12 : vector<8x64xf32> to vector<8x64xbf16>
    %c0_10 = arith.constant 0 : index
    %c0_11 = arith.constant 0 : index
    %14 = vector.load %arg23[%c0_10, %c0_11] : memref<8x64xbf16, #tpu.memory_space<vmem>>, vector<8x64xbf16>
    %c0_12 = arith.constant 0 : index
    %c0_13 = arith.constant 0 : index
    %15 = vector.load %arg24[%c0_12, %c0_13] : memref<8x64xbf16, #tpu.memory_space<vmem>>, vector<8x64xbf16>
    %16 = vector.extract_strided_slice %13 {offsets = [0, 0], sizes = [8, 8], strides = [1, 1]} : vector<8x64xbf16> to vector<8x8xbf16>
    %17 = vector.extract_strided_slice %14 {offsets = [0, 0], sizes = [8, 8], strides = [1, 1]} : vector<8x64xbf16> to vector<8x8xbf16>
    %18 = vector.extract_strided_slice %14 {offsets = [0, 32], sizes = [8, 8], strides = [1, 1]} : vector<8x64xbf16> to vector<8x8xbf16>
    %cst_14 = arith.constant dense<0.000000e+00> : vector<8x8xf32>
    %19 = tpu.matmul %16, %17, %cst_14 {dimension_numbers = #tpu.dot_dimension_numbers<[1], [1], [0], [0], [0, 0, 1, 0], [], []>} : vector<8x8xbf16>, vector<8x8xbf16>, vector<8x8xf32> -> vector<8x8xf32>
    %20 = vector.broadcast %6 : vector<1x8xf32> to vector<8x8xf32>
    %21 = arith.addf %19, %20 : vector<8x8xf32>
    %cst_15 = arith.constant dense<0xFF800000> : vector<8xf32>
    %22 = vector.multi_reduction <maximumf>, %21, %cst_15 [1] : vector<8x8xf32> to vector<8xf32>
    %23 = vector.shape_cast %22 : vector<8xf32> to vector<8x1xf32>
    %24 = vector.broadcast %23 : vector<8x1xf32> to vector<8x8xf32>
    %25 = arith.subf %21, %24 : vector<8x8xf32>
    %26 = math.exp %25 : vector<8x8xf32>
    %cst_16 = arith.constant dense<0.000000e+00> : vector<8xf32>
    %27 = vector.multi_reduction <add>, %26, %cst_16 [1] : vector<8x8xf32> to vector<8xf32>
    %28 = vector.shape_cast %27 : vector<8xf32> to vector<8x1xf32>
    %29 = tpu.reciprocal %28 {approx = true} : vector<8x1xf32> -> vector<8x1xf32>
    %30 = vector.broadcast %29 : vector<8x1xf32> to vector<8x8xf32>
    %31 = arith.mulf %26, %30 : vector<8x8xf32>
    %32 = arith.truncf %31 : vector<8x8xf32> to vector<8x8xbf16>
    %cst_17 = arith.constant dense<0.000000e+00> : vector<8x8xf32>
    %33 = tpu.matmul %32, %18, %cst_17 {dimension_numbers = #tpu.dot_dimension_numbers<[1], [0], [0], [1], [0, 0, 1, 1], [], []>} : vector<8x8xbf16>, vector<8x8xbf16>, vector<8x8xf32> -> vector<8x8xf32>
    %34 = arith.truncf %33 : vector<8x8xf32> to vector<8x8xbf16>
    %c0_18 = arith.constant 0 : index
    %c0_19 = arith.constant 0 : index
    %35 = vector.load %arg25[%c0_18, %c0_19] : memref<8x64xbf16, #tpu.memory_space<vmem>>, vector<8x8xbf16>
    tpu.vector_store %arg25[%c0_18, %c0_19], %34 {strides = array<i32>} : memref<8x64xbf16, #tpu.memory_space<vmem>>, vector<8x8xbf16>,
    %36 = vector.extract_strided_slice %13 {offsets = [0, 32], sizes = [8, 8], strides = [1, 1]} : vector<8x64xbf16> to vector<8x8xbf16>
    %37 = vector.extract_strided_slice %15 {offsets = [0, 0], sizes = [8, 8], strides = [1, 1]} : vector<8x64xbf16> to vector<8x8xbf16>
    %38 = vector.extract_strided_slice %15 {offsets = [0, 32], sizes = [8, 8], strides = [1, 1]} : vector<8x64xbf16> to vector<8x8xbf16>
    %cst_20 = arith.constant dense<0.000000e+00> : vector<8x8xf32>
    %39 = tpu.matmul %36, %37, %cst_20 {dimension_numbers = #tpu.dot_dimension_numbers<[1], [1], [0], [0], [0, 0, 1, 0], [], []>} : vector<8x8xbf16>, vector<8x8xbf16>, vector<8x8xf32> -> vector<8x8xf32>
    %40 = vector.broadcast %6 : vector<1x8xf32> to vector<8x8xf32>
    %41 = arith.addf %39, %40 : vector<8x8xf32>
    %cst_21 = arith.constant dense<0xFF800000> : vector<8xf32>
    %42 = vector.multi_reduction <maximumf>, %41, %cst_21 [1] : vector<8x8xf32> to vector<8xf32>
    %43 = vector.shape_cast %42 : vector<8xf32> to vector<8x1xf32>
    %44 = vector.broadcast %43 : vector<8x1xf32> to vector<8x8xf32>
    %45 = arith.subf %41, %44 : vector<8x8xf32>
    %46 = math.exp %45 : vector<8x8xf32>
    %cst_22 = arith.constant dense<0.000000e+00> : vector<8xf32>
    %47 = vector.multi_reduction <add>, %46, %cst_22 [1] : vector<8x8xf32> to vector<8xf32>
    %48 = vector.shape_cast %47 : vector<8xf32> to vector<8x1xf32>
    %49 = tpu.reciprocal %48 {approx = true} : vector<8x1xf32> -> vector<8x1xf32>
    %50 = vector.broadcast %49 : vector<8x1xf32> to vector<8x8xf32>
    %51 = arith.mulf %46, %50 : vector<8x8xf32>
    %52 = arith.truncf %51 : vector<8x8xf32> to vector<8x8xbf16>
    %cst_23 = arith.constant dense<0.000000e+00> : vector<8x8xf32>
    %53 = tpu.matmul %52, %38, %cst_23 {dimension_numbers = #tpu.dot_dimension_numbers<[1], [0], [0], [1], [0, 0, 1, 1], [], []>} : vector<8x8xbf16>, vector<8x8xbf16>, vector<8x8xf32> -> vector<8x8xf32>
    %54 = arith.truncf %53 : vector<8x8xf32> to vector<8x8xbf16>
    %c0_24 = arith.constant 0 : index
    %c32 = arith.constant 32 : index
    %55 = vector.load %arg25[%c0_24, %c32] : memref<8x64xbf16, #tpu.memory_space<vmem>>, vector<8x8xbf16>
    tpu.vector_store %arg25[%c0_24, %c32], %54 {strides = array<i32>} : memref<8x64xbf16, #tpu.memory_space<vmem>>, vector<8x8xbf16>,
    %56 = vector.extract_strided_slice %13 {offsets = [0, 8], sizes = [8, 8], strides = [1, 1]} : vector<8x64xbf16> to vector<8x8xbf16>
    %57 = vector.extract_strided_slice %14 {offsets = [0, 8], sizes = [8, 8], strides = [1, 1]} : vector<8x64xbf16> to vector<8x8xbf16>
    %58 = vector.extract_strided_slice %14 {offsets = [0, 40], sizes = [8, 8], strides = [1, 1]} : vector<8x64xbf16> to vector<8x8xbf16>
    %cst_25 = arith.constant dense<0.000000e+00> : vector<8x8xf32>
    %59 = tpu.matmul %56, %57, %cst_25 {dimension_numbers = #tpu.dot_dimension_numbers<[1], [1], [0], [0], [0, 0, 1, 0], [], []>} : vector<8x8xbf16>, vector<8x8xbf16>, vector<8x8xf32> -> vector<8x8xf32>
    %60 = vector.broadcast %6 : vector<1x8xf32> to vector<8x8xf32>
    %61 = arith.addf %59, %60 : vector<8x8xf32>
    %cst_26 = arith.constant dense<0xFF800000> : vector<8xf32>
    %62 = vector.multi_reduction <maximumf>, %61, %cst_26 [1] : vector<8x8xf32> to vector<8xf32>
    %63 = vector.shape_cast %62 : vector<8xf32> to vector<8x1xf32>
    %64 = vector.broadcast %63 : vector<8x1xf32> to vector<8x8xf32>
    %65 = arith.subf %61, %64 : vector<8x8xf32>
    %66 = math.exp %65 : vector<8x8xf32>
    %cst_27 = arith.constant dense<0.000000e+00> : vector<8xf32>
    %67 = vector.multi_reduction <add>, %66, %cst_27 [1] : vector<8x8xf32> to vector<8xf32>
    %68 = vector.shape_cast %67 : vector<8xf32> to vector<8x1xf32>
    %69 = tpu.reciprocal %68 {approx = true} : vector<8x1xf32> -> vector<8x1xf32>
    %70 = vector.broadcast %69 : vector<8x1xf32> to vector<8x8xf32>
    %71 = arith.mulf %66, %70 : vector<8x8xf32>
    %72 = arith.truncf %71 : vector<8x8xf32> to vector<8x8xbf16>
    %cst_28 = arith.constant dense<0.000000e+00> : vector<8x8xf32>
    %73 = tpu.matmul %72, %58, %cst_28 {dimension_numbers = #tpu.dot_dimension_numbers<[1], [0], [0], [1], [0, 0, 1, 1], [], []>} : vector<8x8xbf16>, vector<8x8xbf16>, vector<8x8xf32> -> vector<8x8xf32>
    %74 = arith.truncf %73 : vector<8x8xf32> to vector<8x8xbf16>
    %c0_29 = arith.constant 0 : index
    %c8 = arith.constant 8 : index
    %75 = vector.load %arg25[%c0_29, %c8] : memref<8x64xbf16, #tpu.memory_space<vmem>>, vector<8x8xbf16>
    tpu.vector_store %arg25[%c0_29, %c8], %74 {strides = array<i32>} : memref<8x64xbf16, #tpu.memory_space<vmem>>, vector<8x8xbf16>,
    %76 = vector.extract_strided_slice %13 {offsets = [0, 40], sizes = [8, 8], strides = [1, 1]} : vector<8x64xbf16> to vector<8x8xbf16>
    %77 = vector.extract_strided_slice %15 {offsets = [0, 8], sizes = [8, 8], strides = [1, 1]} : vector<8x64xbf16> to vector<8x8xbf16>
    %78 = vector.extract_strided_slice %15 {offsets = [0, 40], sizes = [8, 8], strides = [1, 1]} : vector<8x64xbf16> to vector<8x8xbf16>
    %cst_30 = arith.constant dense<0.000000e+00> : vector<8x8xf32>
    %79 = tpu.matmul %76, %77, %cst_30 {dimension_numbers = #tpu.dot_dimension_numbers<[1], [1], [0], [0], [0, 0, 1, 0], [], []>} : vector<8x8xbf16>, vector<8x8xbf16>, vector<8x8xf32> -> vector<8x8xf32>
    %80 = vector.broadcast %6 : vector<1x8xf32> to vector<8x8xf32>
    %81 = arith.addf %79, %80 : vector<8x8xf32>
    %cst_31 = arith.constant dense<0xFF800000> : vector<8xf32>
    %82 = vector.multi_reduction <maximumf>, %81, %cst_31 [1] : vector<8x8xf32> to vector<8xf32>
    %83 = vector.shape_cast %82 : vector<8xf32> to vector<8x1xf32>
    %84 = vector.broadcast %83 : vector<8x1xf32> to vector<8x8xf32>
    %85 = arith.subf %81, %84 : vector<8x8xf32>
    %86 = math.exp %85 : vector<8x8xf32>
    %cst_32 = arith.constant dense<0.000000e+00> : vector<8xf32>
    %87 = vector.multi_reduction <add>, %86, %cst_32 [1] : vector<8x8xf32> to vector<8xf32>
    %88 = vector.shape_cast %87 : vector<8xf32> to vector<8x1xf32>
    %89 = tpu.reciprocal %88 {approx = true} : vector<8x1xf32> -> vector<8x1xf32>
    %90 = vector.broadcast %89 : vector<8x1xf32> to vector<8x8xf32>
    %91 = arith.mulf %86, %90 : vector<8x8xf32>
    %92 = arith.truncf %91 : vector<8x8xf32> to vector<8x8xbf16>
    %cst_33 = arith.constant dense<0.000000e+00> : vector<8x8xf32>
    %93 = tpu.matmul %92, %78, %cst_33 {dimension_numbers = #tpu.dot_dimension_numbers<[1], [0], [0], [1], [0, 0, 1, 1], [], []>} : vector<8x8xbf16>, vector<8x8xbf16>, vector<8x8xf32> -> vector<8x8xf32>
    %94 = arith.truncf %93 : vector<8x8xf32> to vector<8x8xbf16>
    %c0_34 = arith.constant 0 : index
    %c40 = arith.constant 40 : index
    %95 = vector.load %arg25[%c0_34, %c40] : memref<8x64xbf16, #tpu.memory_space<vmem>>, vector<8x8xbf16>
    tpu.vector_store %arg25[%c0_34, %c40], %94 {strides = array<i32>} : memref<8x64xbf16, #tpu.memory_space<vmem>>, vector<8x8xbf16>,
    %96 = vector.extract_strided_slice %13 {offsets = [0, 16], sizes = [8, 8], strides = [1, 1]} : vector<8x64xbf16> to vector<8x8xbf16>
    %97 = vector.extract_strided_slice %14 {offsets = [0, 16], sizes = [8, 8], strides = [1, 1]} : vector<8x64xbf16> to vector<8x8xbf16>
    %98 = vector.extract_strided_slice %14 {offsets = [0, 48], sizes = [8, 8], strides = [1, 1]} : vector<8x64xbf16> to vector<8x8xbf16>
    %cst_35 = arith.constant dense<0.000000e+00> : vector<8x8xf32>
    %99 = tpu.matmul %96, %97, %cst_35 {dimension_numbers = #tpu.dot_dimension_numbers<[1], [1], [0], [0], [0, 0, 1, 0], [], []>} : vector<8x8xbf16>, vector<8x8xbf16>, vector<8x8xf32> -> vector<8x8xf32>
    %100 = vector.broadcast %6 : vector<1x8xf32> to vector<8x8xf32>
    %101 = arith.addf %99, %100 : vector<8x8xf32>
    %cst_36 = arith.constant dense<0xFF800000> : vector<8xf32>
    %102 = vector.multi_reduction <maximumf>, %101, %cst_36 [1] : vector<8x8xf32> to vector<8xf32>
    %103 = vector.shape_cast %102 : vector<8xf32> to vector<8x1xf32>
    %104 = vector.broadcast %103 : vector<8x1xf32> to vector<8x8xf32>
    %105 = arith.subf %101, %104 : vector<8x8xf32>
    %106 = math.exp %105 : vector<8x8xf32>
    %cst_37 = arith.constant dense<0.000000e+00> : vector<8xf32>
    %107 = vector.multi_reduction <add>, %106, %cst_37 [1] : vector<8x8xf32> to vector<8xf32>
    %108 = vector.shape_cast %107 : vector<8xf32> to vector<8x1xf32>
    %109 = tpu.reciprocal %108 {approx = true} : vector<8x1xf32> -> vector<8x1xf32>
    %110 = vector.broadcast %109 : vector<8x1xf32> to vector<8x8xf32>
    %111 = arith.mulf %106, %110 : vector<8x8xf32>
    %112 = arith.truncf %111 : vector<8x8xf32> to vector<8x8xbf16>
    %cst_38 = arith.constant dense<0.000000e+00> : vector<8x8xf32>
    %113 = tpu.matmul %112, %98, %cst_38 {dimension_numbers = #tpu.dot_dimension_numbers<[1], [0], [0], [1], [0, 0, 1, 1], [], []>} : vector<8x8xbf16>, vector<8x8xbf16>, vector<8x8xf32> -> vector<8x8xf32>
    %114 = arith.truncf %113 : vector<8x8xf32> to vector<8x8xbf16>
    %c0_39 = arith.constant 0 : index
    %c16 = arith.constant 16 : index
    %115 = vector.load %arg25[%c0_39, %c16] : memref<8x64xbf16, #tpu.memory_space<vmem>>, vector<8x8xbf16>
    tpu.vector_store %arg25[%c0_39, %c16], %114 {strides = array<i32>} : memref<8x64xbf16, #tpu.memory_space<vmem>>, vector<8x8xbf16>,
    %116 = vector.extract_strided_slice %13 {offsets = [0, 48], sizes = [8, 8], strides = [1, 1]} : vector<8x64xbf16> to vector<8x8xbf16>
    %117 = vector.extract_strided_slice %15 {offsets = [0, 16], sizes = [8, 8], strides = [1, 1]} : vector<8x64xbf16> to vector<8x8xbf16>
    %118 = vector.extract_strided_slice %15 {offsets = [0, 48], sizes = [8, 8], strides = [1, 1]} : vector<8x64xbf16> to vector<8x8xbf16>
    %cst_40 = arith.constant dense<0.000000e+00> : vector<8x8xf32>
    %119 = tpu.matmul %116, %117, %cst_40 {dimension_numbers = #tpu.dot_dimension_numbers<[1], [1], [0], [0], [0, 0, 1, 0], [], []>} : vector<8x8xbf16>, vector<8x8xbf16>, vector<8x8xf32> -> vector<8x8xf32>
    %120 = vector.broadcast %6 : vector<1x8xf32> to vector<8x8xf32>
    %121 = arith.addf %119, %120 : vector<8x8xf32>
    %cst_41 = arith.constant dense<0xFF800000> : vector<8xf32>
    %122 = vector.multi_reduction <maximumf>, %121, %cst_41 [1] : vector<8x8xf32> to vector<8xf32>
    %123 = vector.shape_cast %122 : vector<8xf32> to vector<8x1xf32>
    %124 = vector.broadcast %123 : vector<8x1xf32> to vector<8x8xf32>
    %125 = arith.subf %121, %124 : vector<8x8xf32>
    %126 = math.exp %125 : vector<8x8xf32>
    %cst_42 = arith.constant dense<0.000000e+00> : vector<8xf32>
    %127 = vector.multi_reduction <add>, %126, %cst_42 [1] : vector<8x8xf32> to vector<8xf32>
    %128 = vector.shape_cast %127 : vector<8xf32> to vector<8x1xf32>
    %129 = tpu.reciprocal %128 {approx = true} : vector<8x1xf32> -> vector<8x1xf32>
    %130 = vector.broadcast %129 : vector<8x1xf32> to vector<8x8xf32>
    %131 = arith.mulf %126, %130 : vector<8x8xf32>
    %132 = arith.truncf %131 : vector<8x8xf32> to vector<8x8xbf16>
    %cst_43 = arith.constant dense<0.000000e+00> : vector<8x8xf32>
    %133 = tpu.matmul %132, %118, %cst_43 {dimension_numbers = #tpu.dot_dimension_numbers<[1], [0], [0], [1], [0, 0, 1, 1], [], []>} : vector<8x8xbf16>, vector<8x8xbf16>, vector<8x8xf32> -> vector<8x8xf32>
    %134 = arith.truncf %133 : vector<8x8xf32> to vector<8x8xbf16>
    %c0_44 = arith.constant 0 : index
    %c48 = arith.constant 48 : index
    %135 = vector.load %arg25[%c0_44, %c48] : memref<8x64xbf16, #tpu.memory_space<vmem>>, vector<8x8xbf16>
    tpu.vector_store %arg25[%c0_44, %c48], %134 {strides = array<i32>} : memref<8x64xbf16, #tpu.memory_space<vmem>>, vector<8x8xbf16>,
    %136 = vector.extract_strided_slice %13 {offsets = [0, 24], sizes = [8, 8], strides = [1, 1]} : vector<8x64xbf16> to vector<8x8xbf16>
    %137 = vector.extract_strided_slice %14 {offsets = [0, 24], sizes = [8, 8], strides = [1, 1]} : vector<8x64xbf16> to vector<8x8xbf16>
    %138 = vector.extract_strided_slice %14 {offsets = [0, 56], sizes = [8, 8], strides = [1, 1]} : vector<8x64xbf16> to vector<8x8xbf16>
    %cst_45 = arith.constant dense<0.000000e+00> : vector<8x8xf32>
    %139 = tpu.matmul %136, %137, %cst_45 {dimension_numbers = #tpu.dot_dimension_numbers<[1], [1], [0], [0], [0, 0, 1, 0], [], []>} : vector<8x8xbf16>, vector<8x8xbf16>, vector<8x8xf32> -> vector<8x8xf32>
    %140 = vector.broadcast %6 : vector<1x8xf32> to vector<8x8xf32>
    %141 = arith.addf %139, %140 : vector<8x8xf32>
    %cst_46 = arith.constant dense<0xFF800000> : vector<8xf32>
    %142 = vector.multi_reduction <maximumf>, %141, %cst_46 [1] : vector<8x8xf32> to vector<8xf32>
    %143 = vector.shape_cast %142 : vector<8xf32> to vector<8x1xf32>
    %144 = vector.broadcast %143 : vector<8x1xf32> to vector<8x8xf32>
    %145 = arith.subf %141, %144 : vector<8x8xf32>
    %146 = math.exp %145 : vector<8x8xf32>
    %cst_47 = arith.constant dense<0.000000e+00> : vector<8xf32>
    %147 = vector.multi_reduction <add>, %146, %cst_47 [1] : vector<8x8xf32> to vector<8xf32>
    %148 = vector.shape_cast %147 : vector<8xf32> to vector<8x1xf32>
    %149 = tpu.reciprocal %148 {approx = true} : vector<8x1xf32> -> vector<8x1xf32>
    %150 = vector.broadcast %149 : vector<8x1xf32> to vector<8x8xf32>
    %151 = arith.mulf %146, %150 : vector<8x8xf32>
    %152 = arith.truncf %151 : vector<8x8xf32> to vector<8x8xbf16>
    %cst_48 = arith.constant dense<0.000000e+00> : vector<8x8xf32>
    %153 = tpu.matmul %152, %138, %cst_48 {dimension_numbers = #tpu.dot_dimension_numbers<[1], [0], [0], [1], [0, 0, 1, 1], [], []>} : vector<8x8xbf16>, vector<8x8xbf16>, vector<8x8xf32> -> vector<8x8xf32>
    %154 = arith.truncf %153 : vector<8x8xf32> to vector<8x8xbf16>
    %c0_49 = arith.constant 0 : index
    %c24 = arith.constant 24 : index
    %155 = vector.load %arg25[%c0_49, %c24] : memref<8x64xbf16, #tpu.memory_space<vmem>>, vector<8x8xbf16>
    tpu.vector_store %arg25[%c0_49, %c24], %154 {strides = array<i32>} : memref<8x64xbf16, #tpu.memory_space<vmem>>, vector<8x8xbf16>,
    %156 = vector.extract_strided_slice %13 {offsets = [0, 56], sizes = [8, 8], strides = [1, 1]} : vector<8x64xbf16> to vector<8x8xbf16>
    %157 = vector.extract_strided_slice %15 {offsets = [0, 24], sizes = [8, 8], strides = [1, 1]} : vector<8x64xbf16> to vector<8x8xbf16>
    %158 = vector.extract_strided_slice %15 {offsets = [0, 56], sizes = [8, 8], strides = [1, 1]} : vector<8x64xbf16> to vector<8x8xbf16>
    %cst_50 = arith.constant dense<0.000000e+00> : vector<8x8xf32>
    %159 = tpu.matmul %156, %157, %cst_50 {dimension_numbers = #tpu.dot_dimension_numbers<[1], [1], [0], [0], [0, 0, 1, 0], [], []>} : vector<8x8xbf16>, vector<8x8xbf16>, vector<8x8xf32> -> vector<8x8xf32>
    %160 = vector.broadcast %6 : vector<1x8xf32> to vector<8x8xf32>
    %161 = arith.addf %159, %160 : vector<8x8xf32>
    %cst_51 = arith.constant dense<0xFF800000> : vector<8xf32>
    %162 = vector.multi_reduction <maximumf>, %161, %cst_51 [1] : vector<8x8xf32> to vector<8xf32>
    %163 = vector.shape_cast %162 : vector<8xf32> to vector<8x1xf32>
    %164 = vector.broadcast %163 : vector<8x1xf32> to vector<8x8xf32>
    %165 = arith.subf %161, %164 : vector<8x8xf32>
    %166 = math.exp %165 : vector<8x8xf32>
    %cst_52 = arith.constant dense<0.000000e+00> : vector<8xf32>
    %167 = vector.multi_reduction <add>, %166, %cst_52 [1] : vector<8x8xf32> to vector<8xf32>
    %168 = vector.shape_cast %167 : vector<8xf32> to vector<8x1xf32>
    %169 = tpu.reciprocal %168 {approx = true} : vector<8x1xf32> -> vector<8x1xf32>
    %170 = vector.broadcast %169 : vector<8x1xf32> to vector<8x8xf32>
    %171 = arith.mulf %166, %170 : vector<8x8xf32>
    %172 = arith.truncf %171 : vector<8x8xf32> to vector<8x8xbf16>
    %cst_53 = arith.constant dense<0.000000e+00> : vector<8x8xf32>
    %173 = tpu.matmul %172, %158, %cst_53 {dimension_numbers = #tpu.dot_dimension_numbers<[1], [0], [0], [1], [0, 0, 1, 1], [], []>} : vector<8x8xbf16>, vector<8x8xbf16>, vector<8x8xf32> -> vector<8x8xf32>
    %174 = arith.truncf %173 : vector<8x8xf32> to vector<8x8xbf16>
    %c0_54 = arith.constant 0 : index
    %c56 = arith.constant 56 : index
    %175 = vector.load %arg25[%c0_54, %c56] : memref<8x64xbf16, #tpu.memory_space<vmem>>, vector<8x8xbf16>
    tpu.vector_store %arg25[%c0_54, %c56], %174 {strides = array<i32>} : memref<8x64xbf16, #tpu.memory_space<vmem>>, vector<8x8xbf16>,
    %c0_55 = arith.constant 0 : index
    %c0_56 = arith.constant 0 : index
    %176 = vector.load %arg25[%c0_55, %c0_56] : memref<8x64xbf16, #tpu.memory_space<vmem>>, vector<8x64xbf16>
    %c0_57 = arith.constant 0 : index
    %c0_58 = arith.constant 0 : index
    %177 = vector.load %arg12[%c0_57, %c0_58] : memref<64x32xbf16, #tpu.memory_space<vmem>>, vector<64x32xbf16>
    %cst_59 = arith.constant dense<0.000000e+00> : vector<8x32xf32>
    %178 = tpu.matmul %176, %177, %cst_59 {dimension_numbers = #tpu.dot_dimension_numbers<[1], [0], [0], [1], [0, 0, 1, 1], [], []>} : vector<8x64xbf16>, vector<64x32xbf16>, vector<8x32xf32> -> vector<8x32xf32>
    %c0_60 = arith.constant 0 : index
    %c0_61 = arith.constant 0 : index
    %179 = vector.load %arg13[%c0_60, %c0_61] : memref<1x32xf32, #tpu.memory_space<vmem>>, vector<1x32xf32>
    %180 = vector.broadcast %179 : vector<1x32xf32> to vector<8x32xf32>
    %181 = arith.addf %178, %180 : vector<8x32xf32>
    %182 = arith.addf %181, %4 : vector<8x32xf32>
    %c0_62 = arith.constant 0 : index
    %c0_63 = arith.constant 0 : index
    %183 = vector.load %arg14[%c0_62, %c0_63] : memref<1x32xf32, #tpu.memory_space<vmem>>, vector<1x32xf32>
    %c0_64 = arith.constant 0 : index
    %c0_65 = arith.constant 0 : index
    %184 = vector.load %arg15[%c0_64, %c0_65] : memref<1x32xf32, #tpu.memory_space<vmem>>, vector<1x32xf32>
    %cst_66 = arith.constant dense<0.000000e+00> : vector<8xf32>
    %185 = vector.multi_reduction <add>, %182, %cst_66 [1] : vector<8x32xf32> to vector<8xf32>
    %186 = vector.shape_cast %185 : vector<8xf32> to vector<8x1xf32>
    %cst_67 = arith.constant 3.200000e+01 : f32
    %187 = vector.broadcast %cst_67 : f32 to vector<8x1xf32>
    %188 = arith.divf %186, %187 : vector<8x1xf32>
    %189 = vector.broadcast %188 : vector<8x1xf32> to vector<8x32xf32>
    %190 = arith.subf %182, %189 : vector<8x32xf32>
    %191 = arith.mulf %190, %190 : vector<8x32xf32>
    %cst_68 = arith.constant dense<0.000000e+00> : vector<8xf32>
    %192 = vector.multi_reduction <add>, %191, %cst_68 [1] : vector<8x32xf32> to vector<8xf32>
    %193 = vector.shape_cast %192 : vector<8xf32> to vector<8x1xf32>
    %cst_69 = arith.constant 3.200000e+01 : f32
    %194 = vector.broadcast %cst_69 : f32 to vector<8x1xf32>
    %195 = arith.divf %193, %194 : vector<8x1xf32>
    %196 = vector.broadcast %188 : vector<8x1xf32> to vector<8x32xf32>
    %197 = arith.subf %182, %196 : vector<8x32xf32>
    %cst_70 = arith.constant 9.99999974E-6 : f32
    %198 = vector.broadcast %cst_70 : f32 to vector<8x1xf32>
    %199 = arith.addf %195, %198 : vector<8x1xf32>
    %200 = math.rsqrt %199 : vector<8x1xf32>
    %201 = vector.broadcast %200 : vector<8x1xf32> to vector<8x32xf32>
    %202 = arith.mulf %197, %201 : vector<8x32xf32>
    %203 = vector.broadcast %183 : vector<1x32xf32> to vector<8x32xf32>
    %204 = arith.mulf %202, %203 : vector<8x32xf32>
    %205 = vector.broadcast %184 : vector<1x32xf32> to vector<8x32xf32>
    %206 = arith.addf %204, %205 : vector<8x32xf32>
    %207 = arith.truncf %206 : vector<8x32xf32> to vector<8x32xbf16>
    %c0_71 = arith.constant 0 : index
    %c0_72 = arith.constant 0 : index
    %208 = vector.load %arg16[%c0_71, %c0_72] : memref<32x64xbf16, #tpu.memory_space<vmem>>, vector<32x64xbf16>
    %cst_73 = arith.constant dense<0.000000e+00> : vector<8x64xf32>
    %209 = tpu.matmul %207, %208, %cst_73 {dimension_numbers = #tpu.dot_dimension_numbers<[1], [0], [0], [1], [0, 0, 1, 1], [], []>} : vector<8x32xbf16>, vector<32x64xbf16>, vector<8x64xf32> -> vector<8x64xf32>
    %c0_74 = arith.constant 0 : index
    %c0_75 = arith.constant 0 : index
    %210 = vector.load %arg17[%c0_74, %c0_75] : memref<1x64xf32, #tpu.memory_space<vmem>>, vector<1x64xf32>
    %211 = vector.broadcast %210 : vector<1x64xf32> to vector<8x64xf32>
    %212 = arith.addf %209, %211 : vector<8x64xf32>
    %cst_76 = arith.constant 0.000000e+00 : f32
    %213 = vector.broadcast %cst_76 : f32 to vector<8x64xf32>
    %214 = arith.maximumf %212, %213 : vector<8x64xf32>
    %215 = arith.truncf %214 : vector<8x64xf32> to vector<8x64xbf16>
    %c0_77 = arith.constant 0 : index
    %c0_78 = arith.constant 0 : index
    %216 = vector.load %arg18[%c0_77, %c0_78] : memref<64x32xbf16, #tpu.memory_space<vmem>>, vector<64x32xbf16>
    %cst_79 = arith.constant dense<0.000000e+00> : vector<8x32xf32>
    %217 = tpu.matmul %215, %216, %cst_79 {dimension_numbers = #tpu.dot_dimension_numbers<[1], [0], [0], [1], [0, 0, 1, 1], [], []>} : vector<8x64xbf16>, vector<64x32xbf16>, vector<8x32xf32> -> vector<8x32xf32>
    %c0_80 = arith.constant 0 : index
    %c0_81 = arith.constant 0 : index
    %218 = vector.load %arg19[%c0_80, %c0_81] : memref<1x32xf32, #tpu.memory_space<vmem>>, vector<1x32xf32>
    %219 = vector.broadcast %218 : vector<1x32xf32> to vector<8x32xf32>
    %220 = arith.addf %217, %219 : vector<8x32xf32>
    %221 = arith.addf %220, %206 : vector<8x32xf32>
    %c0_82 = arith.constant 0 : index
    %c0_83 = arith.constant 0 : index
    %222 = vector.load %arg20[%c0_82, %c0_83] : memref<1x32xf32, #tpu.memory_space<vmem>>, vector<1x32xf32>
    %c0_84 = arith.constant 0 : index
    %c0_85 = arith.constant 0 : index
    %223 = vector.load %arg21[%c0_84, %c0_85] : memref<1x32xf32, #tpu.memory_space<vmem>>, vector<1x32xf32>
    %cst_86 = arith.constant dense<0.000000e+00> : vector<8xf32>
    %224 = vector.multi_reduction <add>, %221, %cst_86 [1] : vector<8x32xf32> to vector<8xf32>
    %225 = vector.shape_cast %224 : vector<8xf32> to vector<8x1xf32>
    %cst_87 = arith.constant 3.200000e+01 : f32
    %226 = vector.broadcast %cst_87 : f32 to vector<8x1xf32>
    %227 = arith.divf %225, %226 : vector<8x1xf32>
    %228 = vector.broadcast %227 : vector<8x1xf32> to vector<8x32xf32>
    %229 = arith.subf %221, %228 : vector<8x32xf32>
    %230 = arith.mulf %229, %229 : vector<8x32xf32>
    %cst_88 = arith.constant dense<0.000000e+00> : vector<8xf32>
    %231 = vector.multi_reduction <add>, %230, %cst_88 [1] : vector<8x32xf32> to vector<8xf32>
    %232 = vector.shape_cast %231 : vector<8xf32> to vector<8x1xf32>
    %cst_89 = arith.constant 3.200000e+01 : f32
    %233 = vector.broadcast %cst_89 : f32 to vector<8x1xf32>
    %234 = arith.divf %232, %233 : vector<8x1xf32>
    %235 = vector.broadcast %227 : vector<8x1xf32> to vector<8x32xf32>
    %236 = arith.subf %221, %235 : vector<8x32xf32>
    %cst_90 = arith.constant 9.99999974E-6 : f32
    %237 = vector.broadcast %cst_90 : f32 to vector<8x1xf32>
    %238 = arith.addf %234, %237 : vector<8x1xf32>
    %239 = math.rsqrt %238 : vector<8x1xf32>
    %240 = vector.broadcast %239 : vector<8x1xf32> to vector<8x32xf32>
    %241 = arith.mulf %236, %240 : vector<8x32xf32>
    %242 = vector.broadcast %222 : vector<1x32xf32> to vector<8x32xf32>
    %243 = arith.mulf %241, %242 : vector<8x32xf32>
    %244 = vector.broadcast %223 : vector<1x32xf32> to vector<8x32xf32>
    %245 = arith.addf %243, %244 : vector<8x32xf32>
    %246 = vector.shape_cast %245 : vector<8x32xf32> to vector<1x8x32xf32>
    %c0_91 = arith.constant 0 : index
    %c0_92 = arith.constant 0 : index
    %c0_93 = arith.constant 0 : index
    %247 = vector.load %arg22[%c0_91, %c0_92, %c0_93] : memref<1x8x32xf32, #tpu.memory_space<vmem>>, vector<1x8x32xf32>
    tpu.vector_store %arg22[%c0_91, %c0_92, %c0_93], %246 {strides = array<i32>} : memref<1x8x32xf32, #tpu.memory_space<vmem>>, vector<1x8x32xf32>,
    return
  }
  func.func @transform_0(%arg0: i32, %arg1: i32) -> (i32, i32, i32) {
    %c0_i32 = arith.constant 0 : i32
    %c0_i32_0 = arith.constant 0 : i32
    return %arg0, %arg1, %c0_i32 : i32, i32, i32
  }
  func.func @transform_1(%arg0: i32, %arg1: i32) -> (i32, i32, i32) {
    %c0_i32 = arith.constant 0 : i32
    %c0_i32_0 = arith.constant 0 : i32
    %c0_i32_1 = arith.constant 0 : i32
    return %arg0, %c0_i32, %c0_i32_0 : i32, i32, i32
  }
  func.func @transform_2(%arg0: i32, %arg1: i32) -> (i32, i32, i32) {
    %c0_i32 = arith.constant 0 : i32
    %c0_i32_0 = arith.constant 0 : i32
    %c0_i32_1 = arith.constant 0 : i32
    return %arg0, %c0_i32, %c0_i32_0 : i32, i32, i32
  }
  func.func @transform_3(%arg0: i32, %arg1: i32) -> (i32, i32, i32) {
    %c0_i32 = arith.constant 0 : i32
    %c0_i32_0 = arith.constant 0 : i32
    %c0_i32_1 = arith.constant 0 : i32
    return %arg0, %c0_i32, %c0_i32_0 : i32, i32, i32
  }
  func.func @transform_4(%arg0: i32, %arg1: i32) -> (i32, i32) {
    %c0_i32 = arith.constant 0 : i32
    %c0_i32_0 = arith.constant 0 : i32
    %c0_i32_1 = arith.constant 0 : i32
    return %c0_i32, %c0_i32_0 : i32, i32
  }
  func.func @transform_5(%arg0: i32, %arg1: i32) -> (i32, i32) {
    %c0_i32 = arith.constant 0 : i32
    %c0_i32_0 = arith.constant 0 : i32
    %c0_i32_1 = arith.constant 0 : i32
    return %c0_i32, %c0_i32_0 : i32, i32
  }
  func.func @transform_6(%arg0: i32, %arg1: i32) -> (i32, i32) {
    %c0_i32 = arith.constant 0 : i32
    %c0_i32_0 = arith.constant 0 : i32
    %c0_i32_1 = arith.constant 0 : i32
    return %c0_i32, %c0_i32_0 : i32, i32
  }
  func.func @transform_7(%arg0: i32, %arg1: i32) -> (i32, i32) {
    %c0_i32 = arith.constant 0 : i32
    %c0_i32_0 = arith.constant 0 : i32
    %c0_i32_1 = arith.constant 0 : i32
    return %c0_i32, %c0_i32_0 : i32, i32
  }
  func.func @transform_8(%arg0: i32, %arg1: i32) -> (i32, i32) {
    %c0_i32 = arith.constant 0 : i32
    %c0_i32_0 = arith.constant 0 : i32
    %c0_i32_1 = arith.constant 0 : i32
    return %c0_i32, %c0_i32_0 : i32, i32
  }
  func.func @transform_9(%arg0: i32, %arg1: i32) -> (i32, i32) {
    %c0_i32 = arith.constant 0 : i32
    %c0_i32_0 = arith.constant 0 : i32
    %c0_i32_1 = arith.constant 0 : i32
    return %c0_i32, %c0_i32_0 : i32, i32
  }
  func.func @transform_10(%arg0: i32, %arg1: i32) -> (i32, i32) {
    %c0_i32 = arith.constant 0 : i32
    %c0_i32_0 = arith.constant 0 : i32
    %c0_i32_1 = arith.constant 0 : i32
    return %c0_i32, %c0_i32_0 : i32, i32
  }
  func.func @transform_11(%arg0: i32, %arg1: i32) -> (i32, i32) {
    %c0_i32 = arith.constant 0 : i32
    %c0_i32_0 = arith.constant 0 : i32
    %c0_i32_1 = arith.constant 0 : i32
    return %c0_i32, %c0_i32_0 : i32, i32
  }
  func.func @transform_12(%arg0: i32, %arg1: i32) -> (i32, i32) {
    %c0_i32 = arith.constant 0 : i32
    %c0_i32_0 = arith.constant 0 : i32
    %c0_i32_1 = arith.constant 0 : i32
    return %c0_i32, %c0_i32_0 : i32, i32
  }
  func.func @transform_13(%arg0: i32, %arg1: i32) -> (i32, i32) {
    %c0_i32 = arith.constant 0 : i32
    %c0_i32_0 = arith.constant 0 : i32
    %c0_i32_1 = arith.constant 0 : i32
    return %c0_i32, %c0_i32_0 : i32, i32
  }
  func.func @transform_14(%arg0: i32, %arg1: i32) -> (i32, i32) {
    %c0_i32 = arith.constant 0 : i32
    %c0_i32_0 = arith.constant 0 : i32
    %c0_i32_1 = arith.constant 0 : i32
    return %c0_i32, %c0_i32_0 : i32, i32
  }
  func.func @transform_15(%arg0: i32, %arg1: i32) -> (i32, i32) {
    %c0_i32 = arith.constant 0 : i32
    %c0_i32_0 = arith.constant 0 : i32
    %c0_i32_1 = arith.constant 0 : i32
    return %c0_i32, %c0_i32_0 : i32, i32
  }
  func.func @transform_16(%arg0: i32, %arg1: i32) -> (i32, i32) {
    %c0_i32 = arith.constant 0 : i32
    %c0_i32_0 = arith.constant 0 : i32
    %c0_i32_1 = arith.constant 0 : i32
    return %c0_i32, %c0_i32_0 : i32, i32
  }
  func.func @transform_17(%arg0: i32, %arg1: i32) -> (i32, i32) {
    %c0_i32 = arith.constant 0 : i32
    %c0_i32_0 = arith.constant 0 : i32
    %c0_i32_1 = arith.constant 0 : i32
    return %c0_i32, %c0_i32_0 : i32, i32
  }
  func.func @transform_18(%arg0: i32, %arg1: i32) -> (i32, i32) {
    %c0_i32 = arith.constant 0 : i32
    %c0_i32_0 = arith.constant 0 : i32
    %c0_i32_1 = arith.constant 0 : i32
    return %c0_i32, %c0_i32_0 : i32, i32
  }
  func.func @transform_19(%arg0: i32, %arg1: i32) -> (i32, i32) {
    %c0_i32 = arith.constant 0 : i32
    %c0_i32_0 = arith.constant 0 : i32
    %c0_i32_1 = arith.constant 0 : i32
    return %c0_i32, %c0_i32_0 : i32, i32
  }
  func.func @transform_20(%arg0: i32, %arg1: i32) -> (i32, i32, i32) {
    %c0_i32 = arith.constant 0 : i32
    %c0_i32_0 = arith.constant 0 : i32
    return %arg0, %arg1, %c0_i32 : i32, i32, i32
  }
}

</mosaic_0001>

<llo_original>
// kernel: tpu_custom_call.1
$region0: #{tpu_custom_call.1}
  #allocation0 [shape = 'u32[]', space=smem, size = 0x4, offset = 0x4, fixed_abs, tag = 'smem constant byte address 0x4 - core index']
  #allocation1 [shape = 'u32[144,128]{1,0:T(1,128)}', space=vmem, size = 0x12000, scoped, tag = 'internal scratch']
  #allocation2 [shape = 'bf16[8,64]{1,0:T(8,128)(2,1)}', space=vmem, size = 0x800, scoped, tag = 'scratch operand']
  #allocation3 [shape = 'bf16[8,64]{1,0:T(8,128)(2,1)}', space=vmem, size = 0x800, scoped, tag = 'scratch operand']
  #allocation4 [shape = 'bf16[8,64]{1,0:T(8,128)(2,1)}', space=vmem, size = 0x800, scoped, tag = 'scratch operand']
  %s0 = inlined_call_operand.vmem [shape: f32[2,8,32], index: 0, kind: input, shape index: {}]
  %s1 = inlined_call_operand.hbm [shape: bf16[2,8,32], index: 1, kind: input, shape index: {}]
  %s2 = inlined_call_operand.hbm [shape: bf16[2,8,32], index: 2, kind: input, shape index: {}]
  %s3 = inlined_call_operand.vmem [shape: f32[2,1,8], index: 3, kind: input, shape index: {}]
  %s4 = inlined_call_operand.vmem [shape: bf16[32,64], index: 4, kind: input, shape index: {}]
  %s5 = inlined_call_operand.vmem [shape: f32[1,64], index: 5, kind: input, shape index: {}]
  %s6 = inlined_call_operand.vmem [shape: bf16[32,64], index: 6, kind: input, shape index: {}]
  %s7 = inlined_call_operand.vmem [shape: f32[1,64], index: 7, kind: input, shape index: {}]
  %s8 = inlined_call_operand.vmem [shape: bf16[32,64], index: 8, kind: input, shape index: {}]
  %s9 = inlined_call_operand.vmem [shape: f32[1,64], index: 9, kind: input, shape index: {}]
  %s10 = inlined_call_operand.vmem [shape: bf16[64,32], index: 10, kind: input, shape index: {}]
  %s11 = inlined_call_operand.vmem [shape: f32[1,32], index: 11, kind: input, shape index: {}]
  %s12 = inlined_call_operand.vmem [shape: f32[1,32], index: 12, kind: input, shape index: {}]
  %s13 = inlined_call_operand.vmem [shape: f32[1,32], index: 13, kind: input, shape index: {}]
  %s14 = inlined_call_operand.vmem [shape: bf16[32,64], index: 14, kind: input, shape index: {}]
  %s15 = inlined_call_operand.vmem [shape: f32[1,64], index: 15, kind: input, shape index: {}]
  %s16 = inlined_call_operand.vmem [shape: bf16[64,32], index: 16, kind: input, shape index: {}]
  %s17 = inlined_call_operand.vmem [shape: f32[1,32], index: 17, kind: input, shape index: {}]
  %s18 = inlined_call_operand.vmem [shape: f32[1,32], index: 18, kind: input, shape index: {}]
  %s19 = inlined_call_operand.vmem [shape: f32[1,32], index: 19, kind: input, shape index: {}]
  %s20 = inlined_call_operand.hbm [shape: f32[2,8,32], index: 20, kind: output, shape index: {}]
  %s21 = sld [smem:[#allocation0]]
  $region125: #{tpu_custom_call.1} parent=0
    _
  %s23 = ssub.s32 1, %s21
  %s24 = scalar_select 0, %s23, %s21
  $region1: #{tpu_custom_call.1} parent=0
    #allocation5 [shape = 'u8[4096]{0}', space=vmem, size = 0x1000, scoped, tag = 'input window, operand 1']
    #allocation6 [shape = 's32[2]{0}', space=sflag, size = 0x8, scoped, tag = 'scoped memory for tpu_custom_call.1']
    #allocation7 [shape = 's32[2]{0}', space=sflag, size = 0x8, scoped, tag = 'scoped memory for tpu_custom_call.1']
    #allocation8 [shape = 'u8[4096]{0}', space=vmem, size = 0x1000, scoped, tag = 'input window, operand 2']
    #allocation9 [shape = 's32[2]{0}', space=sflag, size = 0x8, scoped, tag = 'scoped memory for tpu_custom_call.1']
    #allocation10 [shape = 'u8[8192]{0}', space=vmem, size = 0x2000, scoped, tag = 'output window, operand 0']
    %25 = vsyncpa [#allocation6], 0
    %s26 = scalar_lea.sflag [#allocation6], 1
    %27 = vsyncpa %s26, 0
    %28 = vsyncpa [#allocation9], 0
    %s29 = scalar_lea.sflag [#allocation9], 1
    %30 = vsyncpa %s29, 0
    %31 = vsyncpa [#allocation7], 0
    %s32 = scalar_lea.sflag [#allocation7], 1
    %33 = vsyncpa %s32, 0
    loop: start=0, step=1, limit=4
    $region2: #{tpu_custom_call.1} parent=1 // loop_pre_header
      _
    $region3: #{tpu_custom_call.1} parent=1 // loop_header
      %s35 = sphi 0, %s39
      %p36 = scmp.ge.s32.totalorder %s35, 4
      %s42 = sphi 0, %s54
      %s43 = sphi 0, %s50
      %s44 = sphi 0, %s42
      %s45 = sphi 0, %s43
      %s46 = sphi 0, %s44
      %s47 = sphi 0, %s45
      %s59 = sphi 0, %s61
      %s62 = sphi 0, %s59
      %s63 = sphi 0, %s62
      %s79 = sphi 0, %s63
      %s85 = sphi 0, %s87
      %s88 = sphi 0, %s85
      %s89 = sphi 0, %s88
      %s105 = sphi 0, %s89
      %s111 = sphi 0, %s113
      %s114 = sphi 0, %s111
      %s115 = sphi 0, %s114
      %s131 = sphi 0, %s115
      %s137 = sphi 0, %s139
      %s140 = sphi 0, %s137
      %s141 = sphi 0, %s140
      %s157 = sphi 0, %s141
      %s161 = sphi 0, %s161
      %s163 = sphi 0, %s161
      %s164 = sphi 0, %s163
      %s178 = sphi 0, %s164
      %s182 = sphi 0, %s182
      %s184 = sphi 0, %s182
      %s185 = sphi 0, %s184
      %s199 = sphi 0, %s185
      %s203 = sphi 0, %s203
      %s205 = sphi 0, %s203
      %s206 = sphi 0, %s205
      %s220 = sphi 0, %s206
      %s224 = sphi 0, %s224
      %s226 = sphi 0, %s224
      %s227 = sphi 0, %s226
      %s241 = sphi 0, %s227
      %s245 = sphi 0, %s245
      %s247 = sphi 0, %s245
      %s248 = sphi 0, %s247
      %s262 = sphi 0, %s248
      %s266 = sphi 0, %s266
      %s268 = sphi 0, %s266
      %s269 = sphi 0, %s268
      %s283 = sphi 0, %s269
      %s287 = sphi 0, %s287
      %s289 = sphi 0, %s287
      %s290 = sphi 0, %s289
      %s304 = sphi 0, %s290
      %s308 = sphi 0, %s308
      %s310 = sphi 0, %s308
      %s311 = sphi 0, %s310
      %s325 = sphi 0, %s311
      %s329 = sphi 0, %s329
      %s331 = sphi 0, %s329
      %s332 = sphi 0, %s331
      %s346 = sphi 0, %s332
      %s350 = sphi 0, %s350
      %s352 = sphi 0, %s350
      %s353 = sphi 0, %s352
      %s367 = sphi 0, %s353
      %s371 = sphi 0, %s371
      %s373 = sphi 0, %s371
      %s374 = sphi 0, %s373
      %s388 = sphi 0, %s374
      %s392 = sphi 0, %s392
      %s394 = sphi 0, %s392
      %s395 = sphi 0, %s394
      %s409 = sphi 0, %s395
      %s413 = sphi 0, %s413
      %s415 = sphi 0, %s413
      %s416 = sphi 0, %s415
      %s430 = sphi 0, %s416
      %s434 = sphi 0, %s434
      %s436 = sphi 0, %s434
      %s437 = sphi 0, %s436
      %s451 = sphi 0, %s437
      %s455 = sphi 0, %s455
      %s457 = sphi 0, %s455
      %s458 = sphi 0, %s457
      %s472 = sphi 0, %s458
      %s476 = sphi 0, %s476
      %s478 = sphi 0, %s476
      %s479 = sphi 0, %s478
      %s493 = sphi 0, %s479
      %s501 = sphi 0, %s503
      %s504 = sphi 0, %s501
      %s505 = sphi 0, %s504
      %s521 = sphi 0, %s505
    $region4: #{tpu_custom_call.1} parent=1 // loop_header_branch
      %38 = sbr.rel (%p36) target = $region8
    $region5: #{tpu_custom_call.1} parent=1 // loop_body
      %s40 = ssub.s32 %s35, 1
      %s41 = ssub.s32 %s35, 2
      %s48 = sadd.s32 1, %s43
      %p49 = scmp.ge.s32.totalorder %s48, 1
      %s50 = scalar_select %p49, 0, %s48
      %s51 = sadd.s32 1, %s42
      %s52 = scalar_select %p49, %s51, %s42
      %p53 = scmp.ge.s32.totalorder %s52, 2
      %s54 = scalar_select %p53, 0, %s52
      %s55 = ssub.s32 %s42, %s54
      %s56 = ssub.s32 %s43, %s50
      %s57 = sor.u32 %s55, %s56
      %p58 = scmp.eq.s32.totalorder %s57, 0
      %s60 = sadd.s32 %s59, 1
      %s61 = scalar_select %p58, %s59, %s60
      %p64 = pneg %p58
      %p65 = scmp.eq.s32.totalorder %s35, 1
      %p66 = por %p64, %p65
      %p67 = scmp.ne.s32.totalorder %s59, %s62
      %p68 = scmp.eq.s32.totalorder %s35, 0
      %p69 = por %p67, %p68
      %p70 = scmp.ne.s32.totalorder %s59, %s62
      %p71 = scmp.eq.s32.totalorder %s40, 1
      %p72 = por %p70, %p71
      %p73 = scmp.ne.s32.totalorder %s62, %s63
      %p74 = scmp.eq.s32.totalorder %s40, 0
      %p75 = por %p73, %p74
      %p76 = scmp.ne.s32.totalorder %s62, %s63
      %p77 = scmp.eq.s32.totalorder %s41, 1
      %p78 = por %p76, %p77
      %p80 = scmp.ne.s32.totalorder %s63, %s79
      %p81 = scmp.eq.s32.totalorder %s41, 0
      %p82 = por %p80, %p81
      %s83 = ssub.s32 %s42, %s54
      %p84 = scmp.eq.s32.totalorder %s83, 0
      %s86 = sadd.s32 %s85, 1
      %s87 = scalar_select %p84, %s85, %s86
      %p90 = pneg %p84
      %p91 = scmp.eq.s32.totalorder %s35, 1
      %p92 = por %p90, %p91
      %p93 = scmp.ne.s32.totalorder %s85, %s88
      %p94 = scmp.eq.s32.totalorder %s35, 0
      %p95 = por %p93, %p94
      %p96 = scmp.ne.s32.totalorder %s85, %s88
      %p97 = scmp.eq.s32.totalorder %s40, 1
      %p98 = por %p96, %p97
      %p99 = scmp.ne.s32.totalorder %s88, %s89
      %p100 = scmp.eq.s32.totalorder %s40, 0
      %p101 = por %p99, %p100
      %p102 = scmp.ne.s32.totalorder %s88, %s89
      %p103 = scmp.eq.s32.totalorder %s41, 1
      %p104 = por %p102, %p103
      %p106 = scmp.ne.s32.totalorder %s89, %s105
      %p107 = scmp.eq.s32.totalorder %s41, 0
      %p108 = por %p106, %p107
      %s109 = ssub.s32 %s42, %s54
      %p110 = scmp.eq.s32.totalorder %s109, 0
      %s112 = sadd.s32 %s111, 1
      %s113 = scalar_select %p110, %s111, %s112
      %p116 = pneg %p110
      %p117 = scmp.eq.s32.totalorder %s35, 1
      %p118 = por %p116, %p117
      %p119 = scmp.ne.s32.totalorder %s111, %s114
      %p120 = scmp.eq.s32.totalorder %s35, 0
      %p121 = por %p119, %p120
      %p122 = scmp.ne.s32.totalorder %s111, %s114
      %p123 = scmp.eq.s32.totalorder %s40, 1
      %p124 = por %p122, %p123
      %p125 = scmp.ne.s32.totalorder %s114, %s115
      %p126 = scmp.eq.s32.totalorder %s40, 0
      %p127 = por %p125, %p126
      %p128 = scmp.ne.s32.totalorder %s114, %s115
      %p129 = scmp.eq.s32.totalorder %s41, 1
      %p130 = por %p128, %p129
      %p132 = scmp.ne.s32.totalorder %s115, %s131
      %p133 = scmp.eq.s32.totalorder %s41, 0
      %p134 = por %p132, %p133
      %s135 = ssub.s32 %s42, %s54
      %p136 = scmp.eq.s32.totalorder %s135, 0
      %s138 = sadd.s32 %s137, 1
      %s139 = scalar_select %p136, %s137, %s138
      %p142 = pneg %p136
      %p143 = scmp.eq.s32.totalorder %s35, 1
      %p144 = por %p142, %p143
      %p145 = scmp.ne.s32.totalorder %s137, %s140
      %p146 = scmp.eq.s32.totalorder %s35, 0
      %p147 = por %p145, %p146
      %p148 = scmp.ne.s32.totalorder %s137, %s140
      %p149 = scmp.eq.s32.totalorder %s40, 1
      %p150 = por %p148, %p149
      %p151 = scmp.ne.s32.totalorder %s140, %s141
      %p152 = scmp.eq.s32.totalorder %s40, 0
      %p153 = por %p151, %p152
      %p154 = scmp.ne.s32.totalorder %s140, %s141
      %p155 = scmp.eq.s32.totalorder %s41, 1
      %p156 = por %p154, %p155
      %p158 = scmp.ne.s32.totalorder %s141, %s157
      %p159 = scmp.eq.s32.totalorder %s41, 0
      %p160 = por %p158, %p159
      %s162 = sadd.s32 %s161, 1
      %p165 = scmp.eq.s32.totalorder %s35, 1
      %p166 = scmp.ne.s32.totalorder %s161, %s163
      %p167 = scmp.eq.s32.totalorder %s35, 0
      %p168 = por %p166, %p167
      %p169 = scmp.ne.s32.totalorder %s161, %s163
      %p170 = scmp.eq.s32.totalorder %s40, 1
      %p171 = por %p169, %p170
      %p172 = scmp.ne.s32.totalorder %s163, %s164
      %p173 = scmp.eq.s32.totalorder %s40, 0
      %p174 = por %p172, %p173
      %p175 = scmp.ne.s32.totalorder %s163, %s164
      %p176 = scmp.eq.s32.totalorder %s41, 1
      %p177 = por %p175, %p176
      %p179 = scmp.ne.s32.totalorder %s164, %s178
      %p180 = scmp.eq.s32.totalorder %s41, 0
      %p181 = por %p179, %p180
      %s183 = sadd.s32 %s182, 1
      %p186 = scmp.eq.s32.totalorder %s35, 1
      %p187 = scmp.ne.s32.totalorder %s182, %s184
      %p188 = scmp.eq.s32.totalorder %s35, 0
      %p189 = por %p187, %p188
      %p190 = scmp.ne.s32.totalorder %s182, %s184
      %p191 = scmp.eq.s32.totalorder %s40, 1
      %p192 = por %p190, %p191
      %p193 = scmp.ne.s32.totalorder %s184, %s185
      %p194 = scmp.eq.s32.totalorder %s40, 0
      %p195 = por %p193, %p194
      %p196 = scmp.ne.s32.totalorder %s184, %s185
      %p197 = scmp.eq.s32.totalorder %s41, 1
      %p198 = por %p196, %p197
      %p200 = scmp.ne.s32.totalorder %s185, %s199
      %p201 = scmp.eq.s32.totalorder %s41, 0
      %p202 = por %p200, %p201
      %s204 = sadd.s32 %s203, 1
      %p207 = scmp.eq.s32.totalorder %s35, 1
      %p208 = scmp.ne.s32.totalorder %s203, %s205
      %p209 = scmp.eq.s32.totalorder %s35, 0
      %p210 = por %p208, %p209
      %p211 = scmp.ne.s32.totalorder %s203, %s205
      %p212 = scmp.eq.s32.totalorder %s40, 1
      %p213 = por %p211, %p212
      %p214 = scmp.ne.s32.totalorder %s205, %s206
      %p215 = scmp.eq.s32.totalorder %s40, 0
      %p216 = por %p214, %p215
      %p217 = scmp.ne.s32.totalorder %s205, %s206
      %p218 = scmp.eq.s32.totalorder %s41, 1
      %p219 = por %p217, %p218
      %p221 = scmp.ne.s32.totalorder %s206, %s220
      %p222 = scmp.eq.s32.totalorder %s41, 0
      %p223 = por %p221, %p222
      %s225 = sadd.s32 %s224, 1
      %p228 = scmp.eq.s32.totalorder %s35, 1
      %p229 = scmp.ne.s32.totalorder %s224, %s226
      %p230 = scmp.eq.s32.totalorder %s35, 0
      %p231 = por %p229, %p230
      %p232 = scmp.ne.s32.totalorder %s224, %s226
      %p233 = scmp.eq.s32.totalorder %s40, 1
      %p234 = por %p232, %p233
      %p235 = scmp.ne.s32.totalorder %s226, %s227
      %p236 = scmp.eq.s32.totalorder %s40, 0
      %p237 = por %p235, %p236
      %p238 = scmp.ne.s32.totalorder %s226, %s227
      %p239 = scmp.eq.s32.totalorder %s41, 1
      %p240 = por %p238, %p239
      %p242 = scmp.ne.s32.totalorder %s227, %s241
      %p243 = scmp.eq.s32.totalorder %s41, 0
      %p244 = por %p242, %p243
      %s246 = sadd.s32 %s245, 1
      %p249 = scmp.eq.s32.totalorder %s35, 1
      %p250 = scmp.ne.s32.totalorder %s245, %s247
      %p251 = scmp.eq.s32.totalorder %s35, 0
      %p252 = por %p250, %p251
      %p253 = scmp.ne.s32.totalorder %s245, %s247
      %p254 = scmp.eq.s32.totalorder %s40, 1
      %p255 = por %p253, %p254
      %p256 = scmp.ne.s32.totalorder %s247, %s248
      %p257 = scmp.eq.s32.totalorder %s40, 0
      %p258 = por %p256, %p257
      %p259 = scmp.ne.s32.totalorder %s247, %s248
      %p260 = scmp.eq.s32.totalorder %s41, 1
      %p261 = por %p259, %p260
      %p263 = scmp.ne.s32.totalorder %s248, %s262
      %p264 = scmp.eq.s32.totalorder %s41, 0
      %p265 = por %p263, %p264
      %s267 = sadd.s32 %s266, 1
      %p270 = scmp.eq.s32.totalorder %s35, 1
      %p271 = scmp.ne.s32.totalorder %s266, %s268
      %p272 = scmp.eq.s32.totalorder %s35, 0
      %p273 = por %p271, %p272
      %p274 = scmp.ne.s32.totalorder %s266, %s268
      %p275 = scmp.eq.s32.totalorder %s40, 1
      %p276 = por %p274, %p275
      %p277 = scmp.ne.s32.totalorder %s268, %s269
      %p278 = scmp.eq.s32.totalorder %s40, 0
      %p279 = por %p277, %p278
      %p280 = scmp.ne.s32.totalorder %s268, %s269
      %p281 = scmp.eq.s32.totalorder %s41, 1
      %p282 = por %p280, %p281
      %p284 = scmp.ne.s32.totalorder %s269, %s283
      %p285 = scmp.eq.s32.totalorder %s41, 0
      %p286 = por %p284, %p285
      %s288 = sadd.s32 %s287, 1
      %p291 = scmp.eq.s32.totalorder %s35, 1
      %p292 = scmp.ne.s32.totalorder %s287, %s289
      %p293 = scmp.eq.s32.totalorder %s35, 0
      %p294 = por %p292, %p293
      %p295 = scmp.ne.s32.totalorder %s287, %s289
      %p296 = scmp.eq.s32.totalorder %s40, 1
      %p297 = por %p295, %p296
      %p298 = scmp.ne.s32.totalorder %s289, %s290
      %p299 = scmp.eq.s32.totalorder %s40, 0
      %p300 = por %p298, %p299
      %p301 = scmp.ne.s32.totalorder %s289, %s290
      %p302 = scmp.eq.s32.totalorder %s41, 1
      %p303 = por %p301, %p302
      %p305 = scmp.ne.s32.totalorder %s290, %s304
      %p306 = scmp.eq.s32.totalorder %s41, 0
      %p307 = por %p305, %p306
      %s309 = sadd.s32 %s308, 1
      %p312 = scmp.eq.s32.totalorder %s35, 1
      %p313 = scmp.ne.s32.totalorder %s308, %s310
      %p314 = scmp.eq.s32.totalorder %s35, 0
      %p315 = por %p313, %p314
      %p316 = scmp.ne.s32.totalorder %s308, %s310
      %p317 = scmp.eq.s32.totalorder %s40, 1
      %p318 = por %p316, %p317
      %p319 = scmp.ne.s32.totalorder %s310, %s311
      %p320 = scmp.eq.s32.totalorder %s40, 0
      %p321 = por %p319, %p320
      %p322 = scmp.ne.s32.totalorder %s310, %s311
      %p323 = scmp.eq.s32.totalorder %s41, 1
      %p324 = por %p322, %p323
      %p326 = scmp.ne.s32.totalorder %s311, %s325
      %p327 = scmp.eq.s32.totalorder %s41, 0
      %p328 = por %p326, %p327
      %s330 = sadd.s32 %s329, 1
      %p333 = scmp.eq.s32.totalorder %s35, 1
      %p334 = scmp.ne.s32.totalorder %s329, %s331
      %p335 = scmp.eq.s32.totalorder %s35, 0
      %p336 = por %p334, %p335
      %p337 = scmp.ne.s32.totalorder %s329, %s331
      %p338 = scmp.eq.s32.totalorder %s40, 1
      %p339 = por %p337, %p338
      %p340 = scmp.ne.s32.totalorder %s331, %s332
      %p341 = scmp.eq.s32.totalorder %s40, 0
      %p342 = por %p340, %p341
      %p343 = scmp.ne.s32.totalorder %s331, %s332
      %p344 = scmp.eq.s32.totalorder %s41, 1
      %p345 = por %p343, %p344
      %p347 = scmp.ne.s32.totalorder %s332, %s346
      %p348 = scmp.eq.s32.totalorder %s41, 0
      %p349 = por %p347, %p348
      %s351 = sadd.s32 %s350, 1
      %p354 = scmp.eq.s32.totalorder %s35, 1
      %p355 = scmp.ne.s32.totalorder %s350, %s352
      %p356 = scmp.eq.s32.totalorder %s35, 0
      %p357 = por %p355, %p356
      %p358 = scmp.ne.s32.totalorder %s350, %s352
      %p359 = scmp.eq.s32.totalorder %s40, 1
      %p360 = por %p358, %p359
      %p361 = scmp.ne.s32.totalorder %s352, %s353
      %p362 = scmp.eq.s32.totalorder %s40, 0
      %p363 = por %p361, %p362
      %p364 = scmp.ne.s32.totalorder %s352, %s353
      %p365 = scmp.eq.s32.totalorder %s41, 1
      %p366 = por %p364, %p365
      %p368 = scmp.ne.s32.totalorder %s353, %s367
      %p369 = scmp.eq.s32.totalorder %s41, 0
      %p370 = por %p368, %p369
      %s372 = sadd.s32 %s371, 1
      %p375 = scmp.eq.s32.totalorder %s35, 1
      %p376 = scmp.ne.s32.totalorder %s371, %s373
      %p377 = scmp.eq.s32.totalorder %s35, 0
      %p378 = por %p376, %p377
      %p379 = scmp.ne.s32.totalorder %s371, %s373
      %p380 = scmp.eq.s32.totalorder %s40, 1
      %p381 = por %p379, %p380
      %p382 = scmp.ne.s32.totalorder %s373, %s374
      %p383 = scmp.eq.s32.totalorder %s40, 0
      %p384 = por %p382, %p383
      %p385 = scmp.ne.s32.totalorder %s373, %s374
      %p386 = scmp.eq.s32.totalorder %s41, 1
      %p387 = por %p385, %p386
      %p389 = scmp.ne.s32.totalorder %s374, %s388
      %p390 = scmp.eq.s32.totalorder %s41, 0
      %p391 = por %p389, %p390
      %s393 = sadd.s32 %s392, 1
      %p396 = scmp.eq.s32.totalorder %s35, 1
      %p397 = scmp.ne.s32.totalorder %s392, %s394
      %p398 = scmp.eq.s32.totalorder %s35, 0
      %p399 = por %p397, %p398
      %p400 = scmp.ne.s32.totalorder %s392, %s394
      %p401 = scmp.eq.s32.totalorder %s40, 1
      %p402 = por %p400, %p401
      %p403 = scmp.ne.s32.totalorder %s394, %s395
      %p404 = scmp.eq.s32.totalorder %s40, 0
      %p405 = por %p403, %p404
      %p406 = scmp.ne.s32.totalorder %s394, %s395
      %p407 = scmp.eq.s32.totalorder %s41, 1
      %p408 = por %p406, %p407
      %p410 = scmp.ne.s32.totalorder %s395, %s409
      %p411 = scmp.eq.s32.totalorder %s41, 0
      %p412 = por %p410, %p411
      %s414 = sadd.s32 %s413, 1
      %p417 = scmp.eq.s32.totalorder %s35, 1
      %p418 = scmp.ne.s32.totalorder %s413, %s415
      %p419 = scmp.eq.s32.totalorder %s35, 0
      %p420 = por %p418, %p419
      %p421 = scmp.ne.s32.totalorder %s413, %s415
      %p422 = scmp.eq.s32.totalorder %s40, 1
      %p423 = por %p421, %p422
      %p424 = scmp.ne.s32.totalorder %s415, %s416
      %p425 = scmp.eq.s32.totalorder %s40, 0
      %p426 = por %p424, %p425
      %p427 = scmp.ne.s32.totalorder %s415, %s416
      %p428 = scmp.eq.s32.totalorder %s41, 1
      %p429 = por %p427, %p428
      %p431 = scmp.ne.s32.totalorder %s416, %s430
      %p432 = scmp.eq.s32.totalorder %s41, 0
      %p433 = por %p431, %p432
      %s435 = sadd.s32 %s434, 1
      %p438 = scmp.eq.s32.totalorder %s35, 1
      %p439 = scmp.ne.s32.totalorder %s434, %s436
      %p440 = scmp.eq.s32.totalorder %s35, 0
      %p441 = por %p439, %p440
      %p442 = scmp.ne.s32.totalorder %s434, %s436
      %p443 = scmp.eq.s32.totalorder %s40, 1
      %p444 = por %p442, %p443
      %p445 = scmp.ne.s32.totalorder %s436, %s437
      %p446 = scmp.eq.s32.totalorder %s40, 0
      %p447 = por %p445, %p446
      %p448 = scmp.ne.s32.totalorder %s436, %s437
      %p449 = scmp.eq.s32.totalorder %s41, 1
      %p450 = por %p448, %p449
      %p452 = scmp.ne.s32.totalorder %s437, %s451
      %p453 = scmp.eq.s32.totalorder %s41, 0
      %p454 = por %p452, %p453
      %s456 = sadd.s32 %s455, 1
      %p459 = scmp.eq.s32.totalorder %s35, 1
      %p460 = scmp.ne.s32.totalorder %s455, %s457
      %p461 = scmp.eq.s32.totalorder %s35, 0
      %p462 = por %p460, %p461
      %p463 = scmp.ne.s32.totalorder %s455, %s457
      %p464 = scmp.eq.s32.totalorder %s40, 1
      %p465 = por %p463, %p464
      %p466 = scmp.ne.s32.totalorder %s457, %s458
      %p467 = scmp.eq.s32.totalorder %s40, 0
      %p468 = por %p466, %p467
      %p469 = scmp.ne.s32.totalorder %s457, %s458
      %p470 = scmp.eq.s32.totalorder %s41, 1
      %p471 = por %p469, %p470
      %p473 = scmp.ne.s32.totalorder %s458, %s472
      %p474 = scmp.eq.s32.totalorder %s41, 0
      %p475 = por %p473, %p474
      %s477 = sadd.s32 %s476, 1
      %p480 = scmp.eq.s32.totalorder %s35, 1
      %p481 = scmp.ne.s32.totalorder %s476, %s478
      %p482 = scmp.eq.s32.totalorder %s35, 0
      %p483 = por %p481, %p482
      %p484 = scmp.ne.s32.totalorder %s476, %s478
      %p485 = scmp.eq.s32.totalorder %s40, 1
      %p486 = por %p484, %p485
      %p487 = scmp.ne.s32.totalorder %s478, %s479
      %p488 = scmp.eq.s32.totalorder %s40, 0
      %p489 = por %p487, %p488
      %p490 = scmp.ne.s32.totalorder %s478, %s479
      %p491 = scmp.eq.s32.totalorder %s41, 1
      %p492 = por %p490, %p491
      %p494 = scmp.ne.s32.totalorder %s479, %s493
      %p495 = scmp.eq.s32.totalorder %s41, 0
      %p496 = por %p494, %p495
      %s497 = ssub.s32 %s42, %s54
      %s498 = ssub.s32 %s43, %s50
      %s499 = sor.u32 %s497, %s498
      %p500 = scmp.eq.s32.totalorder %s499, 0
      %s502 = sadd.s32 %s501, 1
      %s503 = scalar_select %p500, %s501, %s502
      %p506 = pneg %p500
      %p507 = scmp.eq.s32.totalorder %s35, 1
      %p508 = por %p506, %p507
      %p509 = scmp.ne.s32.totalorder %s501, %s504
      %p510 = scmp.eq.s32.totalorder %s35, 0
      %p511 = por %p509, %p510
      %p512 = scmp.ne.s32.totalorder %s501, %s504
      %p513 = scmp.eq.s32.totalorder %s40, 1
      %p514 = por %p512, %p513
      %p515 = scmp.ne.s32.totalorder %s504, %s505
      %p516 = scmp.eq.s32.totalorder %s40, 0
      %p517 = por %p515, %p516
      %p518 = scmp.ne.s32.totalorder %s504, %s505
      %p519 = scmp.eq.s32.totalorder %s41, 1
      %p520 = por %p518, %p519
      %p522 = scmp.ne.s32.totalorder %s505, %s521
      %p523 = scmp.eq.s32.totalorder %s41, 0
      %p524 = por %p522, %p523
      %p525 = scmp.le.s32.totalorder 1, %s35
      %p526 = scmp.lt.s32.totalorder %s35, 3
      %p527 = pnand %p525, %p526
      %p528 = pneg %p527
      // Predicated region
      $region9: #{tpu_custom_call.1} parent=5 // pred_check
        _
      $region10: #{tpu_custom_call.1} parent=5 // pred_check_branch
        %530 = sbr.rel (%p527) target = $region12
      $region11: #{tpu_custom_call.1} parent=5 // pred_region
        %s531 = ssub.s32 %s35, 1
        // Predicated region
        $region13: #{tpu_custom_call.1} parent=11 // pred_check
          %p532 = pneg %p174
        $region14: #{tpu_custom_call.1} parent=11 // pred_check_branch
          %534 = sbr.rel (%p532) target = $region16
        $region15: #{tpu_custom_call.1} parent=11 // pred_region
          _
        $region16: #{tpu_custom_call.1} parent=11 // pred_fallthru
          _
        // Predicated region
        $region17: #{tpu_custom_call.1} parent=11 // pred_check
          %p535 = pneg %p195
        $region18: #{tpu_custom_call.1} parent=11 // pred_check_branch
          %537 = sbr.rel (%p535) target = $region20
        $region19: #{tpu_custom_call.1} parent=11 // pred_region
          _
        $region20: #{tpu_custom_call.1} parent=11 // pred_fallthru
          _
        // Predicated region
        $region21: #{tpu_custom_call.1} parent=11 // pred_check
          %p538 = pneg %p216
        $region22: #{tpu_custom_call.1} parent=11 // pred_check_branch
          %540 = sbr.rel (%p538) target = $region24
        $region23: #{tpu_custom_call.1} parent=11 // pred_region
          _
        $region24: #{tpu_custom_call.1} parent=11 // pred_fallthru
          _
        // Predicated region
        $region25: #{tpu_custom_call.1} parent=11 // pred_check
          %p541 = pneg %p237
        $region26: #{tpu_custom_call.1} parent=11 // pred_check_branch
          %543 = sbr.rel (%p541) target = $region28
        $region27: #{tpu_custom_call.1} parent=11 // pred_region
          _
        $region28: #{tpu_custom_call.1} parent=11 // pred_fallthru
          _
        // Predicated region
        $region29: #{tpu_custom_call.1} parent=11 // pred_check
          %p544 = pneg %p258
        $region30: #{tpu_custom_call.1} parent=11 // pred_check_branch
          %546 = sbr.rel (%p544) target = $region32
        $region31: #{tpu_custom_call.1} parent=11 // pred_region
          _
        $region32: #{tpu_custom_call.1} parent=11 // pred_fallthru
          _
        // Predicated region
        $region33: #{tpu_custom_call.1} parent=11 // pred_check
          %p547 = pneg %p279
        $region34: #{tpu_custom_call.1} parent=11 // pred_check_branch
          %549 = sbr.rel (%p547) target = $region36
        $region35: #{tpu_custom_call.1} parent=11 // pred_region
          _
        $region36: #{tpu_custom_call.1} parent=11 // pred_fallthru
          _
        // Predicated region
        $region37: #{tpu_custom_call.1} parent=11 // pred_check
          %p550 = pneg %p300
        $region38: #{tpu_custom_call.1} parent=11 // pred_check_branch
          %552 = sbr.rel (%p550) target = $region40
        $region39: #{tpu_custom_call.1} parent=11 // pred_region
          _
        $region40: #{tpu_custom_call.1} parent=11 // pred_fallthru
          _
        // Predicated region
        $region41: #{tpu_custom_call.1} parent=11 // pred_check
          %p553 = pneg %p321
        $region42: #{tpu_custom_call.1} parent=11 // pred_check_branch
          %555 = sbr.rel (%p553) target = $region44
        $region43: #{tpu_custom_call.1} parent=11 // pred_region
          _
        $region44: #{tpu_custom_call.1} parent=11 // pred_fallthru
          _
        // Predicated region
        $region45: #{tpu_custom_call.1} parent=11 // pred_check
          %p556 = pneg %p342
        $region46: #{tpu_custom_call.1} parent=11 // pred_check_branch
          %558 = sbr.rel (%p556) target = $region48
        $region47: #{tpu_custom_call.1} parent=11 // pred_region
          _
        $region48: #{tpu_custom_call.1} parent=11 // pred_fallthru
          _
        // Predicated region
        $region49: #{tpu_custom_call.1} parent=11 // pred_check
          %p559 = pneg %p363
        $region50: #{tpu_custom_call.1} parent=11 // pred_check_branch
          %561 = sbr.rel (%p559) target = $region52
        $region51: #{tpu_custom_call.1} parent=11 // pred_region
          _
        $region52: #{tpu_custom_call.1} parent=11 // pred_fallthru
          _
        // Predicated region
        $region53: #{tpu_custom_call.1} parent=11 // pred_check
          %p562 = pneg %p384
        $region54: #{tpu_custom_call.1} parent=11 // pred_check_branch
          %564 = sbr.rel (%p562) target = $region56
        $region55: #{tpu_custom_call.1} parent=11 // pred_region
          _
        $region56: #{tpu_custom_call.1} parent=11 // pred_fallthru
          _
        // Predicated region
        $region57: #{tpu_custom_call.1} parent=11 // pred_check
          %p565 = pneg %p405
        $region58: #{tpu_custom_call.1} parent=11 // pred_check_branch
          %567 = sbr.rel (%p565) target = $region60
        $region59: #{tpu_custom_call.1} parent=11 // pred_region
          _
        $region60: #{tpu_custom_call.1} parent=11 // pred_fallthru
          _
        // Predicated region
        $region61: #{tpu_custom_call.1} parent=11 // pred_check
          %p568 = pneg %p426
        $region62: #{tpu_custom_call.1} parent=11 // pred_check_branch
          %570 = sbr.rel (%p568) target = $region64
        $region63: #{tpu_custom_call.1} parent=11 // pred_region
          _
        $region64: #{tpu_custom_call.1} parent=11 // pred_fallthru
          _
        // Predicated region
        $region65: #{tpu_custom_call.1} parent=11 // pred_check
          %p571 = pneg %p447
        $region66: #{tpu_custom_call.1} parent=11 // pred_check_branch
          %573 = sbr.rel (%p571) target = $region68
        $region67: #{tpu_custom_call.1} parent=11 // pred_region
          _
        $region68: #{tpu_custom_call.1} parent=11 // pred_fallthru
          _
        // Predicated region
        $region69: #{tpu_custom_call.1} parent=11 // pred_check
          %p574 = pneg %p468
        $region70: #{tpu_custom_call.1} parent=11 // pred_check_branch
          %576 = sbr.rel (%p574) target = $region72
        $region71: #{tpu_custom_call.1} parent=11 // pred_region
          _
        $region72: #{tpu_custom_call.1} parent=11 // pred_fallthru
          _
        // Predicated region
        $region73: #{tpu_custom_call.1} parent=11 // pred_check
          %p577 = pneg %p489
        $region74: #{tpu_custom_call.1} parent=11 // pred_check_branch
          %579 = sbr.rel (%p577) target = $region76
        $region75: #{tpu_custom_call.1} parent=11 // pred_region
          _
        $region76: #{tpu_custom_call.1} parent=11 // pred_fallthru
          _
      $region12: #{tpu_custom_call.1} parent=5 // pred_fallthru
        _
      %p580 = scmp.lt.s32.totalorder %s35, 2
      // Predicated region
      $region77: #{tpu_custom_call.1} parent=5 // pred_check
        %p581 = pneg %p580
      $region78: #{tpu_custom_call.1} parent=5 // pred_check_branch
        %583 = sbr.rel (%p581) target = $region80
      $region79: #{tpu_custom_call.1} parent=5 // pred_region
        // Predicated region
        $region81: #{tpu_custom_call.1} parent=79 // pred_check
          %p584 = pneg %p69
        $region82: #{tpu_custom_call.1} parent=79 // pred_check_branch
          %586 = sbr.rel (%p584) target = $region84
        $region83: #{tpu_custom_call.1} parent=79 // pred_region
          %p587 = scmp.lt.s32.totalorder %s42, 1
          %s588 = scalar_select %p587, %s42, 1
          %p589 = scmp.lt.s32.totalorder %s43, 0
          %s590 = scalar_select %p589, %s43, 0
          %s591 = sadd.s32 %s590, %s588
          %s592 = smul.addr %s591, 8
          %s593 = scalar_lea.vmem %s0, %s592
        $region84: #{tpu_custom_call.1} parent=79 // pred_fallthru
          _
        // Predicated region
        $region85: #{tpu_custom_call.1} parent=79 // pred_check
          %p594 = pneg %p95
        $region86: #{tpu_custom_call.1} parent=79 // pred_check_branch
          %596 = sbr.rel (%p594) target = $region88
        $region87: #{tpu_custom_call.1} parent=79 // pred_region
          %s597 = sand.u32 %s85, 1
          %s598 = scalar_lea.sflag [#allocation6], %s597
          %s599 = sand.u32 %s85, 1
          %s600 = smul.addr %s599, 4
          %s601 = scalar_lea.vmem [#allocation5], %s600
          %s603 = ssub.s32 64, 64
          %604 = vsyncadd %s598, %s603
          %s605 = smul.addr %s42, 64
          %s606 = scalar_lea.hbm %s1, %s605
          %s608 = sshll.u32 %s601, 4
          %s609 = int_to_ptr.vmem [resolvable:$true] %s608
          %611 = dma.hbm_to_vmem [thread:$0]  %s606, 64, %s609, %s598
        $region88: #{tpu_custom_call.1} parent=79 // pred_fallthru
          _
        // Predicated region
        $region89: #{tpu_custom_call.1} parent=79 // pred_check
          %p612 = pneg %p121
        $region90: #{tpu_custom_call.1} parent=79 // pred_check_branch
          %614 = sbr.rel (%p612) target = $region92
        $region91: #{tpu_custom_call.1} parent=79 // pred_region
          %s615 = sand.u32 %s111, 1
          %s616 = scalar_lea.sflag [#allocation9], %s615
          %s617 = sand.u32 %s111, 1
          %s618 = smul.addr %s617, 4
          %s619 = scalar_lea.vmem [#allocation8], %s618
          %s621 = ssub.s32 64, 64
          %622 = vsyncadd %s616, %s621
          %s623 = smul.addr %s42, 64
          %s624 = scalar_lea.hbm %s2, %s623
          %s626 = sshll.u32 %s619, 4
          %s627 = int_to_ptr.vmem [resolvable:$true] %s626
          %629 = dma.hbm_to_vmem [thread:$0]  %s624, 64, %s627, %s616
        $region92: #{tpu_custom_call.1} parent=79 // pred_fallthru
          _
        // Predicated region
        $region93: #{tpu_custom_call.1} parent=79 // pred_check
          %p630 = pneg %p147
        $region94: #{tpu_custom_call.1} parent=79 // pred_check_branch
          %632 = sbr.rel (%p630) target = $region96
        $region95: #{tpu_custom_call.1} parent=79 // pred_region
          %p633 = scmp.lt.s32.totalorder %s42, 1
          %s634 = scalar_select %p633, %s42, 1
          %s635 = scalar_lea.vmem %s3, %s634
        $region96: #{tpu_custom_call.1} parent=79 // pred_fallthru
          _
      $region80: #{tpu_custom_call.1} parent=5 // pred_fallthru
        _
      %p636 = scmp.le.s32.totalorder 1, %s35
      %p637 = scmp.lt.s32.totalorder %s35, 3
      %p638 = pnand %p636, %p637
      %p639 = pneg %p638
      // Predicated region
      $region97: #{tpu_custom_call.1} parent=5 // pred_check
        _
      $region98: #{tpu_custom_call.1} parent=5 // pred_check_branch
        %641 = sbr.rel (%p638) target = $region100
      $region99: #{tpu_custom_call.1} parent=5 // pred_region
        %s642 = ssub.s32 %s35, 1
        %s643 = sand.u32 %s88, 1
        %s644 = scalar_lea.sflag [#allocation6], %s643
        %s645 = sand.u32 %s88, 1
        %s646 = smul.addr %s645, 4
        %s647 = scalar_lea.vmem [#allocation5], %s646
        // Predicated region
        $region101: #{tpu_custom_call.1} parent=99 // pred_check
          %p648 = pneg %p101
        $region102: #{tpu_custom_call.1} parent=99 // pred_check_branch
          %650 = sbr.rel (%p648) target = $region104
        $region103: #{tpu_custom_call.1} parent=99 // pred_region
          %651 = dma.done %s644, 64
        $region104: #{tpu_custom_call.1} parent=99 // pred_fallthru
          _
        %s652 = sand.u32 %s114, 1
        %s653 = scalar_lea.sflag [#allocation9], %s652
        %s654 = sand.u32 %s114, 1
        %s655 = smul.addr %s654, 4
        %s656 = scalar_lea.vmem [#allocation8], %s655
        // Predicated region
        $region105: #{tpu_custom_call.1} parent=99 // pred_check
          %p657 = pneg %p127
        $region106: #{tpu_custom_call.1} parent=99 // pred_check_branch
          %659 = sbr.rel (%p657) target = $region108
        $region107: #{tpu_custom_call.1} parent=99 // pred_region
          %660 = dma.done %s653, 64
        $region108: #{tpu_custom_call.1} parent=99 // pred_fallthru
          _
        %p661 = scmp.lt.s32.totalorder %s44, 1
        %s662 = scalar_select %p661, %s44, 1
        %p663 = scmp.lt.s32.totalorder %s45, 0
        %s664 = scalar_select %p663, %s45, 0
        %s665 = sadd.s32 %s664, %s662
        %s666 = smul.addr %s665, 8
        %s667 = scalar_lea.vmem %s0, %s666
        %p668 = pneg %p75
        %p669 = pneg %p72
        %s670 = sand.u32 %s88, 1
        %s671 = scalar_lea.sflag [#allocation6], %s670
        %s672 = sand.u32 %s88, 1
        %s673 = smul.addr %s672, 4
        %s674 = scalar_lea.vmem [#allocation5], %s673
        %p675 = pneg %p101
        %p676 = pneg %p98
        %s677 = sand.u32 %s114, 1
        %s678 = scalar_lea.sflag [#allocation9], %s677
        %s679 = sand.u32 %s114, 1
        %s680 = smul.addr %s679, 4
        %s681 = scalar_lea.vmem [#allocation8], %s680
        %p682 = pneg %p127
        %p683 = pneg %p124
        %p684 = scmp.lt.s32.totalorder %s44, 1
        %s685 = scalar_select %p684, %s44, 1
        %s686 = scalar_lea.vmem %s3, %s685
        %p687 = pneg %p153
        %p688 = pneg %p150
        %p689 = pneg %p174
        %p690 = pneg %p171
        %p691 = pneg %p195
        %p692 = pneg %p192
        %p693 = pneg %p216
        %p694 = pneg %p213
        %p695 = pneg %p237
        %p696 = pneg %p234
        %p697 = pneg %p258
        %p698 = pneg %p255
        %p699 = pneg %p279
        %p700 = pneg %p276
        %p701 = pneg %p300
        %p702 = pneg %p297
        %p703 = pneg %p321
        %p704 = pneg %p318
        %p705 = pneg %p342
        %p706 = pneg %p339
        %p707 = pneg %p363
        %p708 = pneg %p360
        %p709 = pneg %p384
        %p710 = pneg %p381
        %p711 = pneg %p405
        %p712 = pneg %p402
        %p713 = pneg %p426
        %p714 = pneg %p423
        %p715 = pneg %p447
        %p716 = pneg %p444
        %p717 = pneg %p468
        %p718 = pneg %p465
        %p719 = pneg %p489
        %p720 = pneg %p486
        %p721 = pneg %p517
        %p722 = pneg %p514
        %s723 = sand.u32 %s504, 1
        %s724 = scalar_lea.sflag [#allocation7], %s723
        %s725 = sand.u32 %s504, 1
        %s726 = smul.addr %s725, 8
        %s727 = scalar_lea.vmem [#allocation10], %s726
        %p728 = scmp.lt.s32.totalorder %s44, 1
        %s729 = scalar_select %p728, %s44, 1
        %p730 = scmp.lt.s32.totalorder %s45, 0
        %s731 = scalar_select %p730, %s45, 0
        %s732 = sadd.s32 %s731, %s729
        %s733 = smul.addr %s732, 8
        %s734 = scalar_lea.vmem %s0, %s733
        %p735 = scmp.lt.s32.totalorder %s44, 1
        %s736 = scalar_select %p735, %s44, 1
        %s737 = scalar_lea.vmem %s3, %s736
        %p739 = scmp.eq.s32.totalorder %s45, 0
        // Predicated region
        $region109: #{tpu_custom_call.1} parent=99 // pred_check
          %p740 = pneg %p739
        $region110: #{tpu_custom_call.1} parent=99 // pred_check_branch
          %742 = sbr.rel (%p740) target = $region112
        $region111: #{tpu_custom_call.1} parent=99 // pred_region
          %v743 = vld [vmem:[%s647] sm:$0xf]
          %v744 = vld [vmem:[%s6] sm:$0xf]
          %v745 = vld [vmem:[%s6 + $0x4] sm:$0xf]
          %v746 = vld [vmem:[%s6 + $0x8] sm:$0xf]
          %v747 = vld [vmem:[%s6 + $0xc] sm:$0xf]
          %v748 = vld [vmem:[%s7] sm:$0x1]
          %v750 = vlaneseq
          %v751 = vshrl.u32 %v750, 7
          %v752 = vsub.s32 0, %v751
          %v753 = vrot.slane %v748, %v752
          %v759 = vunpack.c.l.b16 %v744
          %v760 = vunpack.c.l.b16 %v745
          %v761 = vunpack.c.l.b16 %v746
          %v762 = vunpack.c.l.b16 %v747
          %v763 = vpack.c.b16 %v760, %v759
          %v764 = vpack.c.b16 %v762, %v761
          %vm767 = vcmask 261120
          %v769 = vsel %vm767, %v743, 0
          %771 = vmatprep.subr.bf16.mxu0 0
          %772 = vmatpush1.bf16.msra.mxu0 %v763
          %773 = vmatprep.subr.bf16.mxu0 0
          %774 = vmatpush1.bf16.msra.mxu0 %v764
          %775 = vmatprep.subr.bf16.mxu0 0
          %776 = vmatpush1.bf16.msra.mxu0 0
          %777 = vmatprep.subr.bf16.mxu0 0
          %778 = vmatpush1.bf16.msra.mxu0 0
          %779 = vmatprep.subr.bf16.mxu0 0
          %780 = vmatpush1.bf16.msra.mxu0 0
          %781 = vmatprep.subr.bf16.mxu0 0
          %782 = vmatpush1.bf16.msra.mxu0 0
          %783 = vmatprep.subr.bf16.mxu0 0
          %784 = vmatpush1.bf16.msra.mxu0 0
          %785 = vmatprep.subr.bf16.mxu0 0
          %786 = vmatpush1.bf16.msra.mxu0 0
          %787 = vmatprep.subr.bf16.mxu0 0
          %788 = vmatpush1.bf16.msra.mxu0 0
          %789 = vmatprep.subr.bf16.mxu0 0
          %790 = vmatpush1.bf16.msra.mxu0 0
          %791 = vmatprep.subr.bf16.mxu0 0
          %792 = vmatpush1.bf16.msra.mxu0 0
          %793 = vmatprep.subr.bf16.mxu0 0
          %794 = vmatpush1.bf16.msra.mxu0 0
          %795 = vmatprep.subr.bf16.mxu0 0
          %796 = vmatpush1.bf16.msra.mxu0 0
          %797 = vmatprep.subr.bf16.mxu0 0
          %798 = vmatpush1.bf16.msra.mxu0 0
          %799 = vmatprep.subr.bf16.mxu0 0
          %800 = vmatpush1.bf16.msra.mxu0 0
          %801 = vmatprep.subr.bf16.mxu0 0
          %802 = vmatpush1.bf16.msra.mxu0 0
          %803 = vmatprep.mubr.bf16.mxu0 0
          %804 = vmatmul.mubr.bf16.gmra.mrb[0].mxu0 %v769
          %v805 = vpop.f32.mrb[0].mxu0
          %v806 = vadd.f32 %v753, %v805
          %v807 = vpop.f32.mrb[0].mxu0
          %v808 = vpop.f32.mrb[0].mxu0
          %v809 = vpop.f32.mrb[0].mxu0
          %810 = vdwg.mxu0
          %v811 = vpack.c.bf16 %v806, %v806
          %vm812 = vcmask 519168
          %813 = vst.msk [vmem:[#allocation2] sm:$0xf] %vm812, %v811
          %v814 = vld [vmem:[%s656] sm:$0xf]
          %v815 = vld [vmem:[%s8] sm:$0xf]
          %v816 = vld [vmem:[%s8 + $0x4] sm:$0xf]
          %v817 = vld [vmem:[%s8 + $0x8] sm:$0xf]
          %v818 = vld [vmem:[%s8 + $0xc] sm:$0xf]
          %v819 = vld [vmem:[%s9] sm:$0x1]
          %v821 = vlaneseq
          %v822 = vshrl.u32 %v821, 7
          %v823 = vsub.s32 0, %v822
          %v824 = vrot.slane %v819, %v823
          %v830 = vunpack.c.l.b16 %v815
          %v831 = vunpack.c.l.b16 %v816
          %v832 = vunpack.c.l.b16 %v817
          %v833 = vunpack.c.l.b16 %v818
          %v834 = vpack.c.b16 %v831, %v830
          %v835 = vpack.c.b16 %v833, %v832
          %v839 = vsel %vm767, %v814, 0
          %841 = vmatprep.subr.bf16.mxu0 0
          %842 = vmatpush1.bf16.msra.mxu0 %v834
          %843 = vmatprep.subr.bf16.mxu0 0
          %844 = vmatpush1.bf16.msra.mxu0 %v835
          %845 = vmatprep.subr.bf16.mxu0 0
          %846 = vmatpush1.bf16.msra.mxu0 0
          %847 = vmatprep.subr.bf16.mxu0 0
          %848 = vmatpush1.bf16.msra.mxu0 0
          %849 = vmatprep.subr.bf16.mxu0 0
          %850 = vmatpush1.bf16.msra.mxu0 0
          %851 = vmatprep.subr.bf16.mxu0 0
          %852 = vmatpush1.bf16.msra.mxu0 0
          %853 = vmatprep.subr.bf16.mxu0 0
          %854 = vmatpush1.bf16.msra.mxu0 0
          %855 = vmatprep.subr.bf16.mxu0 0
          %856 = vmatpush1.bf16.msra.mxu0 0
          %857 = vmatprep.subr.bf16.mxu0 0
          %858 = vmatpush1.bf16.msra.mxu0 0
          %859 = vmatprep.subr.bf16.mxu0 0
          %860 = vmatpush1.bf16.msra.mxu0 0
          %861 = vmatprep.subr.bf16.mxu0 0
          %862 = vmatpush1.bf16.msra.mxu0 0
          %863 = vmatprep.subr.bf16.mxu0 0
          %864 = vmatpush1.bf16.msra.mxu0 0
          %865 = vmatprep.subr.bf16.mxu0 0
          %866 = vmatpush1.bf16.msra.mxu0 0
          %867 = vmatprep.subr.bf16.mxu0 0
          %868 = vmatpush1.bf16.msra.mxu0 0
          %869 = vmatprep.subr.bf16.mxu0 0
          %870 = vmatpush1.bf16.msra.mxu0 0
          %871 = vmatprep.subr.bf16.mxu0 0
          %872 = vmatpush1.bf16.msra.mxu0 0
          %873 = vmatprep.mubr.bf16.mxu0 0
          %874 = vmatmul.mubr.bf16.gmra.mrb[0].mxu0 %v839
          %v875 = vpop.f32.mrb[0].mxu0
          %v876 = vadd.f32 %v824, %v875
          %v877 = vpop.f32.mrb[0].mxu0
          %v878 = vpop.f32.mrb[0].mxu0
          %v879 = vpop.f32.mrb[0].mxu0
          %880 = vdwg.mxu0
          %v881 = vpack.c.bf16 %v876, %v876
          %882 = vst.msk [vmem:[#allocation3] sm:$0xf] %vm812, %v881
        $region112: #{tpu_custom_call.1} parent=99 // pred_fallthru
          _
        %v883 = vld [vmem:[%s734] sm:$0xff]
        %v884 = vld [vmem:[%s737] sm:$0x1]
        %v885 = vpack.c.bf16 %v883, %v883
        %v886 = vld [vmem:[%s4] sm:$0xf]
        %v887 = vld [vmem:[%s4 + $0x4] sm:$0xf]
        %v888 = vld [vmem:[%s4 + $0x8] sm:$0xf]
        %v889 = vld [vmem:[%s4 + $0xc] sm:$0xf]
        %v890 = vld [vmem:[%s5] sm:$0x1]
        %v892 = vlaneseq
        %v893 = vshrl.u32 %v892, 7
        %v894 = vsub.s32 0, %v893
        %v895 = vrot.slane %v890, %v894
        %v901 = vunpack.c.l.b16 %v886
        %v902 = vunpack.c.l.b16 %v887
        %v903 = vunpack.c.l.b16 %v888
        %v904 = vunpack.c.l.b16 %v889
        %v905 = vpack.c.b16 %v902, %v901
        %v906 = vpack.c.b16 %v904, %v903
        %vm909 = vcmask 261120
        %v911 = vsel %vm909, %v885, 0
        %913 = vmatprep.subr.bf16.mxu0 0
        %914 = vmatpush1.bf16.msra.mxu0 %v905
        %915 = vmatprep.subr.bf16.mxu0 0
        %916 = vmatpush1.bf16.msra.mxu0 %v906
        %917 = vmatprep.subr.bf16.mxu0 0
        %918 = vmatpush1.bf16.msra.mxu0 0
        %919 = vmatprep.subr.bf16.mxu0 0
        %920 = vmatpush1.bf16.msra.mxu0 0
        %921 = vmatprep.subr.bf16.mxu0 0
        %922 = vmatpush1.bf16.msra.mxu0 0
        %923 = vmatprep.subr.bf16.mxu0 0
        %924 = vmatpush1.bf16.msra.mxu0 0
        %925 = vmatprep.subr.bf16.mxu0 0
        %926 = vmatpush1.bf16.msra.mxu0 0
        %927 = vmatprep.subr.bf16.mxu0 0
        %928 = vmatpush1.bf16.msra.mxu0 0
        %929 = vmatprep.subr.bf16.mxu0 0
        %930 = vmatpush1.bf16.msra.mxu0 0
        %931 = vmatprep.subr.bf16.mxu0 0
        %932 = vmatpush1.bf16.msra.mxu0 0
        %933 = vmatprep.subr.bf16.mxu0 0
        %934 = vmatpush1.bf16.msra.mxu0 0
        %935 = vmatprep.subr.bf16.mxu0 0
        %936 = vmatpush1.bf16.msra.mxu0 0
        %937 = vmatprep.subr.bf16.mxu0 0
        %938 = vmatpush1.bf16.msra.mxu0 0
        %939 = vmatprep.subr.bf16.mxu0 0
        %940 = vmatpush1.bf16.msra.mxu0 0
        %941 = vmatprep.subr.bf16.mxu0 0
        %942 = vmatpush1.bf16.msra.mxu0 0
        %943 = vmatprep.subr.bf16.mxu0 0
        %944 = vmatpush1.bf16.msra.mxu0 0
        %945 = vmatprep.mubr.bf16.mxu0 0
        %946 = vmatmul.mubr.bf16.gmra.mrb[0].mxu0 %v911
        %v947 = vpop.f32.mrb[0].mxu0
        %v948 = vadd.f32 %v895, %v947
        %v949 = vpop.f32.mrb[0].mxu0
        %v950 = vpop.f32.mrb[0].mxu0
        %v951 = vpop.f32.mrb[0].mxu0
        %952 = vdwg.mxu0
        %v953 = vpack.c.bf16 %v948, %v948
        %v954 = vld [vmem:[#allocation2] sm:$0xf]
        %v955 = vld [vmem:[#allocation3] sm:$0xf]
        %v957 = vlaneseq
        %v958 = vshrl.u32 %v957, 7
        %v959 = vsub.s32 0, %v958
        %v960 = vrot.slane %v884, %v959
        %vm962 = vcmask 64512
        %v964 = vsel %vm962, %v953, 0
        %v967 = vsel %vm962, %v954, 0
        %969 = vmatprep.subr.bf16.mxu0 0
        %970 = vmatpush1.bf16.xpose.msra.mxu0 %v967
        %971 = vmatprep.subr.bf16.mxu0 0
        %972 = vmatpush1.bf16.xpose.msra.mxu0 0
        %973 = vmatprep.subr.bf16.mxu0 0
        %974 = vmatpush1.bf16.xpose.msra.mxu0 0
        %975 = vmatprep.subr.bf16.mxu0 0
        %976 = vmatpush1.bf16.xpose.msra.mxu0 0
        %977 = vmatprep.subr.bf16.mxu0 0
        %978 = vmatpush1.bf16.xpose.msra.mxu0 0
        %979 = vmatprep.subr.bf16.mxu0 0
        %980 = vmatpush1.bf16.xpose.msra.mxu0 0
        %981 = vmatprep.subr.bf16.mxu0 0
        %982 = vmatpush1.bf16.xpose.msra.mxu0 0
        %983 = vmatprep.subr.bf16.mxu0 0
        %984 = vmatpush1.bf16.xpose.msra.mxu0 0
        %985 = vmatprep.subr.bf16.mxu0 0
        %986 = vmatpush1.bf16.xpose.msra.mxu0 0
        %987 = vmatprep.subr.bf16.mxu0 0
        %988 = vmatpush1.bf16.xpose.msra.mxu0 0
        %989 = vmatprep.subr.bf16.mxu0 0
        %990 = vmatpush1.bf16.xpose.msra.mxu0 0
        %991 = vmatprep.subr.bf16.mxu0 0
        %992 = vmatpush1.bf16.xpose.msra.mxu0 0
        %993 = vmatprep.subr.bf16.mxu0 0
        %994 = vmatpush1.bf16.xpose.msra.mxu0 0
        %995 = vmatprep.subr.bf16.mxu0 0
        %996 = vmatpush1.bf16.xpose.msra.mxu0 0
        %997 = vmatprep.subr.bf16.mxu0 0
        %998 = vmatpush1.bf16.xpose.msra.mxu0 0
        %999 = vmatprep.subr.bf16.mxu0 0
        %1000 = vmatpush1.bf16.xpose.msra.mxu0 0
        %1001 = vmatprep.mubr.bf16.mxu0 0
        %1002 = vmatmul.mubr.bf16.gmra.mrb[0].mxu0 %v964
        %v1003 = vpop.f32.mrb[0].mxu0
        %v1004 = vadd.f32 %v960, %v1003
        %v1005 = vpop.f32.mrb[0].mxu0
        %v1006 = vpop.f32.mrb[0].mxu0
        %v1007 = vpop.f32.mrb[0].mxu0
        %1008 = vdwg.mxu0
        %v1009 = vsel %vm962, %v1004, -inf
        %1010 = vmax.xlane.f32.xlu0 %v1009
        %v1011 = vpop.xlane.xlu0 %1010
        %v1012 = vsub.f32 %v1004, %v1011
        %v1013 = vmul.f32 %v1012, 1.442695
        %v1014 = vpow.pop %v1013
        %v1015 = vsel %vm962, %v1014, 0.0
        %1016 = vadd.xlane.f32.xlu0 %v1015
        %v1017 = vpop.xlane.xlu0 %1016
        %v1018 = vrcp.pop %v1017
        %v1019 = vmul.f32 %v1014, %v1018
        %v1020 = vpack.c.bf16 %v1019, %v1019
        %v1022 = vunpack.c.l.b16 %v954
        %v1023 = vpack.c.b16 %v1022, %v1022
        %1024 = vrot.lane.b32.xlu0 %v1023, 96
        %v1025 = vpop.permute.xlu0 %1024
        %v1027 = vsel %vm962, %v1020, 0
        %vm1029 = vcmask 1043456
        %v1031 = vsel %vm1029, %v1025, 0
        %1033 = vmatprep.subr.bf16.mxu0 0
        %1034 = vmatpush1.bf16.msra.mxu0 %v1031
        %1035 = vmatprep.subr.bf16.mxu0 0
        %1036 = vmatpush1.bf16.msra.mxu0 0
        %1037 = vmatprep.subr.bf16.mxu0 0
        %1038 = vmatpush1.bf16.msra.mxu0 0
        %1039 = vmatprep.subr.bf16.mxu0 0
        %1040 = vmatpush1.bf16.msra.mxu0 0
        %1041 = vmatprep.subr.bf16.mxu0 0
        %1042 = vmatpush1.bf16.msra.mxu0 0
        %1043 = vmatprep.subr.bf16.mxu0 0
        %1044 = vmatpush1.bf16.msra.mxu0 0
        %1045 = vmatprep.subr.bf16.mxu0 0
        %1046 = vmatpush1.bf16.msra.mxu0 0
        %1047 = vmatprep.subr.bf16.mxu0 0
        %1048 = vmatpush1.bf16.msra.mxu0 0
        %1049 = vmatprep.subr.bf16.mxu0 0
        %1050 = vmatpush1.bf16.msra.mxu0 0
        %1051 = vmatprep.subr.bf16.mxu0 0
        %1052 = vmatpush1.bf16.msra.mxu0 0
        %1053 = vmatprep.subr.bf16.mxu0 0
        %1054 = vmatpush1.bf16.msra.mxu0 0
        %1055 = vmatprep.subr.bf16.mxu0 0
        %1056 = vmatpush1.bf16.msra.mxu0 0
        %1057 = vmatprep.subr.bf16.mxu0 0
        %1058 = vmatpush1.bf16.msra.mxu0 0
        %1059 = vmatprep.subr.bf16.mxu0 0
        %1060 = vmatpush1.bf16.msra.mxu0 0
        %1061 = vmatprep.subr.bf16.mxu0 0
        %1062 = vmatpush1.bf16.msra.mxu0 0
        %1063 = vmatprep.subr.bf16.mxu0 0
        %1064 = vmatpush1.bf16.msra.mxu0 0
        %1065 = vmatprep.mubr.bf16.mxu0 0
        %1066 = vmatmul.mubr.bf16.gmra.mrb[0].mxu0 %v1027
        %v1067 = vpop.f32.mrb[0].mxu0
        %v1068 = vadd.f32 0.0, %v1067
        %v1069 = vpop.f32.mrb[0].mxu0
        %v1070 = vpop.f32.mrb[0].mxu0
        %v1071 = vpop.f32.mrb[0].mxu0
        %1072 = vdwg.mxu0
        %v1073 = vpack.c.bf16 %v1068, %v1068
        %vm1074 = vcmask 60416
        %1075 = vst.msk [vmem:[#allocation4] sm:$0xf] %vm1074, %v1073
        %1077 = vrot.lane.b32.xlu0 %v953, 96
        %v1078 = vpop.permute.xlu0 %1077
        %v1080 = vsel %vm962, %v1078, 0
        %v1083 = vsel %vm962, %v955, 0
        %1085 = vmatprep.subr.bf16.mxu0 0
        %1086 = vmatpush1.bf16.xpose.msra.mxu0 %v1083
        %1087 = vmatprep.subr.bf16.mxu0 0
        %1088 = vmatpush1.bf16.xpose.msra.mxu0 0
        %1089 = vmatprep.subr.bf16.mxu0 0
        %1090 = vmatpush1.bf16.xpose.msra.mxu0 0
        %1091 = vmatprep.subr.bf16.mxu0 0
        %1092 = vmatpush1.bf16.xpose.msra.mxu0 0
        %1093 = vmatprep.subr.bf16.mxu0 0
        %1094 = vmatpush1.bf16.xpose.msra.mxu0 0
        %1095 = vmatprep.subr.bf16.mxu0 0
        %1096 = vmatpush1.bf16.xpose.msra.mxu0 0
        %1097 = vmatprep.subr.bf16.mxu0 0
        %1098 = vmatpush1.bf16.xpose.msra.mxu0 0
        %1099 = vmatprep.subr.bf16.mxu0 0
        %1100 = vmatpush1.bf16.xpose.msra.mxu0 0
        %1101 = vmatprep.subr.bf16.mxu0 0
        %1102 = vmatpush1.bf16.xpose.msra.mxu0 0
        %1103 = vmatprep.subr.bf16.mxu0 0
        %1104 = vmatpush1.bf16.xpose.msra.mxu0 0
        %1105 = vmatprep.subr.bf16.mxu0 0
        %1106 = vmatpush1.bf16.xpose.msra.mxu0 0
        %1107 = vmatprep.subr.bf16.mxu0 0
        %1108 = vmatpush1.bf16.xpose.msra.mxu0 0
        %1109 = vmatprep.subr.bf16.mxu0 0
        %1110 = vmatpush1.bf16.xpose.msra.mxu0 0
        %1111 = vmatprep.subr.bf16.mxu0 0
        %1112 = vmatpush1.bf16.xpose.msra.mxu0 0
        %1113 = vmatprep.subr.bf16.mxu0 0
        %1114 = vmatpush1.bf16.xpose.msra.mxu0 0
        %1115 = vmatprep.subr.bf16.mxu0 0
        %1116 = vmatpush1.bf16.xpose.msra.mxu0 0
        %1117 = vmatprep.mubr.bf16.mxu0 0
        %1118 = vmatmul.mubr.bf16.gmra.mrb[0].mxu0 %v1080
        %v1119 = vpop.f32.mrb[0].mxu0
        %v1120 = vadd.f32 %v960, %v1119
        %v1121 = vpop.f32.mrb[0].mxu0
        %v1122 = vpop.f32.mrb[0].mxu0
        %v1123 = vpop.f32.mrb[0].mxu0
        %1124 = vdwg.mxu0
        %v1125 = vsel %vm962, %v1120, -inf
        %1126 = vmax.xlane.f32.xlu0 %v1125
        %v1127 = vpop.xlane.xlu0 %1126
        %v1128 = vsub.f32 %v1120, %v1127
        %v1129 = vmul.f32 %v1128, 1.442695
        %v1130 = vpow.pop %v1129
        %v1131 = vsel %vm962, %v1130, 0.0
        %1132 = vadd.xlane.f32.xlu0 %v1131
        %v1133 = vpop.xlane.xlu0 %1132
        %v1134 = vrcp.pop %v1133
        %v1135 = vmul.f32 %v1130, %v1134
        %v1136 = vpack.c.bf16 %v1135, %v1135
        %v1138 = vunpack.c.l.b16 %v955
        %v1139 = vpack.c.b16 %v1138, %v1138
        %1140 = vrot.lane.b32.xlu0 %v1139, 96
        %v1141 = vpop.permute.xlu0 %1140
        %v1143 = vsel %vm962, %v1136, 0
        %v1146 = vsel %vm1029, %v1141, 0
        %1148 = vmatprep.subr.bf16.mxu0 0
        %1149 = vmatpush1.bf16.msra.mxu0 %v1146
        %1150 = vmatprep.subr.bf16.mxu0 0
        %1151 = vmatpush1.bf16.msra.mxu0 0
        %1152 = vmatprep.subr.bf16.mxu0 0
        %1153 = vmatpush1.bf16.msra.mxu0 0
        %1154 = vmatprep.subr.bf16.mxu0 0
        %1155 = vmatpush1.bf16.msra.mxu0 0
        %1156 = vmatprep.subr.bf16.mxu0 0
        %1157 = vmatpush1.bf16.msra.mxu0 0
        %1158 = vmatprep.subr.bf16.mxu0 0
        %1159 = vmatpush1.bf16.msra.mxu0 0
        %1160 = vmatprep.subr.bf16.mxu0 0
        %1161 = vmatpush1.bf16.msra.mxu0 0
        %1162 = vmatprep.subr.bf16.mxu0 0
        %1163 = vmatpush1.bf16.msra.mxu0 0
        %1164 = vmatprep.subr.bf16.mxu0 0
        %1165 = vmatpush1.bf16.msra.mxu0 0
        %1166 = vmatprep.subr.bf16.mxu0 0
        %1167 = vmatpush1.bf16.msra.mxu0 0
        %1168 = vmatprep.subr.bf16.mxu0 0
        %1169 = vmatpush1.bf16.msra.mxu0 0
        %1170 = vmatprep.subr.bf16.mxu0 0
        %1171 = vmatpush1.bf16.msra.mxu0 0
        %1172 = vmatprep.subr.bf16.mxu0 0
        %1173 = vmatpush1.bf16.msra.mxu0 0
        %1174 = vmatprep.subr.bf16.mxu0 0
        %1175 = vmatpush1.bf16.msra.mxu0 0
        %1176 = vmatprep.subr.bf16.mxu0 0
        %1177 = vmatpush1.bf16.msra.mxu0 0
        %1178 = vmatprep.subr.bf16.mxu0 0
        %1179 = vmatpush1.bf16.msra.mxu0 0
        %1180 = vmatprep.mubr.bf16.mxu0 0
        %1181 = vmatmul.mubr.bf16.gmra.mrb[0].mxu0 %v1143
        %v1182 = vpop.f32.mrb[0].mxu0
        %v1183 = vadd.f32 0.0, %v1182
        %v1184 = vpop.f32.mrb[0].mxu0
        %v1185 = vpop.f32.mrb[0].mxu0
        %v1186 = vpop.f32.mrb[0].mxu0
        %1187 = vdwg.mxu0
        %v1188 = vpack.c.bf16 %v1183, %v1183
        %v1190 = vunpack.c.l.b16 %v1188
        %v1191 = vpack.c.b16 %v1190, %v1190
        %1192 = vrot.lane.b32.xlu0 %v1191, 32
        %v1193 = vpop.permute.xlu0 %1192
        %vm1195 = vcmask 322816
        %1196 = vst.msk [vmem:[#allocation4] sm:$0xf] %vm1195, %v1193
        %1197 = vrot.lane.b32.xlu0 %v953, 120
        %v1198 = vpop.permute.xlu0 %1197
        %1199 = vrot.lane.b32.xlu0 %v1023, 120
        %v1200 = vpop.permute.xlu0 %1199
        %v1202 = vsel %vm962, %v1198, 0
        %v1205 = vsel %vm962, %v1200, 0
        %1207 = vmatprep.subr.bf16.mxu0 0
        %1208 = vmatpush1.bf16.xpose.msra.mxu0 %v1205
        %1209 = vmatprep.subr.bf16.mxu0 0
        %1210 = vmatpush1.bf16.xpose.msra.mxu0 0
        %1211 = vmatprep.subr.bf16.mxu0 0
        %1212 = vmatpush1.bf16.xpose.msra.mxu0 0
        %1213 = vmatprep.subr.bf16.mxu0 0
        %1214 = vmatpush1.bf16.xpose.msra.mxu0 0
        %1215 = vmatprep.subr.bf16.mxu0 0
        %1216 = vmatpush1.bf16.xpose.msra.mxu0 0
        %1217 = vmatprep.subr.bf16.mxu0 0
        %1218 = vmatpush1.bf16.xpose.msra.mxu0 0
        %1219 = vmatprep.subr.bf16.mxu0 0
        %1220 = vmatpush1.bf16.xpose.msra.mxu0 0
        %1221 = vmatprep.subr.bf16.mxu0 0
        %1222 = vmatpush1.bf16.xpose.msra.mxu0 0
        %1223 = vmatprep.subr.bf16.mxu0 0
        %1224 = vmatpush1.bf16.xpose.msra.mxu0 0
        %1225 = vmatprep.subr.bf16.mxu0 0
        %1226 = vmatpush1.bf16.xpose.msra.mxu0 0
        %1227 = vmatprep.subr.bf16.mxu0 0
        %1228 = vmatpush1.bf16.xpose.msra.mxu0 0
        %1229 = vmatprep.subr.bf16.mxu0 0
        %1230 = vmatpush1.bf16.xpose.msra.mxu0 0
        %1231 = vmatprep.subr.bf16.mxu0 0
        %1232 = vmatpush1.bf16.xpose.msra.mxu0 0
        %1233 = vmatprep.subr.bf16.mxu0 0
        %1234 = vmatpush1.bf16.xpose.msra.mxu0 0
        %1235 = vmatprep.subr.bf16.mxu0 0
        %1236 = vmatpush1.bf16.xpose.msra.mxu0 0
        %1237 = vmatprep.subr.bf16.mxu0 0
        %1238 = vmatpush1.bf16.xpose.msra.mxu0 0
        %1239 = vmatprep.mubr.bf16.mxu0 0
        %1240 = vmatmul.mubr.bf16.gmra.mrb[0].mxu0 %v1202
        %v1241 = vpop.f32.mrb[0].mxu0
        %v1242 = vadd.f32 %v960, %v1241
        %v1243 = vpop.f32.mrb[0].mxu0
        %v1244 = vpop.f32.mrb[0].mxu0
        %v1245 = vpop.f32.mrb[0].mxu0
        %1246 = vdwg.mxu0
        %v1247 = vsel %vm962, %v1242, -inf
        %1248 = vmax.xlane.f32.xlu0 %v1247
        %v1249 = vpop.xlane.xlu0 %1248
        %v1250 = vsub.f32 %v1242, %v1249
        %v1251 = vmul.f32 %v1250, 1.442695
        %v1252 = vpow.pop %v1251
        %v1253 = vsel %vm962, %v1252, 0.0
        %1254 = vadd.xlane.f32.xlu0 %v1253
        %v1255 = vpop.xlane.xlu0 %1254
        %v1256 = vrcp.pop %v1255
        %v1257 = vmul.f32 %v1252, %v1256
        %v1258 = vpack.c.bf16 %v1257, %v1257
        %1259 = vrot.lane.b32.xlu0 %v1023, 88
        %v1260 = vpop.permute.xlu0 %1259
        %v1262 = vsel %vm962, %v1258, 0
        %v1265 = vsel %vm1029, %v1260, 0
        %1267 = vmatprep.subr.bf16.mxu0 0
        %1268 = vmatpush1.bf16.msra.mxu0 %v1265
        %1269 = vmatprep.subr.bf16.mxu0 0
        %1270 = vmatpush1.bf16.msra.mxu0 0
        %1271 = vmatprep.subr.bf16.mxu0 0
        %1272 = vmatpush1.bf16.msra.mxu0 0
        %1273 = vmatprep.subr.bf16.mxu0 0
        %1274 = vmatpush1.bf16.msra.mxu0 0
        %1275 = vmatprep.subr.bf16.mxu0 0
        %1276 = vmatpush1.bf16.msra.mxu0 0
        %1277 = vmatprep.subr.bf16.mxu0 0
        %1278 = vmatpush1.bf16.msra.mxu0 0
        %1279 = vmatprep.subr.bf16.mxu0 0
        %1280 = vmatpush1.bf16.msra.mxu0 0
        %1281 = vmatprep.subr.bf16.mxu0 0
        %1282 = vmatpush1.bf16.msra.mxu0 0
        %1283 = vmatprep.subr.bf16.mxu0 0
        %1284 = vmatpush1.bf16.msra.mxu0 0
        %1285 = vmatprep.subr.bf16.mxu0 0
        %1286 = vmatpush1.bf16.msra.mxu0 0
        %1287 = vmatprep.subr.bf16.mxu0 0
        %1288 = vmatpush1.bf16.msra.mxu0 0
        %1289 = vmatprep.subr.bf16.mxu0 0
        %1290 = vmatpush1.bf16.msra.mxu0 0
        %1291 = vmatprep.subr.bf16.mxu0 0
        %1292 = vmatpush1.bf16.msra.mxu0 0
        %1293 = vmatprep.subr.bf16.mxu0 0
        %1294 = vmatpush1.bf16.msra.mxu0 0
        %1295 = vmatprep.subr.bf16.mxu0 0
        %1296 = vmatpush1.bf16.msra.mxu0 0
        %1297 = vmatprep.subr.bf16.mxu0 0
        %1298 = vmatpush1.bf16.msra.mxu0 0
        %1299 = vmatprep.mubr.bf16.mxu0 0
        %1300 = vmatmul.mubr.bf16.gmra.mrb[0].mxu0 %v1262
        %v1301 = vpop.f32.mrb[0].mxu0
        %v1302 = vadd.f32 0.0, %v1301
        %v1303 = vpop.f32.mrb[0].mxu0
        %v1304 = vpop.f32.mrb[0].mxu0
        %v1305 = vpop.f32.mrb[0].mxu0
        %1306 = vdwg.mxu0
        %v1307 = vpack.c.bf16 %v1302, %v1302
        %v1309 = vunpack.c.l.b16 %v1307
        %v1310 = vpack.c.b16 %v1309, %v1309
        %1311 = vrot.lane.b32.xlu0 %v1310, 8
        %v1312 = vpop.permute.xlu0 %1311
        %vm1314 = vcmask 126016
        %1315 = vst.msk [vmem:[#allocation4] sm:$0xf] %vm1314, %v1312
        %1316 = vrot.lane.b32.xlu0 %v953, 88
        %v1317 = vpop.permute.xlu0 %1316
        %1318 = vrot.lane.b32.xlu0 %v1139, 120
        %v1319 = vpop.permute.xlu0 %1318
        %v1321 = vsel %vm962, %v1317, 0
        %v1324 = vsel %vm962, %v1319, 0
        %1326 = vmatprep.subr.bf16.mxu0 0
        %1327 = vmatpush1.bf16.xpose.msra.mxu0 %v1324
        %1328 = vmatprep.subr.bf16.mxu0 0
        %1329 = vmatpush1.bf16.xpose.msra.mxu0 0
        %1330 = vmatprep.subr.bf16.mxu0 0
        %1331 = vmatpush1.bf16.xpose.msra.mxu0 0
        %1332 = vmatprep.subr.bf16.mxu0 0
        %1333 = vmatpush1.bf16.xpose.msra.mxu0 0
        %1334 = vmatprep.subr.bf16.mxu0 0
        %1335 = vmatpush1.bf16.xpose.msra.mxu0 0
        %1336 = vmatprep.subr.bf16.mxu0 0
        %1337 = vmatpush1.bf16.xpose.msra.mxu0 0
        %1338 = vmatprep.subr.bf16.mxu0 0
        %1339 = vmatpush1.bf16.xpose.msra.mxu0 0
        %1340 = vmatprep.subr.bf16.mxu0 0
        %1341 = vmatpush1.bf16.xpose.msra.mxu0 0
        %1342 = vmatprep.subr.bf16.mxu0 0
        %1343 = vmatpush1.bf16.xpose.msra.mxu0 0
        %1344 = vmatprep.subr.bf16.mxu0 0
        %1345 = vmatpush1.bf16.xpose.msra.mxu0 0
        %1346 = vmatprep.subr.bf16.mxu0 0
        %1347 = vmatpush1.bf16.xpose.msra.mxu0 0
        %1348 = vmatprep.subr.bf16.mxu0 0
        %1349 = vmatpush1.bf16.xpose.msra.mxu0 0
        %1350 = vmatprep.subr.bf16.mxu0 0
        %1351 = vmatpush1.bf16.xpose.msra.mxu0 0
        %1352 = vmatprep.subr.bf16.mxu0 0
        %1353 = vmatpush1.bf16.xpose.msra.mxu0 0
        %1354 = vmatprep.subr.bf16.mxu0 0
        %1355 = vmatpush1.bf16.xpose.msra.mxu0 0
        %1356 = vmatprep.subr.bf16.mxu0 0
        %1357 = vmatpush1.bf16.xpose.msra.mxu0 0
        %1358 = vmatprep.mubr.bf16.mxu0 0
        %1359 = vmatmul.mubr.bf16.gmra.mrb[0].mxu0 %v1321
        %v1360 = vpop.f32.mrb[0].mxu0
        %v1361 = vadd.f32 %v960, %v1360
        %v1362 = vpop.f32.mrb[0].mxu0
        %v1363 = vpop.f32.mrb[0].mxu0
        %v1364 = vpop.f32.mrb[0].mxu0
        %1365 = vdwg.mxu0
        %v1366 = vsel %vm962, %v1361, -inf
        %1367 = vmax.xlane.f32.xlu0 %v1366
        %v1368 = vpop.xlane.xlu0 %1367
        %v1369 = vsub.f32 %v1361, %v1368
        %v1370 = vmul.f32 %v1369, 1.442695
        %v1371 = vpow.pop %v1370
        %v1372 = vsel %vm962, %v1371, 0.0
        %1373 = vadd.xlane.f32.xlu0 %v1372
        %v1374 = vpop.xlane.xlu0 %1373
        %v1375 = vrcp.pop %v1374
        %v1376 = vmul.f32 %v1371, %v1375
        %v1377 = vpack.c.bf16 %v1376, %v1376
        %1378 = vrot.lane.b32.xlu0 %v1139, 88
        %v1379 = vpop.permute.xlu0 %1378
        %v1381 = vsel %vm962, %v1377, 0
        %v1384 = vsel %vm1029, %v1379, 0
        %1386 = vmatprep.subr.bf16.mxu0 0
        %1387 = vmatpush1.bf16.msra.mxu0 %v1384
        %1388 = vmatprep.subr.bf16.mxu0 0
        %1389 = vmatpush1.bf16.msra.mxu0 0
        %1390 = vmatprep.subr.bf16.mxu0 0
        %1391 = vmatpush1.bf16.msra.mxu0 0
        %1392 = vmatprep.subr.bf16.mxu0 0
        %1393 = vmatpush1.bf16.msra.mxu0 0
        %1394 = vmatprep.subr.bf16.mxu0 0
        %1395 = vmatpush1.bf16.msra.mxu0 0
        %1396 = vmatprep.subr.bf16.mxu0 0
        %1397 = vmatpush1.bf16.msra.mxu0 0
        %1398 = vmatprep.subr.bf16.mxu0 0
        %1399 = vmatpush1.bf16.msra.mxu0 0
        %1400 = vmatprep.subr.bf16.mxu0 0
        %1401 = vmatpush1.bf16.msra.mxu0 0
        %1402 = vmatprep.subr.bf16.mxu0 0
        %1403 = vmatpush1.bf16.msra.mxu0 0
        %1404 = vmatprep.subr.bf16.mxu0 0
        %1405 = vmatpush1.bf16.msra.mxu0 0
        %1406 = vmatprep.subr.bf16.mxu0 0
        %1407 = vmatpush1.bf16.msra.mxu0 0
        %1408 = vmatprep.subr.bf16.mxu0 0
        %1409 = vmatpush1.bf16.msra.mxu0 0
        %1410 = vmatprep.subr.bf16.mxu0 0
        %1411 = vmatpush1.bf16.msra.mxu0 0
        %1412 = vmatprep.subr.bf16.mxu0 0
        %1413 = vmatpush1.bf16.msra.mxu0 0
        %1414 = vmatprep.subr.bf16.mxu0 0
        %1415 = vmatpush1.bf16.msra.mxu0 0
        %1416 = vmatprep.subr.bf16.mxu0 0
        %1417 = vmatpush1.bf16.msra.mxu0 0
        %1418 = vmatprep.mubr.bf16.mxu0 0
        %1419 = vmatmul.mubr.bf16.gmra.mrb[0].mxu0 %v1381
        %v1420 = vpop.f32.mrb[0].mxu0
        %v1421 = vadd.f32 0.0, %v1420
        %v1422 = vpop.f32.mrb[0].mxu0
        %v1423 = vpop.f32.mrb[0].mxu0
        %v1424 = vpop.f32.mrb[0].mxu0
        %1425 = vdwg.mxu0
        %v1426 = vpack.c.bf16 %v1421, %v1421
        %v1428 = vunpack.c.l.b16 %v1426
        %v1429 = vpack.c.b16 %v1428, %v1428
        %1430 = vrot.lane.b32.xlu0 %v1429, 40
        %v1431 = vpop.permute.xlu0 %1430
        %vm1433 = vcmask 388416
        %1434 = vst.msk [vmem:[#allocation4] sm:$0xf] %vm1433, %v1431
        %1435 = vrot.lane.b32.xlu0 %v953, 112
        %v1436 = vpop.permute.xlu0 %1435
        %1437 = vrot.lane.b32.xlu0 %v1023, 112
        %v1438 = vpop.permute.xlu0 %1437
        %v1440 = vsel %vm962, %v1436, 0
        %v1443 = vsel %vm962, %v1438, 0
        %1445 = vmatprep.subr.bf16.mxu0 0
        %1446 = vmatpush1.bf16.xpose.msra.mxu0 %v1443
        %1447 = vmatprep.subr.bf16.mxu0 0
        %1448 = vmatpush1.bf16.xpose.msra.mxu0 0
        %1449 = vmatprep.subr.bf16.mxu0 0
        %1450 = vmatpush1.bf16.xpose.msra.mxu0 0
        %1451 = vmatprep.subr.bf16.mxu0 0
        %1452 = vmatpush1.bf16.xpose.msra.mxu0 0
        %1453 = vmatprep.subr.bf16.mxu0 0
        %1454 = vmatpush1.bf16.xpose.msra.mxu0 0
        %1455 = vmatprep.subr.bf16.mxu0 0
        %1456 = vmatpush1.bf16.xpose.msra.mxu0 0
        %1457 = vmatprep.subr.bf16.mxu0 0
        %1458 = vmatpush1.bf16.xpose.msra.mxu0 0
        %1459 = vmatprep.subr.bf16.mxu0 0
        %1460 = vmatpush1.bf16.xpose.msra.mxu0 0
        %1461 = vmatprep.subr.bf16.mxu0 0
        %1462 = vmatpush1.bf16.xpose.msra.mxu0 0
        %1463 = vmatprep.subr.bf16.mxu0 0
        %1464 = vmatpush1.bf16.xpose.msra.mxu0 0
        %1465 = vmatprep.subr.bf16.mxu0 0
        %1466 = vmatpush1.bf16.xpose.msra.mxu0 0
        %1467 = vmatprep.subr.bf16.mxu0 0
        %1468 = vmatpush1.bf16.xpose.msra.mxu0 0
        %1469 = vmatprep.subr.bf16.mxu0 0
        %1470 = vmatpush1.bf16.xpose.msra.mxu0 0
        %1471 = vmatprep.subr.bf16.mxu0 0
        %1472 = vmatpush1.bf16.xpose.msra.mxu0 0
        %1473 = vmatprep.subr.bf16.mxu0 0
        %1474 = vmatpush1.bf16.xpose.msra.mxu0 0
        %1475 = vmatprep.subr.bf16.mxu0 0
        %1476 = vmatpush1.bf16.xpose.msra.mxu0 0
        %1477 = vmatprep.mubr.bf16.mxu0 0
        %1478 = vmatmul.mubr.bf16.gmra.mrb[0].mxu0 %v1440
        %v1479 = vpop.f32.mrb[0].mxu0
        %v1480 = vadd.f32 %v960, %v1479
        %v1481 = vpop.f32.mrb[0].mxu0
        %v1482 = vpop.f32.mrb[0].mxu0
        %v1483 = vpop.f32.mrb[0].mxu0
        %1484 = vdwg.mxu0
        %v1485 = vsel %vm962, %v1480, -inf
        %1486 = vmax.xlane.f32.xlu0 %v1485
        %v1487 = vpop.xlane.xlu0 %1486
        %v1488 = vsub.f32 %v1480, %v1487
        %v1489 = vmul.f32 %v1488, 1.442695
        %v1490 = vpow.pop %v1489
        %v1491 = vsel %vm962, %v1490, 0.0
        %1492 = vadd.xlane.f32.xlu0 %v1491
        %v1493 = vpop.xlane.xlu0 %1492
        %v1494 = vrcp.pop %v1493
        %v1495 = vmul.f32 %v1490, %v1494
        %v1496 = vpack.c.bf16 %v1495, %v1495
        %1497 = vrot.lane.b32.xlu0 %v1023, 80
        %v1498 = vpop.permute.xlu0 %1497
        %v1500 = vsel %vm962, %v1496, 0
        %v1503 = vsel %vm1029, %v1498, 0
        %1505 = vmatprep.subr.bf16.mxu0 0
        %1506 = vmatpush1.bf16.msra.mxu0 %v1503
        %1507 = vmatprep.subr.bf16.mxu0 0
        %1508 = vmatpush1.bf16.msra.mxu0 0
        %1509 = vmatprep.subr.bf16.mxu0 0
        %1510 = vmatpush1.bf16.msra.mxu0 0
        %1511 = vmatprep.subr.bf16.mxu0 0
        %1512 = vmatpush1.bf16.msra.mxu0 0
        %1513 = vmatprep.subr.bf16.mxu0 0
        %1514 = vmatpush1.bf16.msra.mxu0 0
        %1515 = vmatprep.subr.bf16.mxu0 0
        %1516 = vmatpush1.bf16.msra.mxu0 0
        %1517 = vmatprep.subr.bf16.mxu0 0
        %1518 = vmatpush1.bf16.msra.mxu0 0
        %1519 = vmatprep.subr.bf16.mxu0 0
        %1520 = vmatpush1.bf16.msra.mxu0 0
        %1521 = vmatprep.subr.bf16.mxu0 0
        %1522 = vmatpush1.bf16.msra.mxu0 0
        %1523 = vmatprep.subr.bf16.mxu0 0
        %1524 = vmatpush1.bf16.msra.mxu0 0
        %1525 = vmatprep.subr.bf16.mxu0 0
        %1526 = vmatpush1.bf16.msra.mxu0 0
        %1527 = vmatprep.subr.bf16.mxu0 0
        %1528 = vmatpush1.bf16.msra.mxu0 0
        %1529 = vmatprep.subr.bf16.mxu0 0
        %1530 = vmatpush1.bf16.msra.mxu0 0
        %1531 = vmatprep.subr.bf16.mxu0 0
        %1532 = vmatpush1.bf16.msra.mxu0 0
        %1533 = vmatprep.subr.bf16.mxu0 0
        %1534 = vmatpush1.bf16.msra.mxu0 0
        %1535 = vmatprep.subr.bf16.mxu0 0
        %1536 = vmatpush1.bf16.msra.mxu0 0
        %1537 = vmatprep.mubr.bf16.mxu0 0
        %1538 = vmatmul.mubr.bf16.gmra.mrb[0].mxu0 %v1500
        %v1539 = vpop.f32.mrb[0].mxu0
        %v1540 = vadd.f32 0.0, %v1539
        %v1541 = vpop.f32.mrb[0].mxu0
        %v1542 = vpop.f32.mrb[0].mxu0
        %v1543 = vpop.f32.mrb[0].mxu0
        %1544 = vdwg.mxu0
        %v1545 = vpack.c.bf16 %v1540, %v1540
        %v1547 = vunpack.c.l.b16 %v1545
        %v1548 = vpack.c.b16 %v1547, %v1547
        %1549 = vrot.lane.b32.xlu0 %v1548, 16
        %v1550 = vpop.permute.xlu0 %1549
        %vm1552 = vcmask 191616
        %1553 = vst.msk [vmem:[#allocation4] sm:$0xf] %vm1552, %v1550
        %1554 = vrot.lane.b32.xlu0 %v953, 80
        %v1555 = vpop.permute.xlu0 %1554
        %1556 = vrot.lane.b32.xlu0 %v1139, 112
        %v1557 = vpop.permute.xlu0 %1556
        %v1559 = vsel %vm962, %v1555, 0
        %v1562 = vsel %vm962, %v1557, 0
        %1564 = vmatprep.subr.bf16.mxu0 0
        %1565 = vmatpush1.bf16.xpose.msra.mxu0 %v1562
        %1566 = vmatprep.subr.bf16.mxu0 0
        %1567 = vmatpush1.bf16.xpose.msra.mxu0 0
        %1568 = vmatprep.subr.bf16.mxu0 0
        %1569 = vmatpush1.bf16.xpose.msra.mxu0 0
        %1570 = vmatprep.subr.bf16.mxu0 0
        %1571 = vmatpush1.bf16.xpose.msra.mxu0 0
        %1572 = vmatprep.subr.bf16.mxu0 0
        %1573 = vmatpush1.bf16.xpose.msra.mxu0 0
        %1574 = vmatprep.subr.bf16.mxu0 0
        %1575 = vmatpush1.bf16.xpose.msra.mxu0 0
        %1576 = vmatprep.subr.bf16.mxu0 0
        %1577 = vmatpush1.bf16.xpose.msra.mxu0 0
        %1578 = vmatprep.subr.bf16.mxu0 0
        %1579 = vmatpush1.bf16.xpose.msra.mxu0 0
        %1580 = vmatprep.subr.bf16.mxu0 0
        %1581 = vmatpush1.bf16.xpose.msra.mxu0 0
        %1582 = vmatprep.subr.bf16.mxu0 0
        %1583 = vmatpush1.bf16.xpose.msra.mxu0 0
        %1584 = vmatprep.subr.bf16.mxu0 0
        %1585 = vmatpush1.bf16.xpose.msra.mxu0 0
        %1586 = vmatprep.subr.bf16.mxu0 0
        %1587 = vmatpush1.bf16.xpose.msra.mxu0 0
        %1588 = vmatprep.subr.bf16.mxu0 0
        %1589 = vmatpush1.bf16.xpose.msra.mxu0 0
        %1590 = vmatprep.subr.bf16.mxu0 0
        %1591 = vmatpush1.bf16.xpose.msra.mxu0 0
        %1592 = vmatprep.subr.bf16.mxu0 0
        %1593 = vmatpush1.bf16.xpose.msra.mxu0 0
        %1594 = vmatprep.subr.bf16.mxu0 0
        %1595 = vmatpush1.bf16.xpose.msra.mxu0 0
        %1596 = vmatprep.mubr.bf16.mxu0 0
        %1597 = vmatmul.mubr.bf16.gmra.mrb[0].mxu0 %v1559
        %v1598 = vpop.f32.mrb[0].mxu0
        %v1599 = vadd.f32 %v960, %v1598
        %v1600 = vpop.f32.mrb[0].mxu0
        %v1601 = vpop.f32.mrb[0].mxu0
        %v1602 = vpop.f32.mrb[0].mxu0
        %1603 = vdwg.mxu0
        %v1604 = vsel %vm962, %v1599, -inf
        %1605 = vmax.xlane.f32.xlu0 %v1604
        %v1606 = vpop.xlane.xlu0 %1605
        %v1607 = vsub.f32 %v1599, %v1606
        %v1608 = vmul.f32 %v1607, 1.442695
        %v1609 = vpow.pop %v1608
        %v1610 = vsel %vm962, %v1609, 0.0
        %1611 = vadd.xlane.f32.xlu0 %v1610
        %v1612 = vpop.xlane.xlu0 %1611
        %v1613 = vrcp.pop %v1612
        %v1614 = vmul.f32 %v1609, %v1613
        %v1615 = vpack.c.bf16 %v1614, %v1614
        %1616 = vrot.lane.b32.xlu0 %v1139, 80
        %v1617 = vpop.permute.xlu0 %1616
        %v1619 = vsel %vm962, %v1615, 0
        %v1622 = vsel %vm1029, %v1617, 0
        %1624 = vmatprep.subr.bf16.mxu0 0
        %1625 = vmatpush1.bf16.msra.mxu0 %v1622
        %1626 = vmatprep.subr.bf16.mxu0 0
        %1627 = vmatpush1.bf16.msra.mxu0 0
        %1628 = vmatprep.subr.bf16.mxu0 0
        %1629 = vmatpush1.bf16.msra.mxu0 0
        %1630 = vmatprep.subr.bf16.mxu0 0
        %1631 = vmatpush1.bf16.msra.mxu0 0
        %1632 = vmatprep.subr.bf16.mxu0 0
        %1633 = vmatpush1.bf16.msra.mxu0 0
        %1634 = vmatprep.subr.bf16.mxu0 0
        %1635 = vmatpush1.bf16.msra.mxu0 0
        %1636 = vmatprep.subr.bf16.mxu0 0
        %1637 = vmatpush1.bf16.msra.mxu0 0
        %1638 = vmatprep.subr.bf16.mxu0 0
        %1639 = vmatpush1.bf16.msra.mxu0 0
        %1640 = vmatprep.subr.bf16.mxu0 0
        %1641 = vmatpush1.bf16.msra.mxu0 0
        %1642 = vmatprep.subr.bf16.mxu0 0
        %1643 = vmatpush1.bf16.msra.mxu0 0
        %1644 = vmatprep.subr.bf16.mxu0 0
        %1645 = vmatpush1.bf16.msra.mxu0 0
        %1646 = vmatprep.subr.bf16.mxu0 0
        %1647 = vmatpush1.bf16.msra.mxu0 0
        %1648 = vmatprep.subr.bf16.mxu0 0
        %1649 = vmatpush1.bf16.msra.mxu0 0
        %1650 = vmatprep.subr.bf16.mxu0 0
        %1651 = vmatpush1.bf16.msra.mxu0 0
        %1652 = vmatprep.subr.bf16.mxu0 0
        %1653 = vmatpush1.bf16.msra.mxu0 0
        %1654 = vmatprep.subr.bf16.mxu0 0
        %1655 = vmatpush1.bf16.msra.mxu0 0
        %1656 = vmatprep.mubr.bf16.mxu0 0
        %1657 = vmatmul.mubr.bf16.gmra.mrb[0].mxu0 %v1619
        %v1658 = vpop.f32.mrb[0].mxu0
        %v1659 = vadd.f32 0.0, %v1658
        %v1660 = vpop.f32.mrb[0].mxu0
        %v1661 = vpop.f32.mrb[0].mxu0
        %v1662 = vpop.f32.mrb[0].mxu0
        %1663 = vdwg.mxu0
        %v1664 = vpack.c.bf16 %v1659, %v1659
        %v1666 = vunpack.c.l.b16 %v1664
        %v1667 = vpack.c.b16 %v1666, %v1666
        %1668 = vrot.lane.b32.xlu0 %v1667, 48
        %v1669 = vpop.permute.xlu0 %1668
        %vm1671 = vcmask 454016
        %1672 = vst.msk [vmem:[#allocation4] sm:$0xf] %vm1671, %v1669
        %1673 = vrot.lane.b32.xlu0 %v953, 104
        %v1674 = vpop.permute.xlu0 %1673
        %1675 = vrot.lane.b32.xlu0 %v1023, 104
        %v1676 = vpop.permute.xlu0 %1675
        %v1678 = vsel %vm962, %v1674, 0
        %v1681 = vsel %vm962, %v1676, 0
        %1683 = vmatprep.subr.bf16.mxu0 0
        %1684 = vmatpush1.bf16.xpose.msra.mxu0 %v1681
        %1685 = vmatprep.subr.bf16.mxu0 0
        %1686 = vmatpush1.bf16.xpose.msra.mxu0 0
        %1687 = vmatprep.subr.bf16.mxu0 0
        %1688 = vmatpush1.bf16.xpose.msra.mxu0 0
        %1689 = vmatprep.subr.bf16.mxu0 0
        %1690 = vmatpush1.bf16.xpose.msra.mxu0 0
        %1691 = vmatprep.subr.bf16.mxu0 0
        %1692 = vmatpush1.bf16.xpose.msra.mxu0 0
        %1693 = vmatprep.subr.bf16.mxu0 0
        %1694 = vmatpush1.bf16.xpose.msra.mxu0 0
        %1695 = vmatprep.subr.bf16.mxu0 0
        %1696 = vmatpush1.bf16.xpose.msra.mxu0 0
        %1697 = vmatprep.subr.bf16.mxu0 0
        %1698 = vmatpush1.bf16.xpose.msra.mxu0 0
        %1699 = vmatprep.subr.bf16.mxu0 0
        %1700 = vmatpush1.bf16.xpose.msra.mxu0 0
        %1701 = vmatprep.subr.bf16.mxu0 0
        %1702 = vmatpush1.bf16.xpose.msra.mxu0 0
        %1703 = vmatprep.subr.bf16.mxu0 0
        %1704 = vmatpush1.bf16.xpose.msra.mxu0 0
        %1705 = vmatprep.subr.bf16.mxu0 0
        %1706 = vmatpush1.bf16.xpose.msra.mxu0 0
        %1707 = vmatprep.subr.bf16.mxu0 0
        %1708 = vmatpush1.bf16.xpose.msra.mxu0 0
        %1709 = vmatprep.subr.bf16.mxu0 0
        %1710 = vmatpush1.bf16.xpose.msra.mxu0 0
        %1711 = vmatprep.subr.bf16.mxu0 0
        %1712 = vmatpush1.bf16.xpose.msra.mxu0 0
        %1713 = vmatprep.subr.bf16.mxu0 0
        %1714 = vmatpush1.bf16.xpose.msra.mxu0 0
        %1715 = vmatprep.mubr.bf16.mxu0 0
        %1716 = vmatmul.mubr.bf16.gmra.mrb[0].mxu0 %v1678
        %v1717 = vpop.f32.mrb[0].mxu0
        %v1718 = vadd.f32 %v960, %v1717
        %v1719 = vpop.f32.mrb[0].mxu0
        %v1720 = vpop.f32.mrb[0].mxu0
        %v1721 = vpop.f32.mrb[0].mxu0
        %1722 = vdwg.mxu0
        %v1723 = vsel %vm962, %v1718, -inf
        %1724 = vmax.xlane.f32.xlu0 %v1723
        %v1725 = vpop.xlane.xlu0 %1724
        %v1726 = vsub.f32 %v1718, %v1725
        %v1727 = vmul.f32 %v1726, 1.442695
        %v1728 = vpow.pop %v1727
        %v1729 = vsel %vm962, %v1728, 0.0
        %1730 = vadd.xlane.f32.xlu0 %v1729
        %v1731 = vpop.xlane.xlu0 %1730
        %v1732 = vrcp.pop %v1731
        %v1733 = vmul.f32 %v1728, %v1732
        %v1734 = vpack.c.bf16 %v1733, %v1733
        %1735 = vrot.lane.b32.xlu0 %v1023, 72
        %v1736 = vpop.permute.xlu0 %1735
        %v1738 = vsel %vm962, %v1734, 0
        %v1741 = vsel %vm1029, %v1736, 0
        %1743 = vmatprep.subr.bf16.mxu0 0
        %1744 = vmatpush1.bf16.msra.mxu0 %v1741
        %1745 = vmatprep.subr.bf16.mxu0 0
        %1746 = vmatpush1.bf16.msra.mxu0 0
        %1747 = vmatprep.subr.bf16.mxu0 0
        %1748 = vmatpush1.bf16.msra.mxu0 0
        %1749 = vmatprep.subr.bf16.mxu0 0
        %1750 = vmatpush1.bf16.msra.mxu0 0
        %1751 = vmatprep.subr.bf16.mxu0 0
        %1752 = vmatpush1.bf16.msra.mxu0 0
        %1753 = vmatprep.subr.bf16.mxu0 0
        %1754 = vmatpush1.bf16.msra.mxu0 0
        %1755 = vmatprep.subr.bf16.mxu0 0
        %1756 = vmatpush1.bf16.msra.mxu0 0
        %1757 = vmatprep.subr.bf16.mxu0 0
        %1758 = vmatpush1.bf16.msra.mxu0 0
        %1759 = vmatprep.subr.bf16.mxu0 0
        %1760 = vmatpush1.bf16.msra.mxu0 0
        %1761 = vmatprep.subr.bf16.mxu0 0
        %1762 = vmatpush1.bf16.msra.mxu0 0
        %1763 = vmatprep.subr.bf16.mxu0 0
        %1764 = vmatpush1.bf16.msra.mxu0 0
        %1765 = vmatprep.subr.bf16.mxu0 0
        %1766 = vmatpush1.bf16.msra.mxu0 0
        %1767 = vmatprep.subr.bf16.mxu0 0
        %1768 = vmatpush1.bf16.msra.mxu0 0
        %1769 = vmatprep.subr.bf16.mxu0 0
        %1770 = vmatpush1.bf16.msra.mxu0 0
        %1771 = vmatprep.subr.bf16.mxu0 0
        %1772 = vmatpush1.bf16.msra.mxu0 0
        %1773 = vmatprep.subr.bf16.mxu0 0
        %1774 = vmatpush1.bf16.msra.mxu0 0
        %1775 = vmatprep.mubr.bf16.mxu0 0
        %1776 = vmatmul.mubr.bf16.gmra.mrb[0].mxu0 %v1738
        %v1777 = vpop.f32.mrb[0].mxu0
        %v1778 = vadd.f32 0.0, %v1777
        %v1779 = vpop.f32.mrb[0].mxu0
        %v1780 = vpop.f32.mrb[0].mxu0
        %v1781 = vpop.f32.mrb[0].mxu0
        %1782 = vdwg.mxu0
        %v1783 = vpack.c.bf16 %v1778, %v1778
        %v1785 = vunpack.c.l.b16 %v1783
        %v1786 = vpack.c.b16 %v1785, %v1785
        %1787 = vrot.lane.b32.xlu0 %v1786, 24
        %v1788 = vpop.permute.xlu0 %1787
        %vm1790 = vcmask 257216
        %1791 = vst.msk [vmem:[#allocation4] sm:$0xf] %vm1790, %v1788
        %1792 = vrot.lane.b32.xlu0 %v953, 72
        %v1793 = vpop.permute.xlu0 %1792
        %1794 = vrot.lane.b32.xlu0 %v1139, 104
        %v1795 = vpop.permute.xlu0 %1794
        %v1797 = vsel %vm962, %v1793, 0
        %v1800 = vsel %vm962, %v1795, 0
        %1802 = vmatprep.subr.bf16.mxu0 0
        %1803 = vmatpush1.bf16.xpose.msra.mxu0 %v1800
        %1804 = vmatprep.subr.bf16.mxu0 0
        %1805 = vmatpush1.bf16.xpose.msra.mxu0 0
        %1806 = vmatprep.subr.bf16.mxu0 0
        %1807 = vmatpush1.bf16.xpose.msra.mxu0 0
        %1808 = vmatprep.subr.bf16.mxu0 0
        %1809 = vmatpush1.bf16.xpose.msra.mxu0 0
        %1810 = vmatprep.subr.bf16.mxu0 0
        %1811 = vmatpush1.bf16.xpose.msra.mxu0 0
        %1812 = vmatprep.subr.bf16.mxu0 0
        %1813 = vmatpush1.bf16.xpose.msra.mxu0 0
        %1814 = vmatprep.subr.bf16.mxu0 0
        %1815 = vmatpush1.bf16.xpose.msra.mxu0 0
        %1816 = vmatprep.subr.bf16.mxu0 0
        %1817 = vmatpush1.bf16.xpose.msra.mxu0 0
        %1818 = vmatprep.subr.bf16.mxu0 0
        %1819 = vmatpush1.bf16.xpose.msra.mxu0 0
        %1820 = vmatprep.subr.bf16.mxu0 0
        %1821 = vmatpush1.bf16.xpose.msra.mxu0 0
        %1822 = vmatprep.subr.bf16.mxu0 0
        %1823 = vmatpush1.bf16.xpose.msra.mxu0 0
        %1824 = vmatprep.subr.bf16.mxu0 0
        %1825 = vmatpush1.bf16.xpose.msra.mxu0 0
        %1826 = vmatprep.subr.bf16.mxu0 0
        %1827 = vmatpush1.bf16.xpose.msra.mxu0 0
        %1828 = vmatprep.subr.bf16.mxu0 0
        %1829 = vmatpush1.bf16.xpose.msra.mxu0 0
        %1830 = vmatprep.subr.bf16.mxu0 0
        %1831 = vmatpush1.bf16.xpose.msra.mxu0 0
        %1832 = vmatprep.subr.bf16.mxu0 0
        %1833 = vmatpush1.bf16.xpose.msra.mxu0 0
        %1834 = vmatprep.mubr.bf16.mxu0 0
        %1835 = vmatmul.mubr.bf16.gmra.mrb[0].mxu0 %v1797
        %v1836 = vpop.f32.mrb[0].mxu0
        %v1837 = vadd.f32 %v960, %v1836
        %v1838 = vpop.f32.mrb[0].mxu0
        %v1839 = vpop.f32.mrb[0].mxu0
        %v1840 = vpop.f32.mrb[0].mxu0
        %1841 = vdwg.mxu0
        %v1842 = vsel %vm962, %v1837, -inf
        %1843 = vmax.xlane.f32.xlu0 %v1842
        %v1844 = vpop.xlane.xlu0 %1843
        %v1845 = vsub.f32 %v1837, %v1844
        %v1846 = vmul.f32 %v1845, 1.442695
        %v1847 = vpow.pop %v1846
        %v1848 = vsel %vm962, %v1847, 0.0
        %1849 = vadd.xlane.f32.xlu0 %v1848
        %v1850 = vpop.xlane.xlu0 %1849
        %v1851 = vrcp.pop %v1850
        %v1852 = vmul.f32 %v1847, %v1851
        %v1853 = vpack.c.bf16 %v1852, %v1852
        %1854 = vrot.lane.b32.xlu0 %v1139, 72
        %v1855 = vpop.permute.xlu0 %1854
        %v1857 = vsel %vm962, %v1853, 0
        %v1860 = vsel %vm1029, %v1855, 0
        %1862 = vmatprep.subr.bf16.mxu0 0
        %1863 = vmatpush1.bf16.msra.mxu0 %v1860
        %1864 = vmatprep.subr.bf16.mxu0 0
        %1865 = vmatpush1.bf16.msra.mxu0 0
        %1866 = vmatprep.subr.bf16.mxu0 0
        %1867 = vmatpush1.bf16.msra.mxu0 0
        %1868 = vmatprep.subr.bf16.mxu0 0
        %1869 = vmatpush1.bf16.msra.mxu0 0
        %1870 = vmatprep.subr.bf16.mxu0 0
        %1871 = vmatpush1.bf16.msra.mxu0 0
        %1872 = vmatprep.subr.bf16.mxu0 0
        %1873 = vmatpush1.bf16.msra.mxu0 0
        %1874 = vmatprep.subr.bf16.mxu0 0
        %1875 = vmatpush1.bf16.msra.mxu0 0
        %1876 = vmatprep.subr.bf16.mxu0 0
        %1877 = vmatpush1.bf16.msra.mxu0 0
        %1878 = vmatprep.subr.bf16.mxu0 0
        %1879 = vmatpush1.bf16.msra.mxu0 0
        %1880 = vmatprep.subr.bf16.mxu0 0
        %1881 = vmatpush1.bf16.msra.mxu0 0
        %1882 = vmatprep.subr.bf16.mxu0 0
        %1883 = vmatpush1.bf16.msra.mxu0 0
        %1884 = vmatprep.subr.bf16.mxu0 0
        %1885 = vmatpush1.bf16.msra.mxu0 0
        %1886 = vmatprep.subr.bf16.mxu0 0
        %1887 = vmatpush1.bf16.msra.mxu0 0
        %1888 = vmatprep.subr.bf16.mxu0 0
        %1889 = vmatpush1.bf16.msra.mxu0 0
        %1890 = vmatprep.subr.bf16.mxu0 0
        %1891 = vmatpush1.bf16.msra.mxu0 0
        %1892 = vmatprep.subr.bf16.mxu0 0
        %1893 = vmatpush1.bf16.msra.mxu0 0
        %1894 = vmatprep.mubr.bf16.mxu0 0
        %1895 = vmatmul.mubr.bf16.gmra.mrb[0].mxu0 %v1857
        %v1896 = vpop.f32.mrb[0].mxu0
        %v1897 = vadd.f32 0.0, %v1896
        %v1898 = vpop.f32.mrb[0].mxu0
        %v1899 = vpop.f32.mrb[0].mxu0
        %v1900 = vpop.f32.mrb[0].mxu0
        %1901 = vdwg.mxu0
        %v1902 = vpack.c.bf16 %v1897, %v1897
        %v1904 = vunpack.c.l.b16 %v1902
        %v1905 = vpack.c.b16 %v1904, %v1904
        %1906 = vrot.lane.b32.xlu0 %v1905, 56
        %v1907 = vpop.permute.xlu0 %1906
        %vm1909 = vcmask 519616
        %1910 = vst.msk [vmem:[#allocation4] sm:$0xf] %vm1909, %v1907
        %v1911 = vld [vmem:[#allocation4] sm:$0xf]
        %v1912 = vld [vmem:[%s10] sm:$0xf]
        %v1913 = vld [vmem:[%s10 + $0x4] sm:$0xf]
        %v1914 = vld [vmem:[%s10 + $0x8] sm:$0xf]
        %v1915 = vld [vmem:[%s10 + $0xc] sm:$0xf]
        %v1916 = vld [vmem:[%s10 + $0x10] sm:$0xf]
        %v1917 = vld [vmem:[%s10 + $0x14] sm:$0xf]
        %v1918 = vld [vmem:[%s10 + $0x18] sm:$0xf]
        %v1919 = vld [vmem:[%s10 + $0x1c] sm:$0xf]
        %v1920 = vld [vmem:[%s11] sm:$0x1]
        %v1922 = vlaneseq
        %v1923 = vshrl.u32 %v1922, 7
        %v1924 = vsub.s32 0, %v1923
        %v1925 = vrot.slane %v1920, %v1924
        %v1935 = vunpack.c.l.b16 %v1912
        %v1936 = vunpack.c.l.b16 %v1913
        %v1937 = vunpack.c.l.b16 %v1914
        %v1938 = vunpack.c.l.b16 %v1915
        %v1939 = vunpack.c.l.b16 %v1916
        %v1940 = vunpack.c.l.b16 %v1917
        %v1941 = vunpack.c.l.b16 %v1918
        %v1942 = vunpack.c.l.b16 %v1919
        %v1943 = vpack.c.b16 %v1936, %v1935
        %v1944 = vpack.c.b16 %v1938, %v1937
        %v1945 = vpack.c.b16 %v1940, %v1939
        %v1946 = vpack.c.b16 %v1942, %v1941
        %vm1951 = vcmask 523264
        %v1953 = vsel %vm1951, %v1911, 0
        %1955 = vmatprep.subr.bf16.mxu0 0
        %1956 = vmatpush1.bf16.msra.mxu0 %v1943
        %1957 = vmatprep.subr.bf16.mxu0 0
        %1958 = vmatpush1.bf16.msra.mxu0 %v1944
        %1959 = vmatprep.subr.bf16.mxu0 0
        %1960 = vmatpush1.bf16.msra.mxu0 %v1945
        %1961 = vmatprep.subr.bf16.mxu0 0
        %1962 = vmatpush1.bf16.msra.mxu0 %v1946
        %1963 = vmatprep.subr.bf16.mxu0 0
        %1964 = vmatpush1.bf16.msra.mxu0 0
        %1965 = vmatprep.subr.bf16.mxu0 0
        %1966 = vmatpush1.bf16.msra.mxu0 0
        %1967 = vmatprep.subr.bf16.mxu0 0
        %1968 = vmatpush1.bf16.msra.mxu0 0
        %1969 = vmatprep.subr.bf16.mxu0 0
        %1970 = vmatpush1.bf16.msra.mxu0 0
        %1971 = vmatprep.subr.bf16.mxu0 0
        %1972 = vmatpush1.bf16.msra.mxu0 0
        %1973 = vmatprep.subr.bf16.mxu0 0
        %1974 = vmatpush1.bf16.msra.mxu0 0
        %1975 = vmatprep.subr.bf16.mxu0 0
        %1976 = vmatpush1.bf16.msra.mxu0 0
        %1977 = vmatprep.subr.bf16.mxu0 0
        %1978 = vmatpush1.bf16.msra.mxu0 0
        %1979 = vmatprep.subr.bf16.mxu0 0
        %1980 = vmatpush1.bf16.msra.mxu0 0
        %1981 = vmatprep.subr.bf16.mxu0 0
        %1982 = vmatpush1.bf16.msra.mxu0 0
        %1983 = vmatprep.subr.bf16.mxu0 0
        %1984 = vmatpush1.bf16.msra.mxu0 0
        %1985 = vmatprep.subr.bf16.mxu0 0
        %1986 = vmatpush1.bf16.msra.mxu0 0
        %1987 = vmatprep.mubr.bf16.mxu0 0
        %1988 = vmatmul.mubr.bf16.gmra.mrb[0].mxu0 %v1953
        %v1989 = vpop.f32.mrb[0].mxu0
        %v1990 = vadd.f32 %v1925, %v1989
        %v1991 = vpop.f32.mrb[0].mxu0
        %v1992 = vpop.f32.mrb[0].mxu0
        %v1993 = vpop.f32.mrb[0].mxu0
        %1994 = vdwg.mxu0
        %v1995 = vadd.f32 %v1990, %v883
        %v1996 = vld [vmem:[%s12] sm:$0x1]
        %v1997 = vld [vmem:[%s13] sm:$0x1]
        %v1998 = vsel %vm909, %v1995, 0.0
        %1999 = vadd.xlane.f32.xlu0 %v1998
        %v2000 = vpop.xlane.xlu0 %1999
        %v2001 = vrcp.pop 32.0
        %v2002 = vmul.f32 %v2000, %v2001
        %v2003 = vsub.f32 %v1995, %v2002
        %v2004 = vmul.f32 %v2003, %v2003
        %v2005 = vsel %vm909, %v2004, 0.0
        %2006 = vadd.xlane.f32.xlu0 %v2005
        %v2007 = vpop.xlane.xlu0 %2006
        %v2008 = vmul.f32 %v2007, %v2001
        %v2009 = vadd.f32 %v2008, 1e-05
        %v2010 = vrsqrt.pop %v2009
        %v2011 = vmul.f32 %v2003, %v2010
        %v2013 = vlaneseq
        %v2014 = vshrl.u32 %v2013, 7
        %v2015 = vsub.s32 0, %v2014
        %v2016 = vrot.slane %v1996, %v2015
        %v2018 = vmul.f32 %v2011, %v2016
        %v2020 = vlaneseq
        %v2021 = vshrl.u32 %v2020, 7
        %v2022 = vsub.s32 0, %v2021
        %v2023 = vrot.slane %v1997, %v2022
        %v2025 = vadd.f32 %v2018, %v2023
        %v2026 = vpack.c.bf16 %v2025, %v2025
        %v2027 = vld [vmem:[%s14] sm:$0xf]
        %v2028 = vld [vmem:[%s14 + $0x4] sm:$0xf]
        %v2029 = vld [vmem:[%s14 + $0x8] sm:$0xf]
        %v2030 = vld [vmem:[%s14 + $0xc] sm:$0xf]
        %v2031 = vld [vmem:[%s15] sm:$0x1]
        %v2033 = vlaneseq
        %v2034 = vshrl.u32 %v2033, 7
        %v2035 = vsub.s32 0, %v2034
        %v2036 = vrot.slane %v2031, %v2035
        %v2042 = vunpack.c.l.b16 %v2027
        %v2043 = vunpack.c.l.b16 %v2028
        %v2044 = vunpack.c.l.b16 %v2029
        %v2045 = vunpack.c.l.b16 %v2030
        %v2046 = vpack.c.b16 %v2043, %v2042
        %v2047 = vpack.c.b16 %v2045, %v2044
        %v2051 = vsel %vm909, %v2026, 0
        %2053 = vmatprep.subr.bf16.mxu0 0
        %2054 = vmatpush1.bf16.msra.mxu0 %v2046
        %2055 = vmatprep.subr.bf16.mxu0 0
        %2056 = vmatpush1.bf16.msra.mxu0 %v2047
        %2057 = vmatprep.subr.bf16.mxu0 0
        %2058 = vmatpush1.bf16.msra.mxu0 0
        %2059 = vmatprep.subr.bf16.mxu0 0
        %2060 = vmatpush1.bf16.msra.mxu0 0
        %2061 = vmatprep.subr.bf16.mxu0 0
        %2062 = vmatpush1.bf16.msra.mxu0 0
        %2063 = vmatprep.subr.bf16.mxu0 0
        %2064 = vmatpush1.bf16.msra.mxu0 0
        %2065 = vmatprep.subr.bf16.mxu0 0
        %2066 = vmatpush1.bf16.msra.mxu0 0
        %2067 = vmatprep.subr.bf16.mxu0 0
        %2068 = vmatpush1.bf16.msra.mxu0 0
        %2069 = vmatprep.subr.bf16.mxu0 0
        %2070 = vmatpush1.bf16.msra.mxu0 0
        %2071 = vmatprep.subr.bf16.mxu0 0
        %2072 = vmatpush1.bf16.msra.mxu0 0
        %2073 = vmatprep.subr.bf16.mxu0 0
        %2074 = vmatpush1.bf16.msra.mxu0 0
        %2075 = vmatprep.subr.bf16.mxu0 0
        %2076 = vmatpush1.bf16.msra.mxu0 0
        %2077 = vmatprep.subr.bf16.mxu0 0
        %2078 = vmatpush1.bf16.msra.mxu0 0
        %2079 = vmatprep.subr.bf16.mxu0 0
        %2080 = vmatpush1.bf16.msra.mxu0 0
        %2081 = vmatprep.subr.bf16.mxu0 0
        %2082 = vmatpush1.bf16.msra.mxu0 0
        %2083 = vmatprep.subr.bf16.mxu0 0
        %2084 = vmatpush1.bf16.msra.mxu0 0
        %2085 = vmatprep.mubr.bf16.mxu0 0
        %2086 = vmatmul.mubr.bf16.gmra.mrb[0].mxu0 %v2051
        %v2087 = vpop.f32.mrb[0].mxu0
        %v2088 = vadd.f32 %v2036, %v2087
        %v2089 = vpop.f32.mrb[0].mxu0
        %v2090 = vpop.f32.mrb[0].mxu0
        %v2091 = vpop.f32.mrb[0].mxu0
        %2092 = vdwg.mxu0
        %v2093 = vmax.f32 %v2088, 0.0
        %v2094 = vpack.c.bf16 %v2093, %v2093
        %v2095 = vld [vmem:[%s16] sm:$0xf]
        %v2096 = vld [vmem:[%s16 + $0x4] sm:$0xf]
        %v2097 = vld [vmem:[%s16 + $0x8] sm:$0xf]
        %v2098 = vld [vmem:[%s16 + $0xc] sm:$0xf]
        %v2099 = vld [vmem:[%s16 + $0x10] sm:$0xf]
        %v2100 = vld [vmem:[%s16 + $0x14] sm:$0xf]
        %v2101 = vld [vmem:[%s16 + $0x18] sm:$0xf]
        %v2102 = vld [vmem:[%s16 + $0x1c] sm:$0xf]
        %v2103 = vld [vmem:[%s17] sm:$0x1]
        %v2105 = vlaneseq
        %v2106 = vshrl.u32 %v2105, 7
        %v2107 = vsub.s32 0, %v2106
        %v2108 = vrot.slane %v2103, %v2107
        %v2118 = vunpack.c.l.b16 %v2095
        %v2119 = vunpack.c.l.b16 %v2096
        %v2120 = vunpack.c.l.b16 %v2097
        %v2121 = vunpack.c.l.b16 %v2098
        %v2122 = vunpack.c.l.b16 %v2099
        %v2123 = vunpack.c.l.b16 %v2100
        %v2124 = vunpack.c.l.b16 %v2101
        %v2125 = vunpack.c.l.b16 %v2102
        %v2126 = vpack.c.b16 %v2119, %v2118
        %v2127 = vpack.c.b16 %v2121, %v2120
        %v2128 = vpack.c.b16 %v2123, %v2122
        %v2129 = vpack.c.b16 %v2125, %v2124
        %v2135 = vsel %vm1951, %v2094, 0
        %2137 = vmatprep.subr.bf16.mxu0 0
        %2138 = vmatpush1.bf16.msra.mxu0 %v2126
        %2139 = vmatprep.subr.bf16.mxu0 0
        %2140 = vmatpush1.bf16.msra.mxu0 %v2127
        %2141 = vmatprep.subr.bf16.mxu0 0
        %2142 = vmatpush1.bf16.msra.mxu0 %v2128
        %2143 = vmatprep.subr.bf16.mxu0 0
        %2144 = vmatpush1.bf16.msra.mxu0 %v2129
        %2145 = vmatprep.subr.bf16.mxu0 0
        %2146 = vmatpush1.bf16.msra.mxu0 0
        %2147 = vmatprep.subr.bf16.mxu0 0
        %2148 = vmatpush1.bf16.msra.mxu0 0
        %2149 = vmatprep.subr.bf16.mxu0 0
        %2150 = vmatpush1.bf16.msra.mxu0 0
        %2151 = vmatprep.subr.bf16.mxu0 0
        %2152 = vmatpush1.bf16.msra.mxu0 0
        %2153 = vmatprep.subr.bf16.mxu0 0
        %2154 = vmatpush1.bf16.msra.mxu0 0
        %2155 = vmatprep.subr.bf16.mxu0 0
        %2156 = vmatpush1.bf16.msra.mxu0 0
        %2157 = vmatprep.subr.bf16.mxu0 0
        %2158 = vmatpush1.bf16.msra.mxu0 0
        %2159 = vmatprep.subr.bf16.mxu0 0
        %2160 = vmatpush1.bf16.msra.mxu0 0
        %2161 = vmatprep.subr.bf16.mxu0 0
        %2162 = vmatpush1.bf16.msra.mxu0 0
        %2163 = vmatprep.subr.bf16.mxu0 0
        %2164 = vmatpush1.bf16.msra.mxu0 0
        %2165 = vmatprep.subr.bf16.mxu0 0
        %2166 = vmatpush1.bf16.msra.mxu0 0
        %2167 = vmatprep.subr.bf16.mxu0 0
        %2168 = vmatpush1.bf16.msra.mxu0 0
        %2169 = vmatprep.mubr.bf16.mxu0 0
        %2170 = vmatmul.mubr.bf16.gmra.mrb[0].mxu0 %v2135
        %v2171 = vpop.f32.mrb[0].mxu0
        %v2172 = vadd.f32 %v2108, %v2171
        %v2173 = vpop.f32.mrb[0].mxu0
        %v2174 = vpop.f32.mrb[0].mxu0
        %v2175 = vpop.f32.mrb[0].mxu0
        %2176 = vdwg.mxu0
        %v2177 = vadd.f32 %v2172, %v2025
        %v2178 = vld [vmem:[%s18] sm:$0x1]
        %v2179 = vld [vmem:[%s19] sm:$0x1]
        %v2180 = vsel %vm909, %v2177, 0.0
        %2181 = vadd.xlane.f32.xlu0 %v2180
        %v2182 = vpop.xlane.xlu0 %2181
        %v2183 = vmul.f32 %v2182, %v2001
        %v2184 = vsub.f32 %v2177, %v2183
        %v2185 = vmul.f32 %v2184, %v2184
        %v2186 = vsel %vm909, %v2185, 0.0
        %2187 = vadd.xlane.f32.xlu0 %v2186
        %v2188 = vpop.xlane.xlu0 %2187
        %v2189 = vmul.f32 %v2188, %v2001
        %v2190 = vadd.f32 %v2189, 1e-05
        %v2191 = vrsqrt.pop %v2190
        %v2192 = vmul.f32 %v2184, %v2191
        %v2194 = vlaneseq
        %v2195 = vshrl.u32 %v2194, 7
        %v2196 = vsub.s32 0, %v2195
        %v2197 = vrot.slane %v2178, %v2196
        %v2199 = vmul.f32 %v2192, %v2197
        %v2201 = vlaneseq
        %v2202 = vshrl.u32 %v2201, 7
        %v2203 = vsub.s32 0, %v2202
        %v2204 = vrot.slane %v2179, %v2203
        %v2206 = vadd.f32 %v2199, %v2204
        %2207 = vst.msk [vmem:[%s727] sm:$0xff] %vm909, %v2206
        %s2208 = sand.u32 %s504, 1
        %s2209 = scalar_lea.sflag [#allocation7], %s2208
        %s2210 = sand.u32 %s504, 1
        %s2211 = smul.addr %s2210, 8
        %s2212 = scalar_lea.vmem [#allocation10], %s2211
        // Predicated region
        $region113: #{tpu_custom_call.1} parent=99 // pred_check
          %p2213 = pneg %p514
        $region114: #{tpu_custom_call.1} parent=99 // pred_check_branch
          %2215 = sbr.rel (%p2213) target = $region116
        $region115: #{tpu_custom_call.1} parent=99 // pred_region
          %s2217 = ssub.s32 128, 128
          %2218 = vsyncadd %s2209, %s2217
          %s2219 = sadd.s32 %s45, %s44
          %s2220 = smul.addr %s2219, 128
          %s2221 = scalar_lea.hbm %s20, %s2220
          %s2223 = sshll.u32 %s2212, 4
          %s2224 = int_to_ptr.vmem [resolvable:$true] %s2223
          %2226 = dma.vmem_to_hbm [thread:$0]  %s2224, 128, %s2221, %s2209
        $region116: #{tpu_custom_call.1} parent=99 // pred_fallthru
          _
      $region100: #{tpu_custom_call.1} parent=5 // pred_fallthru
        _
      %p2227 = scmp.le.s32.totalorder 2, %s35
      // Predicated region
      $region117: #{tpu_custom_call.1} parent=5 // pred_check
        %p2228 = pneg %p2227
      $region118: #{tpu_custom_call.1} parent=5 // pred_check_branch
        %2230 = sbr.rel (%p2228) target = $region120
      $region119: #{tpu_custom_call.1} parent=5 // pred_region
        %s2231 = ssub.s32 %s35, 2
        // Predicated region
        $region121: #{tpu_custom_call.1} parent=119 // pred_check
          %p2232 = pneg %p520
        $region122: #{tpu_custom_call.1} parent=119 // pred_check_branch
          %2234 = sbr.rel (%p2232) target = $region124
        $region123: #{tpu_custom_call.1} parent=119 // pred_region
          %s2235 = sand.u32 %s505, 1
          %s2236 = scalar_lea.sflag [#allocation7], %s2235
          %s2237 = sand.u32 %s505, 1
          %s2238 = smul.addr %s2237, 8
          %s2239 = scalar_lea.vmem [#allocation10], %s2238
          %2240 = dma.done %s2236, 128
        $region124: #{tpu_custom_call.1} parent=119 // pred_fallthru
          _
      $region120: #{tpu_custom_call.1} parent=5 // pred_fallthru
        _
    $region6: #{tpu_custom_call.1} parent=1 // loop_footer
      %s39 = sadd.s32 1, %s35
    $region7: #{tpu_custom_call.1} parent=1 // loop_footer_branch
      %34 = sbr.rel target = $region3
    $region8: #{tpu_custom_call.1} parent=1 // loop_exit
      _
    %2241 = vsyncpa [#allocation6], 1
    %s2242 = scalar_lea.sflag [#allocation6], 1
    %2243 = vsyncpa %s2242, 1
    %2244 = vsyncpa [#allocation9], 1
    %s2245 = scalar_lea.sflag [#allocation9], 1
    %2246 = vsyncpa %s2245, 1
    %2247 = vsyncpa [#allocation7], 1
    %s2248 = scalar_lea.sflag [#allocation7], 1
    %2249 = vsyncpa %s2248, 1

// kernel: tpu_custom_call.1
$region0: #{tpu_custom_call.1}
  #allocation0 [shape = 'u32[]', space=smem, size = 0x4, offset = 0x4, fixed_abs, tag = 'smem constant byte address 0x4 - core index']
  #allocation1 [shape = 'u32[144,128]{1,0:T(1,128)}', space=vmem, size = 0x12000, scoped, tag = 'internal scratch']
  #allocation2 [shape = 'bf16[8,64]{1,0:T(8,128)(2,1)}', space=vmem, size = 0x800, scoped, tag = 'scratch operand']
  #allocation3 [shape = 'bf16[8,64]{1,0:T(8,128)(2,1)}', space=vmem, size = 0x800, scoped, tag = 'scratch operand']
  #allocation4 [shape = 'bf16[8,64]{1,0:T(8,128)(2,1)}', space=vmem, size = 0x800, scoped, tag = 'scratch operand']
  %s0 = inlined_call_operand.vmem [shape: f32[2,8,32], index: 0, kind: input, shape index: {}]
  %s1 = inlined_call_operand.hbm [shape: bf16[2,8,32], index: 1, kind: input, shape index: {}]
  %s2 = inlined_call_operand.hbm [shape: bf16[2,8,32], index: 2, kind: input, shape index: {}]
  %s3 = inlined_call_operand.vmem [shape: f32[2,1,8], index: 3, kind: input, shape index: {}]
  %s4 = inlined_call_operand.vmem [shape: bf16[32,64], index: 4, kind: input, shape index: {}]
  %s5 = inlined_call_operand.vmem [shape: f32[1,64], index: 5, kind: input, shape index: {}]
  %s6 = inlined_call_operand.vmem [shape: bf16[32,64], index: 6, kind: input, shape index: {}]
  %s7 = inlined_call_operand.vmem [shape: f32[1,64], index: 7, kind: input, shape index: {}]
  %s8 = inlined_call_operand.vmem [shape: bf16[32,64], index: 8, kind: input, shape index: {}]
  %s9 = inlined_call_operand.vmem [shape: f32[1,64], index: 9, kind: input, shape index: {}]
  %s10 = inlined_call_operand.vmem [shape: bf16[64,32], index: 10, kind: input, shape index: {}]
  %s11 = inlined_call_operand.vmem [shape: f32[1,32], index: 11, kind: input, shape index: {}]
  %s12 = inlined_call_operand.vmem [shape: f32[1,32], index: 12, kind: input, shape index: {}]
  %s13 = inlined_call_operand.vmem [shape: f32[1,32], index: 13, kind: input, shape index: {}]
  %s14 = inlined_call_operand.vmem [shape: bf16[32,64], index: 14, kind: input, shape index: {}]
  %s15 = inlined_call_operand.vmem [shape: f32[1,64], index: 15, kind: input, shape index: {}]
  %s16 = inlined_call_operand.vmem [shape: bf16[64,32], index: 16, kind: input, shape index: {}]
  %s17 = inlined_call_operand.vmem [shape: f32[1,32], index: 17, kind: input, shape index: {}]
  %s18 = inlined_call_operand.vmem [shape: f32[1,32], index: 18, kind: input, shape index: {}]
  %s19 = inlined_call_operand.vmem [shape: f32[1,32], index: 19, kind: input, shape index: {}]
  %s20 = inlined_call_operand.hbm [shape: f32[2,8,32], index: 20, kind: output, shape index: {}]
  %s21 = sld [smem:[#allocation0]]
  $region125: #{tpu_custom_call.1} parent=0
    _
  %s23 = ssub.s32 1, %s21
  %s24 = scalar_select 0, %s23, %s21
  $region1: #{tpu_custom_call.1} parent=0
    #allocation5 [shape = 'u8[4096]{0}', space=vmem, size = 0x1000, scoped, tag = 'input window, operand 1']
    #allocation6 [shape = 's32[2]{0}', space=sflag, size = 0x8, scoped, tag = 'scoped memory for tpu_custom_call.1']
    #allocation7 [shape = 's32[2]{0}', space=sflag, size = 0x8, scoped, tag = 'scoped memory for tpu_custom_call.1']
    #allocation8 [shape = 'u8[4096]{0}', space=vmem, size = 0x1000, scoped, tag = 'input window, operand 2']
    #allocation9 [shape = 's32[2]{0}', space=sflag, size = 0x8, scoped, tag = 'scoped memory for tpu_custom_call.1']
    #allocation10 [shape = 'u8[8192]{0}', space=vmem, size = 0x2000, scoped, tag = 'output window, operand 0']
    %25 = vsyncpa [#allocation6], 0
    %s26 = scalar_lea.sflag [#allocation6], 1
    %27 = vsyncpa %s26, 0
    %28 = vsyncpa [#allocation9], 0
    %s29 = scalar_lea.sflag [#allocation9], 1
    %30 = vsyncpa %s29, 0
    %31 = vsyncpa [#allocation7], 0
    %s32 = scalar_lea.sflag [#allocation7], 1
    %33 = vsyncpa %s32, 0
    loop: start=0, step=1, limit=4
    $region2: #{tpu_custom_call.1} parent=1 // loop_pre_header
      _
    $region3: #{tpu_custom_call.1} parent=1 // loop_header
      %s35 = sphi 0, %s39
      %p36 = scmp.ge.s32.totalorder %s35, 4
      %s42 = sphi 0, %s54
      %s43 = sphi 0, %s50
      %s44 = sphi 0, %s42
      %s45 = sphi 0, %s43
      %s46 = sphi 0, %s44
      %s47 = sphi 0, %s45
      %s59 = sphi 0, %s61
      %s62 = sphi 0, %s59
      %s63 = sphi 0, %s62
      %s79 = sphi 0, %s63
      %s85 = sphi 0, %s87
      %s88 = sphi 0, %s85
      %s89 = sphi 0, %s88
      %s105 = sphi 0, %s89
      %s111 = sphi 0, %s113
      %s114 = sphi 0, %s111
      %s115 = sphi 0, %s114
      %s131 = sphi 0, %s115
      %s137 = sphi 0, %s139
      %s140 = sphi 0, %s137
      %s141 = sphi 0, %s140
      %s157 = sphi 0, %s141
      %s161 = sphi 0, %s161
      %s163 = sphi 0, %s161
      %s164 = sphi 0, %s163
      %s178 = sphi 0, %s164
      %s182 = sphi 0, %s182
      %s184 = sphi 0, %s182
      %s185 = sphi 0, %s184
      %s199 = sphi 0, %s185
      %s203 = sphi 0, %s203
      %s205 = sphi 0, %s203
      %s206 = sphi 0, %s205
      %s220 = sphi 0, %s206
      %s224 = sphi 0, %s224
      %s226 = sphi 0, %s224
      %s227 = sphi 0, %s226
      %s241 = sphi 0, %s227
      %s245 = sphi 0, %s245
      %s247 = sphi 0, %s245
      %s248 = sphi 0, %s247
      %s262 = sphi 0, %s248
      %s266 = sphi 0, %s266
      %s268 = sphi 0, %s266
      %s269 = sphi 0, %s268
      %s283 = sphi 0, %s269
      %s287 = sphi 0, %s287
      %s289 = sphi 0, %s287
      %s290 = sphi 0, %s289
      %s304 = sphi 0, %s290
      %s308 = sphi 0, %s308
      %s310 = sphi 0, %s308
      %s311 = sphi 0, %s310
      %s325 = sphi 0, %s311
      %s329 = sphi 0, %s329
      %s331 = sphi 0, %s329
      %s332 = sphi 0, %s331
      %s346 = sphi 0, %s332
      %s350 = sphi 0, %s350
      %s352 = sphi 0, %s350
      %s353 = sphi 0, %s352
      %s367 = sphi 0, %s353
      %s371 = sphi 0, %s371
      %s373 = sphi 0, %s371
      %s374 = sphi 0, %s373
      %s388 = sphi 0, %s374
      %s392 = sphi 0, %s392
      %s394 = sphi 0, %s392
      %s395 = sphi 0, %s394
      %s409 = sphi 0, %s395
      %s413 = sphi 0, %s413
      %s415 = sphi 0, %s413
      %s416 = sphi 0, %s415
      %s430 = sphi 0, %s416
      %s434 = sphi 0, %s434
      %s436 = sphi 0, %s434
      %s437 = sphi 0, %s436
      %s451 = sphi 0, %s437
      %s455 = sphi 0, %s455
      %s457 = sphi 0, %s455
      %s458 = sphi 0, %s457
      %s472 = sphi 0, %s458
      %s476 = sphi 0, %s476
      %s478 = sphi 0, %s476
      %s479 = sphi 0, %s478
      %s493 = sphi 0, %s479
      %s501 = sphi 0, %s503
      %s504 = sphi 0, %s501
      %s505 = sphi 0, %s504
      %s521 = sphi 0, %s505
    $region4: #{tpu_custom_call.1} parent=1 // loop_header_branch
      %38 = sbr.rel (%p36) target = $region8
    $region5: #{tpu_custom_call.1} parent=1 // loop_body
      %s40 = ssub.s32 %s35, 1
      %s41 = ssub.s32 %s35, 2
      %s48 = sadd.s32 1, %s43
      %p49 = scmp.ge.s32.totalorder %s48, 1
      %s50 = scalar_select %p49, 0, %s48
      %s51 = sadd.s32 1, %s42
      %s52 = scalar_select %p49, %s51, %s42
      %p53 = scmp.ge.s32.totalorder %s52, 2
      %s54 = scalar_select %p53, 0, %s52
      %s55 = ssub.s32 %s42, %s54
      %s56 = ssub.s32 %s43, %s50
      %s57 = sor.u32 %s55, %s56
      %p58 = scmp.eq.s32.totalorder %s57, 0
      %s60 = sadd.s32 %s59, 1
      %s61 = scalar_select %p58, %s59, %s60
      %p64 = pneg %p58
      %p65 = scmp.eq.s32.totalorder %s35, 1
      %p66 = por %p64, %p65
      %p67 = scmp.ne.s32.totalorder %s59, %s62
      %p68 = scmp.eq.s32.totalorder %s35, 0
      %p69 = por %p67, %p68
      %p70 = scmp.ne.s32.totalorder %s59, %s62
      %p71 = scmp.eq.s32.totalorder %s40, 1
      %p72 = por %p70, %p71
      %p73 = scmp.ne.s32.totalorder %s62, %s63
      %p74 = scmp.eq.s32.totalorder %s40, 0
      %p75 = por %p73, %p74
      %p76 = scmp.ne.s32.totalorder %s62, %s63
      %p77 = scmp.eq.s32.totalorder %s41, 1
      %p78 = por %p76, %p77
      %p80 = scmp.ne.s32.totalorder %s63, %s79
      %p81 = scmp.eq.s32.totalorder %s41, 0
      %p82 = por %p80, %p81
      %s83 = ssub.s32 %s42, %s54
      %p84 = scmp.eq.s32.totalorder %s83, 0
      %s86 = sadd.s32 %s85, 1
      %s87 = scalar_select %p84, %s85, %s86
      %p90 = pneg %p84
      %p91 = scmp.eq.s32.totalorder %s35, 1
      %p92 = por %p90, %p91
      %p93 = scmp.ne.s32.totalorder %s85, %s88
      %p94 = scmp.eq.s32.totalorder %s35, 0
      %p95 = por %p93, %p94
      %p96 = scmp.ne.s32.totalorder %s85, %s88
      %p97 = scmp.eq.s32.totalorder %s40, 1
      %p98 = por %p96, %p97
      %p99 = scmp.ne.s32.totalorder %s88, %s89
      %p100 = scmp.eq.s32.totalorder %s40, 0
      %p101 = por %p99, %p100
      %p102 = scmp.ne.s32.totalorder %s88, %s89
      %p103 = scmp.eq.s32.totalorder %s41, 1
      %p104 = por %p102, %p103
      %p106 = scmp.ne.s32.totalorder %s89, %s105
      %p107 = scmp.eq.s32.totalorder %s41, 0
      %p108 = por %p106, %p107
      %s109 = ssub.s32 %s42, %s54
      %p110 = scmp.eq.s32.totalorder %s109, 0
      %s112 = sadd.s32 %s111, 1
      %s113 = scalar_select %p110, %s111, %s112
      %p116 = pneg %p110
      %p117 = scmp.eq.s32.totalorder %s35, 1
      %p118 = por %p116, %p117
      %p119 = scmp.ne.s32.totalorder %s111, %s114
      %p120 = scmp.eq.s32.totalorder %s35, 0
      %p121 = por %p119, %p120
      %p122 = scmp.ne.s32.totalorder %s111, %s114
      %p123 = scmp.eq.s32.totalorder %s40, 1
      %p124 = por %p122, %p123
      %p125 = scmp.ne.s32.totalorder %s114, %s115
      %p126 = scmp.eq.s32.totalorder %s40, 0
      %p127 = por %p125, %p126
      %p128 = scmp.ne.s32.totalorder %s114, %s115
      %p129 = scmp.eq.s32.totalorder %s41, 1
      %p130 = por %p128, %p129
      %p132 = scmp.ne.s32.totalorder %s115, %s131
      %p133 = scmp.eq.s32.totalorder %s41, 0
      %p134 = por %p132, %p133
      %s135 = ssub.s32 %s42, %s54
      %p136 = scmp.eq.s32.totalorder %s135, 0
      %s138 = sadd.s32 %s137, 1
      %s139 = scalar_select %p136, %s137, %s138
      %p142 = pneg %p136
      %p143 = scmp.eq.s32.totalorder %s35, 1
      %p144 = por %p142, %p143
      %p145 = scmp.ne.s32.totalorder %s137, %s140
      %p146 = scmp.eq.s32.totalorder %s35, 0
      %p147 = por %p145, %p146
      %p148 = scmp.ne.s32.totalorder %s137, %s140
      %p149 = scmp.eq.s32.totalorder %s40, 1
      %p150 = por %p148, %p149
      %p151 = scmp.ne.s32.totalorder %s140, %s141
      %p152 = scmp.eq.s32.totalorder %s40, 0
      %p153 = por %p151, %p152
      %p154 = scmp.ne.s32.totalorder %s140, %s141
      %p155 = scmp.eq.s32.totalorder %s41, 1
      %p156 = por %p154, %p155
      %p158 = scmp.ne.s32.totalorder %s141, %s157
      %p159 = scmp.eq.s32.totalorder %s41, 0
      %p160 = por %p158, %p159
      %s162 = sadd.s32 %s161, 1
      %p165 = scmp.eq.s32.totalorder %s35, 1
      %p166 = scmp.ne.s32.totalorder %s161, %s163
      %p167 = scmp.eq.s32.totalorder %s35, 0
      %p168 = por %p166, %p167
      %p169 = scmp.ne.s32.totalorder %s161, %s163
      %p170 = scmp.eq.s32.totalorder %s40, 1
      %p171 = por %p169, %p170
      %p172 = scmp.ne.s32.totalorder %s163, %s164
      %p173 = scmp.eq.s32.totalorder %s40, 0
      %p174 = por %p172, %p173
      %p175 = scmp.ne.s32.totalorder %s163, %s164
      %p176 = scmp.eq.s32.totalorder %s41, 1
      %p177 = por %p175, %p176
      %p179 = scmp.ne.s32.totalorder %s164, %s178
      %p180 = scmp.eq.s32.totalorder %s41, 0
      %p181 = por %p179, %p180
      %s183 = sadd.s32 %s182, 1
      %p186 = scmp.eq.s32.totalorder %s35, 1
      %p187 = scmp.ne.s32.totalorder %s182, %s184
      %p188 = scmp.eq.s32.totalorder %s35, 0
      %p189 = por %p187, %p188
      %p190 = scmp.ne.s32.totalorder %s182, %s184
      %p191 = scmp.eq.s32.totalorder %s40, 1
      %p192 = por %p190, %p191
      %p193 = scmp.ne.s32.totalorder %s184, %s185
      %p194 = scmp.eq.s32.totalorder %s40, 0
      %p195 = por %p193, %p194
      %p196 = scmp.ne.s32.totalorder %s184, %s185
      %p197 = scmp.eq.s32.totalorder %s41, 1
      %p198 = por %p196, %p197
      %p200 = scmp.ne.s32.totalorder %s185, %s199
      %p201 = scmp.eq.s32.totalorder %s41, 0
      %p202 = por %p200, %p201
      %s204 = sadd.s32 %s203, 1
      %p207 = scmp.eq.s32.totalorder %s35, 1
      %p208 = scmp.ne.s32.totalorder %s203, %s205
      %p209 = scmp.eq.s32.totalorder %s35, 0
      %p210 = por %p208, %p209
      %p211 = scmp.ne.s32.totalorder %s203, %s205
      %p212 = scmp.eq.s32.totalorder %s40, 1
      %p213 = por %p211, %p212
      %p214 = scmp.ne.s32.totalorder %s205, %s206
      %p215 = scmp.eq.s32.totalorder %s40, 0
      %p216 = por %p214, %p215
      %p217 = scmp.ne.s32.totalorder %s205, %s206
      %p218 = scmp.eq.s32.totalorder %s41, 1
      %p219 = por %p217, %p218
      %p221 = scmp.ne.s32.totalorder %s206, %s220
      %p222 = scmp.eq.s32.totalorder %s41, 0
      %p223 = por %p221, %p222
      %s225 = sadd.s32 %s224, 1
      %p228 = scmp.eq.s32.totalorder %s35, 1
      %p229 = scmp.ne.s32.totalorder %s224, %s226
      %p230 = scmp.eq.s32.totalorder %s35, 0
      %p231 = por %p229, %p230
      %p232 = scmp.ne.s32.totalorder %s224, %s226
      %p233 = scmp.eq.s32.totalorder %s40, 1
      %p234 = por %p232, %p233
      %p235 = scmp.ne.s32.totalorder %s226, %s227
      %p236 = scmp.eq.s32.totalorder %s40, 0
      %p237 = por %p235, %p236
      %p238 = scmp.ne.s32.totalorder %s226, %s227
      %p239 = scmp.eq.s32.totalorder %s41, 1
      %p240 = por %p238, %p239
      %p242 = scmp.ne.s32.totalorder %s227, %s241
      %p243 = scmp.eq.s32.totalorder %s41, 0
      %p244 = por %p242, %p243
      %s246 = sadd.s32 %s245, 1
      %p249 = scmp.eq.s32.totalorder %s35, 1
      %p250 = scmp.ne.s32.totalorder %s245, %s247
      %p251 = scmp.eq.s32.totalorder %s35, 0
      %p252 = por %p250, %p251
      %p253 = scmp.ne.s32.totalorder %s245, %s247
      %p254 = scmp.eq.s32.totalorder %s40, 1
      %p255 = por %p253, %p254
      %p256 = scmp.ne.s32.totalorder %s247, %s248
      %p257 = scmp.eq.s32.totalorder %s40, 0
      %p258 = por %p256, %p257
      %p259 = scmp.ne.s32.totalorder %s247, %s248
      %p260 = scmp.eq.s32.totalorder %s41, 1
      %p261 = por %p259, %p260
      %p263 = scmp.ne.s32.totalorder %s248, %s262
      %p264 = scmp.eq.s32.totalorder %s41, 0
      %p265 = por %p263, %p264
      %s267 = sadd.s32 %s266, 1
      %p270 = scmp.eq.s32.totalorder %s35, 1
      %p271 = scmp.ne.s32.totalorder %s266, %s268
      %p272 = scmp.eq.s32.totalorder %s35, 0
      %p273 = por %p271, %p272
      %p274 = scmp.ne.s32.totalorder %s266, %s268
      %p275 = scmp.eq.s32.totalorder %s40, 1
      %p276 = por %p274, %p275
      %p277 = scmp.ne.s32.totalorder %s268, %s269
      %p278 = scmp.eq.s32.totalorder %s40, 0
      %p279 = por %p277, %p278
      %p280 = scmp.ne.s32.totalorder %s268, %s269
      %p281 = scmp.eq.s32.totalorder %s41, 1
      %p282 = por %p280, %p281
      %p284 = scmp.ne.s32.totalorder %s269, %s283
      %p285 = scmp.eq.s32.totalorder %s41, 0
      %p286 = por %p284, %p285
      %s288 = sadd.s32 %s287, 1
      %p291 = scmp.eq.s32.totalorder %s35, 1
      %p292 = scmp.ne.s32.totalorder %s287, %s289
      %p293 = scmp.eq.s32.totalorder %s35, 0
      %p294 = por %p292, %p293
      %p295 = scmp.ne.s32.totalorder %s287, %s289
      %p296 = scmp.eq.s32.totalorder %s40, 1
      %p297 = por %p295, %p296
      %p298 = scmp.ne.s32.totalorder %s289, %s290
      %p299 = scmp.eq.s32.totalorder %s40, 0
      %p300 = por %p298, %p299
      %p301 = scmp.ne.s32.totalorder %s289, %s290
      %p302 = scmp.eq.s32.totalorder %s41, 1
      %p303 = por %p301, %p302
      %p305 = scmp.ne.s32.totalorder %s290, %s304
      %p306 = scmp.eq.s32.totalorder %s41, 0
      %p307 = por %p305, %p306
      %s309 = sadd.s32 %s308, 1
      %p312 = scmp.eq.s32.totalorder %s35, 1
      %p313 = scmp.ne.s32.totalorder %s308, %s310
      %p314 = scmp.eq.s32.totalorder %s35, 0
      %p315 = por %p313, %p314
      %p316 = scmp.ne.s32.totalorder %s308, %s310
      %p317 = scmp.eq.s32.totalorder %s40, 1
      %p318 = por %p316, %p317
      %p319 = scmp.ne.s32.totalorder %s310, %s311
      %p320 = scmp.eq.s32.totalorder %s40, 0
      %p321 = por %p319, %p320
      %p322 = scmp.ne.s32.totalorder %s310, %s311
      %p323 = scmp.eq.s32.totalorder %s41, 1
      %p324 = por %p322, %p323
      %p326 = scmp.ne.s32.totalorder %s311, %s325
      %p327 = scmp.eq.s32.totalorder %s41, 0
      %p328 = por %p326, %p327
      %s330 = sadd.s32 %s329, 1
      %p333 = scmp.eq.s32.totalorder %s35, 1
      %p334 = scmp.ne.s32.totalorder %s329, %s331
      %p335 = scmp.eq.s32.totalorder %s35, 0
      %p336 = por %p334, %p335
      %p337 = scmp.ne.s32.totalorder %s329, %s331
      %p338 = scmp.eq.s32.totalorder %s40, 1
      %p339 = por %p337, %p338
      %p340 = scmp.ne.s32.totalorder %s331, %s332
      %p341 = scmp.eq.s32.totalorder %s40, 0
      %p342 = por %p340, %p341
      %p343 = scmp.ne.s32.totalorder %s331, %s332
      %p344 = scmp.eq.s32.totalorder %s41, 1
      %p345 = por %p343, %p344
      %p347 = scmp.ne.s32.totalorder %s332, %s346
      %p348 = scmp.eq.s32.totalorder %s41, 0
      %p349 = por %p347, %p348
      %s351 = sadd.s32 %s350, 1
      %p354 = scmp.eq.s32.totalorder %s35, 1
      %p355 = scmp.ne.s32.totalorder %s350, %s352
      %p356 = scmp.eq.s32.totalorder %s35, 0
      %p357 = por %p355, %p356
      %p358 = scmp.ne.s32.totalorder %s350, %s352
      %p359 = scmp.eq.s32.totalorder %s40, 1
      %p360 = por %p358, %p359
      %p361 = scmp.ne.s32.totalorder %s352, %s353
      %p362 = scmp.eq.s32.totalorder %s40, 0
      %p363 = por %p361, %p362
      %p364 = scmp.ne.s32.totalorder %s352, %s353
      %p365 = scmp.eq.s32.totalorder %s41, 1
      %p366 = por %p364, %p365
      %p368 = scmp.ne.s32.totalorder %s353, %s367
      %p369 = scmp.eq.s32.totalorder %s41, 0
      %p370 = por %p368, %p369
      %s372 = sadd.s32 %s371, 1
      %p375 = scmp.eq.s32.totalorder %s35, 1
      %p376 = scmp.ne.s32.totalorder %s371, %s373
      %p377 = scmp.eq.s32.totalorder %s35, 0
      %p378 = por %p376, %p377
      %p379 = scmp.ne.s32.totalorder %s371, %s373
      %p380 = scmp.eq.s32.totalorder %s40, 1
      %p381 = por %p379, %p380
      %p382 = scmp.ne.s32.totalorder %s373, %s374
      %p383 = scmp.eq.s32.totalorder %s40, 0
      %p384 = por %p382, %p383
      %p385 = scmp.ne.s32.totalorder %s373, %s374
      %p386 = scmp.eq.s32.totalorder %s41, 1
      %p387 = por %p385, %p386
      %p389 = scmp.ne.s32.totalorder %s374, %s388
      %p390 = scmp.eq.s32.totalorder %s41, 0
      %p391 = por %p389, %p390
      %s393 = sadd.s32 %s392, 1
      %p396 = scmp.eq.s32.totalorder %s35, 1
      %p397 = scmp.ne.s32.totalorder %s392, %s394
      %p398 = scmp.eq.s32.totalorder %s35, 0
      %p399 = por %p397, %p398
      %p400 = scmp.ne.s32.totalorder %s392, %s394
      %p401 = scmp.eq.s32.totalorder %s40, 1
      %p402 = por %p400, %p401
      %p403 = scmp.ne.s32.totalorder %s394, %s395
      %p404 = scmp.eq.s32.totalorder %s40, 0
      %p405 = por %p403, %p404
      %p406 = scmp.ne.s32.totalorder %s394, %s395
      %p407 = scmp.eq.s32.totalorder %s41, 1
      %p408 = por %p406, %p407
      %p410 = scmp.ne.s32.totalorder %s395, %s409
      %p411 = scmp.eq.s32.totalorder %s41, 0
      %p412 = por %p410, %p411
      %s414 = sadd.s32 %s413, 1
      %p417 = scmp.eq.s32.totalorder %s35, 1
      %p418 = scmp.ne.s32.totalorder %s413, %s415
      %p419 = scmp.eq.s32.totalorder %s35, 0
      %p420 = por %p418, %p419
      %p421 = scmp.ne.s32.totalorder %s413, %s415
      %p422 = scmp.eq.s32.totalorder %s40, 1
      %p423 = por %p421, %p422
      %p424 = scmp.ne.s32.totalorder %s415, %s416
      %p425 = scmp.eq.s32.totalorder %s40, 0
      %p426 = por %p424, %p425
      %p427 = scmp.ne.s32.totalorder %s415, %s416
      %p428 = scmp.eq.s32.totalorder %s41, 1
      %p429 = por %p427, %p428
      %p431 = scmp.ne.s32.totalorder %s416, %s430
      %p432 = scmp.eq.s32.totalorder %s41, 0
      %p433 = por %p431, %p432
      %s435 = sadd.s32 %s434, 1
      %p438 = scmp.eq.s32.totalorder %s35, 1
      %p439 = scmp.ne.s32.totalorder %s434, %s436
      %p440 = scmp.eq.s32.totalorder %s35, 0
      %p441 = por %p439, %p440
      %p442 = scmp.ne.s32.totalorder %s434, %s436
      %p443 = scmp.eq.s32.totalorder %s40, 1
      %p444 = por %p442, %p443
      %p445 = scmp.ne.s32.totalorder %s436, %s437
      %p446 = scmp.eq.s32.totalorder %s40, 0
      %p447 = por %p445, %p446
      %p448 = scmp.ne.s32.totalorder %s436, %s437
      %p449 = scmp.eq.s32.totalorder %s41, 1
      %p450 = por %p448, %p449
      %p452 = scmp.ne.s32.totalorder %s437, %s451
      %p453 = scmp.eq.s32.totalorder %s41, 0
      %p454 = por %p452, %p453
      %s456 = sadd.s32 %s455, 1
      %p459 = scmp.eq.s32.totalorder %s35, 1
      %p460 = scmp.ne.s32.totalorder %s455, %s457
      %p461 = scmp.eq.s32.totalorder %s35, 0
      %p462 = por %p460, %p461
      %p463 = scmp.ne.s32.totalorder %s455, %s457
      %p464 = scmp.eq.s32.totalorder %s40, 1
      %p465 = por %p463, %p464
      %p466 = scmp.ne.s32.totalorder %s457, %s458
      %p467 = scmp.eq.s32.totalorder %s40, 0
      %p468 = por %p466, %p467
      %p469 = scmp.ne.s32.totalorder %s457, %s458
      %p470 = scmp.eq.s32.totalorder %s41, 1
      %p471 = por %p469, %p470
      %p473 = scmp.ne.s32.totalorder %s458, %s472
      %p474 = scmp.eq.s32.totalorder %s41, 0
      %p475 = por %p473, %p474
      %s477 = sadd.s32 %s476, 1
      %p480 = scmp.eq.s32.totalorder %s35, 1
      %p481 = scmp.ne.s32.totalorder %s476, %s478
      %p482 = scmp.eq.s32.totalorder %s35, 0
      %p483 = por %p481, %p482
      %p484 = scmp.ne.s32.totalorder %s476, %s478
      %p485 = scmp.eq.s32.totalorder %s40, 1
      %p486 = por %p484, %p485
      %p487 = scmp.ne.s32.totalorder %s478, %s479
      %p488 = scmp.eq.s32.totalorder %s40, 0
      %p489 = por %p487, %p488
      %p490 = scmp.ne.s32.totalorder %s478, %s479
      %p491 = scmp.eq.s32.totalorder %s41, 1
      %p492 = por %p490, %p491
      %p494 = scmp.ne.s32.totalorder %s479, %s493
      %p495 = scmp.eq.s32.totalorder %s41, 0
      %p496 = por %p494, %p495
      %s497 = ssub.s32 %s42, %s54
      %s498 = ssub.s32 %s43, %s50
      %s499 = sor.u32 %s497, %s498
      %p500 = scmp.eq.s32.totalorder %s499, 0
      %s502 = sadd.s32 %s501, 1
      %s503 = scalar_select %p500, %s501, %s502
      %p506 = pneg %p500
      %p507 = scmp.eq.s32.totalorder %s35, 1
      %p508 = por %p506, %p507
      %p509 = scmp.ne.s32.totalorder %s501, %s504
      %p510 = scmp.eq.s32.totalorder %s35, 0
      %p511 = por %p509, %p510
      %p512 = scmp.ne.s32.totalorder %s501, %s504
      %p513 = scmp.eq.s32.totalorder %s40, 1
      %p514 = por %p512, %p513
      %p515 = scmp.ne.s32.totalorder %s504, %s505
      %p516 = scmp.eq.s32.totalorder %s40, 0
      %p517 = por %p515, %p516
      %p518 = scmp.ne.s32.totalorder %s504, %s505
      %p519 = scmp.eq.s32.totalorder %s41, 1
      %p520 = por %p518, %p519
      %p522 = scmp.ne.s32.totalorder %s505, %s521
      %p523 = scmp.eq.s32.totalorder %s41, 0
      %p524 = por %p522, %p523
      %p525 = scmp.le.s32.totalorder 1, %s35
      %p526 = scmp.lt.s32.totalorder %s35, 3
      %p527 = pnand %p525, %p526
      %p528 = pneg %p527
      // Predicated region
      $region9: #{tpu_custom_call.1} parent=5 // pred_check
        _
      $region10: #{tpu_custom_call.1} parent=5 // pred_check_branch
        %530 = sbr.rel (%p527) target = $region12
      $region11: #{tpu_custom_call.1} parent=5 // pred_region
        %s531 = ssub.s32 %s35, 1
        // Predicated region
        $region13: #{tpu_custom_call.1} parent=11 // pred_check
          %p532 = pneg %p174
        $region14: #{tpu_custom_call.1} parent=11 // pred_check_branch
          %534 = sbr.rel (%p532) target = $region16
        $region15: #{tpu_custom_call.1} parent=11 // pred_region
          _
        $region16: #{tpu_custom_call.1} parent=11 // pred_fallthru
          _
        // Predicated region
        $region17: #{tpu_custom_call.1} parent=11 // pred_check
          %p535 = pneg %p195
        $region18: #{tpu_custom_call.1} parent=11 // pred_check_branch
          %537 = sbr.rel (%p535) target = $region20
        $region19: #{tpu_custom_call.1} parent=11 // pred_region
          _
        $region20: #{tpu_custom_call.1} parent=11 // pred_fallthru
          _
        // Predicated region
        $region21: #{tpu_custom_call.1} parent=11 // pred_check
          %p538 = pneg %p216
        $region22: #{tpu_custom_call.1} parent=11 // pred_check_branch
          %540 = sbr.rel (%p538) target = $region24
        $region23: #{tpu_custom_call.1} parent=11 // pred_region
          _
        $region24: #{tpu_custom_call.1} parent=11 // pred_fallthru
          _
        // Predicated region
        $region25: #{tpu_custom_call.1} parent=11 // pred_check
          %p541 = pneg %p237
        $region26: #{tpu_custom_call.1} parent=11 // pred_check_branch
          %543 = sbr.rel (%p541) target = $region28
        $region27: #{tpu_custom_call.1} parent=11 // pred_region
          _
        $region28: #{tpu_custom_call.1} parent=11 // pred_fallthru
          _
        // Predicated region
        $region29: #{tpu_custom_call.1} parent=11 // pred_check
          %p544 = pneg %p258
        $region30: #{tpu_custom_call.1} parent=11 // pred_check_branch
          %546 = sbr.rel (%p544) target = $region32
        $region31: #{tpu_custom_call.1} parent=11 // pred_region
          _
        $region32: #{tpu_custom_call.1} parent=11 // pred_fallthru
          _
        // Predicated region
        $region33: #{tpu_custom_call.1} parent=11 // pred_check
          %p547 = pneg %p279
        $region34: #{tpu_custom_call.1} parent=11 // pred_check_branch
          %549 = sbr.rel (%p547) target = $region36
        $region35: #{tpu_custom_call.1} parent=11 // pred_region
          _
        $region36: #{tpu_custom_call.1} parent=11 // pred_fallthru
          _
        // Predicated region
        $region37: #{tpu_custom_call.1} parent=11 // pred_check
          %p550 = pneg %p300
        $region38: #{tpu_custom_call.1} parent=11 // pred_check_branch
          %552 = sbr.rel (%p550) target = $region40
        $region39: #{tpu_custom_call.1} parent=11 // pred_region
          _
        $region40: #{tpu_custom_call.1} parent=11 // pred_fallthru
          _
        // Predicated region
        $region41: #{tpu_custom_call.1} parent=11 // pred_check
          %p553 = pneg %p321
        $region42: #{tpu_custom_call.1} parent=11 // pred_check_branch
          %555 = sbr.rel (%p553) target = $region44
        $region43: #{tpu_custom_call.1} parent=11 // pred_region
          _
        $region44: #{tpu_custom_call.1} parent=11 // pred_fallthru
          _
        // Predicated region
        $region45: #{tpu_custom_call.1} parent=11 // pred_check
          %p556 = pneg %p342
        $region46: #{tpu_custom_call.1} parent=11 // pred_check_branch
          %558 = sbr.rel (%p556) target = $region48
        $region47: #{tpu_custom_call.1} parent=11 // pred_region
          _
        $region48: #{tpu_custom_call.1} parent=11 // pred_fallthru
          _
        // Predicated region
        $region49: #{tpu_custom_call.1} parent=11 // pred_check
          %p559 = pneg %p363
        $region50: #{tpu_custom_call.1} parent=11 // pred_check_branch
          %561 = sbr.rel (%p559) target = $region52
        $region51: #{tpu_custom_call.1} parent=11 // pred_region
          _
        $region52: #{tpu_custom_call.1} parent=11 // pred_fallthru
          _
        // Predicated region
        $region53: #{tpu_custom_call.1} parent=11 // pred_check
          %p562 = pneg %p384
        $region54: #{tpu_custom_call.1} parent=11 // pred_check_branch
          %564 = sbr.rel (%p562) target = $region56
        $region55: #{tpu_custom_call.1} parent=11 // pred_region
          _
        $region56: #{tpu_custom_call.1} parent=11 // pred_fallthru
          _
        // Predicated region
        $region57: #{tpu_custom_call.1} parent=11 // pred_check
          %p565 = pneg %p405
        $region58: #{tpu_custom_call.1} parent=11 // pred_check_branch
          %567 = sbr.rel (%p565) target = $region60
        $region59: #{tpu_custom_call.1} parent=11 // pred_region
          _
        $region60: #{tpu_custom_call.1} parent=11 // pred_fallthru
          _
        // Predicated region
        $region61: #{tpu_custom_call.1} parent=11 // pred_check
          %p568 = pneg %p426
        $region62: #{tpu_custom_call.1} parent=11 // pred_check_branch
          %570 = sbr.rel (%p568) target = $region64
        $region63: #{tpu_custom_call.1} parent=11 // pred_region
          _
        $region64: #{tpu_custom_call.1} parent=11 // pred_fallthru
          _
        // Predicated region
        $region65: #{tpu_custom_call.1} parent=11 // pred_check
          %p571 = pneg %p447
        $region66: #{tpu_custom_call.1} parent=11 // pred_check_branch
          %573 = sbr.rel (%p571) target = $region68
        $region67: #{tpu_custom_call.1} parent=11 // pred_region
          _
        $region68: #{tpu_custom_call.1} parent=11 // pred_fallthru
          _
        // Predicated region
        $region69: #{tpu_custom_call.1} parent=11 // pred_check
          %p574 = pneg %p468
        $region70: #{tpu_custom_call.1} parent=11 // pred_check_branch
          %576 = sbr.rel (%p574) target = $region72
        $region71: #{tpu_custom_call.1} parent=11 // pred_region
          _
        $region72: #{tpu_custom_call.1} parent=11 // pred_fallthru
          _
        // Predicated region
        $region73: #{tpu_custom_call.1} parent=11 // pred_check
          %p577 = pneg %p489
        $region74: #{tpu_custom_call.1} parent=11 // pred_check_branch
          %579 = sbr.rel (%p577) target = $region76
        $region75: #{tpu_custom_call.1} parent=11 // pred_region
          _
        $region76: #{tpu_custom_call.1} parent=11 // pred_fallthru
          _
      $region12: #{tpu_custom_call.1} parent=5 // pred_fallthru
        _
      %p580 = scmp.lt.s32.totalorder %s35, 2
      // Predicated region
      $region77: #{tpu_custom_call.1} parent=5 // pred_check
        %p581 = pneg %p580
      $region78: #{tpu_custom_call.1} parent=5 // pred_check_branch
        %583 = sbr.rel (%p581) target = $region80
      $region79: #{tpu_custom_call.1} parent=5 // pred_region
        // Predicated region
        $region81: #{tpu_custom_call.1} parent=79 // pred_check
          %p584 = pneg %p69
        $region82: #{tpu_custom_call.1} parent=79 // pred_check_branch
          %586 = sbr.rel (%p584) target = $region84
        $region83: #{tpu_custom_call.1} parent=79 // pred_region
          %p587 = scmp.lt.s32.totalorder %s42, 1
          %s588 = scalar_select %p587, %s42, 1
          %p589 = scmp.lt.s32.totalorder %s43, 0
          %s590 = scalar_select %p589, %s43, 0
          %s591 = sadd.s32 %s590, %s588
          %s592 = smul.addr %s591, 8
          %s593 = scalar_lea.vmem %s0, %s592
        $region84: #{tpu_custom_call.1} parent=79 // pred_fallthru
          _
        // Predicated region
        $region85: #{tpu_custom_call.1} parent=79 // pred_check
          %p594 = pneg %p95
        $region86: #{tpu_custom_call.1} parent=79 // pred_check_branch
          %596 = sbr.rel (%p594) target = $region88
        $region87: #{tpu_custom_call.1} parent=79 // pred_region
          %s597 = sand.u32 %s85, 1
          %s598 = scalar_lea.sflag [#allocation6], %s597
          %s599 = sand.u32 %s85, 1
          %s600 = smul.addr %s599, 4
          %s601 = scalar_lea.vmem [#allocation5], %s600
          %s603 = ssub.s32 64, 64
          %604 = vsyncadd %s598, %s603
          %s605 = smul.addr %s42, 64
          %s606 = scalar_lea.hbm %s1, %s605
          %s608 = sshll.u32 %s601, 4
          %s609 = int_to_ptr.vmem [resolvable:$true] %s608
          %611 = dma.hbm_to_vmem [thread:$0]  %s606, 64, %s609, %s598
        $region88: #{tpu_custom_call.1} parent=79 // pred_fallthru
          _
        // Predicated region
        $region89: #{tpu_custom_call.1} parent=79 // pred_check
          %p612 = pneg %p121
        $region90: #{tpu_custom_call.1} parent=79 // pred_check_branch
          %614 = sbr.rel (%p612) target = $region92
        $region91: #{tpu_custom_call.1} parent=79 // pred_region
          %s615 = sand.u32 %s111, 1
          %s616 = scalar_lea.sflag [#allocation9], %s615
          %s617 = sand.u32 %s111, 1
          %s618 = smul.addr %s617, 4
          %s619 = scalar_lea.vmem [#allocation8], %s618
          %s621 = ssub.s32 64, 64
          %622 = vsyncadd %s616, %s621
          %s623 = smul.addr %s42, 64
          %s624 = scalar_lea.hbm %s2, %s623
          %s626 = sshll.u32 %s619, 4
          %s627 = int_to_ptr.vmem [resolvable:$true] %s626
          %629 = dma.hbm_to_vmem [thread:$0]  %s624, 64, %s627, %s616
        $region92: #{tpu_custom_call.1} parent=79 // pred_fallthru
          _
        // Predicated region
        $region93: #{tpu_custom_call.1} parent=79 // pred_check
          %p630 = pneg %p147
        $region94: #{tpu_custom_call.1} parent=79 // pred_check_branch
          %632 = sbr.rel (%p630) target = $region96
        $region95: #{tpu_custom_call.1} parent=79 // pred_region
          %p633 = scmp.lt.s32.totalorder %s42, 1
          %s634 = scalar_select %p633, %s42, 1
          %s635 = scalar_lea.vmem %s3, %s634
        $region96: #{tpu_custom_call.1} parent=79 // pred_fallthru
          _
      $region80: #{tpu_custom_call.1} parent=5 // pred_fallthru
        _
      %p636 = scmp.le.s32.totalorder 1, %s35
      %p637 = scmp.lt.s32.totalorder %s35, 3
      %p638 = pnand %p636, %p637
      %p639 = pneg %p638
      // Predicated region
      $region97: #{tpu_custom_call.1} parent=5 // pred_check
        _
      $region98: #{tpu_custom_call.1} parent=5 // pred_check_branch
        %641 = sbr.rel (%p638) target = $region100
      $region99: #{tpu_custom_call.1} parent=5 // pred_region
        %s642 = ssub.s32 %s35, 1
        %s643 = sand.u32 %s88, 1
        %s644 = scalar_lea.sflag [#allocation6], %s643
        %s645 = sand.u32 %s88, 1
        %s646 = smul.addr %s645, 4
        %s647 = scalar_lea.vmem [#allocation5], %s646
        // Predicated region
        $region101: #{tpu_custom_call.1} parent=99 // pred_check
          %p648 = pneg %p101
        $region102: #{tpu_custom_call.1} parent=99 // pred_check_branch
          %650 = sbr.rel (%p648) target = $region104
        $region103: #{tpu_custom_call.1} parent=99 // pred_region
          %651 = dma.done %s644, 64
        $region104: #{tpu_custom_call.1} parent=99 // pred_fallthru
          _
        %s652 = sand.u32 %s114, 1
        %s653 = scalar_lea.sflag [#allocation9], %s652
        %s654 = sand.u32 %s114, 1
        %s655 = smul.addr %s654, 4
        %s656 = scalar_lea.vmem [#allocation8], %s655
        // Predicated region
        $region105: #{tpu_custom_call.1} parent=99 // pred_check
          %p657 = pneg %p127
        $region106: #{tpu_custom_call.1} parent=99 // pred_check_branch
          %659 = sbr.rel (%p657) target = $region108
        $region107: #{tpu_custom_call.1} parent=99 // pred_region
          %660 = dma.done %s653, 64
        $region108: #{tpu_custom_call.1} parent=99 // pred_fallthru
          _
        %p661 = scmp.lt.s32.totalorder %s44, 1
        %s662 = scalar_select %p661, %s44, 1
        %p663 = scmp.lt.s32.totalorder %s45, 0
        %s664 = scalar_select %p663, %s45, 0
        %s665 = sadd.s32 %s664, %s662
        %s666 = smul.addr %s665, 8
        %s667 = scalar_lea.vmem %s0, %s666
        %p668 = pneg %p75
        %p669 = pneg %p72
        %s670 = sand.u32 %s88, 1
        %s671 = scalar_lea.sflag [#allocation6], %s670
        %s672 = sand.u32 %s88, 1
        %s673 = smul.addr %s672, 4
        %s674 = scalar_lea.vmem [#allocation5], %s673
        %p675 = pneg %p101
        %p676 = pneg %p98
        %s677 = sand.u32 %s114, 1
        %s678 = scalar_lea.sflag [#allocation9], %s677
        %s679 = sand.u32 %s114, 1
        %s680 = smul.addr %s679, 4
        %s681 = scalar_lea.vmem [#allocation8], %s680
        %p682 = pneg %p127
        %p683 = pneg %p124
        %p684 = scmp.lt.s32.totalorder %s44, 1
        %s685 = scalar_select %p684, %s44, 1
        %s686 = scalar_lea.vmem %s3, %s685
        %p687 = pneg %p153
        %p688 = pneg %p150
        %p689 = pneg %p174
        %p690 = pneg %p171
        %p691 = pneg %p195
        %p692 = pneg %p192
        %p693 = pneg %p216
        %p694 = pneg %p213
        %p695 = pneg %p237
        %p696 = pneg %p234
        %p697 = pneg %p258
        %p698 = pneg %p255
        %p699 = pneg %p279
        %p700 = pneg %p276
        %p701 = pneg %p300
        %p702 = pneg %p297
        %p703 = pneg %p321
        %p704 = pneg %p318
        %p705 = pneg %p342
        %p706 = pneg %p339
        %p707 = pneg %p363
        %p708 = pneg %p360
        %p709 = pneg %p384
        %p710 = pneg %p381
        %p711 = pneg %p405
        %p712 = pneg %p402
        %p713 = pneg %p426
        %p714 = pneg %p423
        %p715 = pneg %p447
        %p716 = pneg %p444
        %p717 = pneg %p468
        %p718 = pneg %p465
        %p719 = pneg %p489
        %p720 = pneg %p486
        %p721 = pneg %p517
        %p722 = pneg %p514
        %s723 = sand.u32 %s504, 1
        %s724 = scalar_lea.sflag [#allocation7], %s723
        %s725 = sand.u32 %s504, 1
        %s726 = smul.addr %s725, 8
        %s727 = scalar_lea.vmem [#allocation10], %s726
        %p728 = scmp.lt.s32.totalorder %s44, 1
        %s729 = scalar_select %p728, %s44, 1
        %p730 = scmp.lt.s32.totalorder %s45, 0
        %s731 = scalar_select %p730, %s45, 0
        %s732 = sadd.s32 %s731, %s729
        %s733 = smul.addr %s732, 8
        %s734 = scalar_lea.vmem %s0, %s733
        %p735 = scmp.lt.s32.totalorder %s44, 1
        %s736 = scalar_select %p735, %s44, 1
        %s737 = scalar_lea.vmem %s3, %s736
        %p739 = scmp.eq.s32.totalorder %s45, 0
        // Predicated region
        $region109: #{tpu_custom_call.1} parent=99 // pred_check
          %p740 = pneg %p739
        $region110: #{tpu_custom_call.1} parent=99 // pred_check_branch
          %742 = sbr.rel (%p740) target = $region112
        $region111: #{tpu_custom_call.1} parent=99 // pred_region
          %v743 = vld [vmem:[%s647] sm:$0xf]
          %v744 = vld [vmem:[%s6] sm:$0xf]
          %v745 = vld [vmem:[%s6 + $0x4] sm:$0xf]
          %v746 = vld [vmem:[%s6 + $0x8] sm:$0xf]
          %v747 = vld [vmem:[%s6 + $0xc] sm:$0xf]
          %v748 = vld [vmem:[%s7] sm:$0x1]
          %v750 = vlaneseq
          %v751 = vshrl.u32 %v750, 7
          %v752 = vsub.s32 0, %v751
          %v753 = vrot.slane %v748, %v752
          %v759 = vunpack.c.l.b16 %v744
          %v760 = vunpack.c.l.b16 %v745
          %v761 = vunpack.c.l.b16 %v746
          %v762 = vunpack.c.l.b16 %v747
          %v763 = vpack.c.b16 %v760, %v759
          %v764 = vpack.c.b16 %v762, %v761
          %vm767 = vcmask 261120
          %v769 = vsel %vm767, %v743, 0
          %771 = vmatprep.subr.bf16.mxu0 0
          %772 = vmatpush1.bf16.msra.mxu0 %v763
          %773 = vmatprep.subr.bf16.mxu0 0
          %774 = vmatpush1.bf16.msra.mxu0 %v764
          %775 = vmatprep.subr.bf16.mxu0 0
          %776 = vmatpush1.bf16.msra.mxu0 0
          %777 = vmatprep.subr.bf16.mxu0 0
          %778 = vmatpush1.bf16.msra.mxu0 0
          %779 = vmatprep.subr.bf16.mxu0 0
          %780 = vmatpush1.bf16.msra.mxu0 0
          %781 = vmatprep.subr.bf16.mxu0 0
          %782 = vmatpush1.bf16.msra.mxu0 0
          %783 = vmatprep.subr.bf16.mxu0 0
          %784 = vmatpush1.bf16.msra.mxu0 0
          %785 = vmatprep.subr.bf16.mxu0 0
          %786 = vmatpush1.bf16.msra.mxu0 0
          %787 = vmatprep.subr.bf16.mxu0 0
          %788 = vmatpush1.bf16.msra.mxu0 0
          %789 = vmatprep.subr.bf16.mxu0 0
          %790 = vmatpush1.bf16.msra.mxu0 0
          %791 = vmatprep.subr.bf16.mxu0 0
          %792 = vmatpush1.bf16.msra.mxu0 0
          %793 = vmatprep.subr.bf16.mxu0 0
          %794 = vmatpush1.bf16.msra.mxu0 0
          %795 = vmatprep.subr.bf16.mxu0 0
          %796 = vmatpush1.bf16.msra.mxu0 0
          %797 = vmatprep.subr.bf16.mxu0 0
          %798 = vmatpush1.bf16.msra.mxu0 0
          %799 = vmatprep.subr.bf16.mxu0 0
          %800 = vmatpush1.bf16.msra.mxu0 0
          %801 = vmatprep.subr.bf16.mxu0 0
          %802 = vmatpush1.bf16.msra.mxu0 0
          %803 = vmatprep.mubr.bf16.mxu0 0
          %804 = vmatmul.mubr.bf16.gmra.mrb[0].mxu0 %v769
          %v805 = vpop.f32.mrb[0].mxu0
          %v806 = vadd.f32 %v753, %v805
          %v807 = vpop.f32.mrb[0].mxu0
          %v808 = vpop.f32.mrb[0].mxu0
          %v809 = vpop.f32.mrb[0].mxu0
          %810 = vdwg.mxu0
          %v811 = vpack.c.bf16 %v806, %v806
          %vm812 = vcmask 519168
          %813 = vst.msk [vmem:[#allocation2] sm:$0xf] %vm812, %v811
          %v814 = vld [vmem:[%s656] sm:$0xf]
          %v815 = vld [vmem:[%s8] sm:$0xf]
          %v816 = vld [vmem:[%s8 + $0x4] sm:$0xf]
          %v817 = vld [vmem:[%s8 + $0x8] sm:$0xf]
          %v818 = vld [vmem:[%s8 + $0xc] sm:$0xf]
          %v819 = vld [vmem:[%s9] sm:$0x1]
          %v821 = vlaneseq
          %v822 = vshrl.u32 %v821, 7
          %v823 = vsub.s32 0, %v822
          %v824 = vrot.slane %v819, %v823
          %v830 = vunpack.c.l.b16 %v815
          %v831 = vunpack.c.l.b16 %v816
          %v832 = vunpack.c.l.b16 %v817
          %v833 = vunpack.c.l.b16 %v818
          %v834 = vpack.c.b16 %v831, %v830
          %v835 = vpack.c.b16 %v833, %v832
          %v839 = vsel %vm767, %v814, 0
          %841 = vmatprep.subr.bf16.mxu0 0
          %842 = vmatpush1.bf16.msra.mxu0 %v834
          %843 = vmatprep.subr.bf16.mxu0 0
          %844 = vmatpush1.bf16.msra.mxu0 %v835
          %845 = vmatprep.subr.bf16.mxu0 0
          %846 = vmatpush1.bf16.msra.mxu0 0
          %847 = vmatprep.subr.bf16.mxu0 0
          %848 = vmatpush1.bf16.msra.mxu0 0
          %849 = vmatprep.subr.bf16.mxu0 0
          %850 = vmatpush1.bf16.msra.mxu0 0
          %851 = vmatprep.subr.bf16.mxu0 0
          %852 = vmatpush1.bf16.msra.mxu0 0
          %853 = vmatprep.subr.bf16.mxu0 0
          %854 = vmatpush1.bf16.msra.mxu0 0
          %855 = vmatprep.subr.bf16.mxu0 0
          %856 = vmatpush1.bf16.msra.mxu0 0
          %857 = vmatprep.subr.bf16.mxu0 0
          %858 = vmatpush1.bf16.msra.mxu0 0
          %859 = vmatprep.subr.bf16.mxu0 0
          %860 = vmatpush1.bf16.msra.mxu0 0
          %861 = vmatprep.subr.bf16.mxu0 0
          %862 = vmatpush1.bf16.msra.mxu0 0
          %863 = vmatprep.subr.bf16.mxu0 0
          %864 = vmatpush1.bf16.msra.mxu0 0
          %865 = vmatprep.subr.bf16.mxu0 0
          %866 = vmatpush1.bf16.msra.mxu0 0
          %867 = vmatprep.subr.bf16.mxu0 0
          %868 = vmatpush1.bf16.msra.mxu0 0
          %869 = vmatprep.subr.bf16.mxu0 0
          %870 = vmatpush1.bf16.msra.mxu0 0
          %871 = vmatprep.subr.bf16.mxu0 0
          %872 = vmatpush1.bf16.msra.mxu0 0
          %873 = vmatprep.mubr.bf16.mxu0 0
          %874 = vmatmul.mubr.bf16.gmra.mrb[0].mxu0 %v839
          %v875 = vpop.f32.mrb[0].mxu0
          %v876 = vadd.f32 %v824, %v875
          %v877 = vpop.f32.mrb[0].mxu0
          %v878 = vpop.f32.mrb[0].mxu0
          %v879 = vpop.f32.mrb[0].mxu0
          %880 = vdwg.mxu0
          %v881 = vpack.c.bf16 %v876, %v876
          %882 = vst.msk [vmem:[#allocation3] sm:$0xf] %vm812, %v881
        $region112: #{tpu_custom_call.1} parent=99 // pred_fallthru
          _
        %v883 = vld [vmem:[%s734] sm:$0xff]
        %v884 = vld [vmem:[%s737] sm:$0x1]
        %v885 = vpack.c.bf16 %v883, %v883
        %v886 = vld [vmem:[%s4] sm:$0xf]
        %v887 = vld [vmem:[%s4 + $0x4] sm:$0xf]
        %v888 = vld [vmem:[%s4 + $0x8] sm:$0xf]
        %v889 = vld [vmem:[%s4 + $0xc] sm:$0xf]
        %v890 = vld [vmem:[%s5] sm:$0x1]
        %v892 = vlaneseq
        %v893 = vshrl.u32 %v892, 7
        %v894 = vsub.s32 0, %v893
        %v895 = vrot.slane %v890, %v894
        %v901 = vunpack.c.l.b16 %v886
        %v902 = vunpack.c.l.b16 %v887
        %v903 = vunpack.c.l.b16 %v888
        %v904 = vunpack.c.l.b16 %v889
        %v905 = vpack.c.b16 %v902, %v901
        %v906 = vpack.c.b16 %v904, %v903
        %vm909 = vcmask 261120
        %v911 = vsel %vm909, %v885, 0
        %913 = vmatprep.subr.bf16.mxu0 0
        %914 = vmatpush1.bf16.msra.mxu0 %v905
        %915 = vmatprep.subr.bf16.mxu0 0
        %916 = vmatpush1.bf16.msra.mxu0 %v906
        %917 = vmatprep.subr.bf16.mxu0 0
        %918 = vmatpush1.bf16.msra.mxu0 0
        %919 = vmatprep.subr.bf16.mxu0 0
        %920 = vmatpush1.bf16.msra.mxu0 0
        %921 = vmatprep.subr.bf16.mxu0 0
        %922 = vmatpush1.bf16.msra.mxu0 0
        %923 = vmatprep.subr.bf16.mxu0 0
        %924 = vmatpush1.bf16.msra.mxu0 0
        %925 = vmatprep.subr.bf16.mxu0 0
        %926 = vmatpush1.bf16.msra.mxu0 0
        %927 = vmatprep.subr.bf16.mxu0 0
        %928 = vmatpush1.bf16.msra.mxu0 0
        %929 = vmatprep.subr.bf16.mxu0 0
        %930 = vmatpush1.bf16.msra.mxu0 0
        %931 = vmatprep.subr.bf16.mxu0 0
        %932 = vmatpush1.bf16.msra.mxu0 0
        %933 = vmatprep.subr.bf16.mxu0 0
        %934 = vmatpush1.bf16.msra.mxu0 0
        %935 = vmatprep.subr.bf16.mxu0 0
        %936 = vmatpush1.bf16.msra.mxu0 0
        %937 = vmatprep.subr.bf16.mxu0 0
        %938 = vmatpush1.bf16.msra.mxu0 0
        %939 = vmatprep.subr.bf16.mxu0 0
        %940 = vmatpush1.bf16.msra.mxu0 0
        %941 = vmatprep.subr.bf16.mxu0 0
        %942 = vmatpush1.bf16.msra.mxu0 0
        %943 = vmatprep.subr.bf16.mxu0 0
        %944 = vmatpush1.bf16.msra.mxu0 0
        %945 = vmatprep.mubr.bf16.mxu0 0
        %946 = vmatmul.mubr.bf16.gmra.mrb[0].mxu0 %v911
        %v947 = vpop.f32.mrb[0].mxu0
        %v948 = vadd.f32 %v895, %v947
        %v949 = vpop.f32.mrb[0].mxu0
        %v950 = vpop.f32.mrb[0].mxu0
        %v951 = vpop.f32.mrb[0].mxu0
        %952 = vdwg.mxu0
        %v953 = vpack.c.bf16 %v948, %v948
        %v954 = vld [vmem:[#allocation2] sm:$0xf]
        %v955 = vld [vmem:[#allocation3] sm:$0xf]
        %v957 = vlaneseq
        %v958 = vshrl.u32 %v957, 7
        %v959 = vsub.s32 0, %v958
        %v960 = vrot.slane %v884, %v959
        %vm962 = vcmask 64512
        %v964 = vsel %vm962, %v953, 0
        %v967 = vsel %vm962, %v954, 0
        %969 = vmatprep.subr.bf16.mxu0 0
        %970 = vmatpush1.bf16.xpose.msra.mxu0 %v967
        %971 = vmatprep.subr.bf16.mxu0 0
        %972 = vmatpush1.bf16.xpose.msra.mxu0 0
        %973 = vmatprep.subr.bf16.mxu0 0
        %974 = vmatpush1.bf16.xpose.msra.mxu0 0
        %975 = vmatprep.subr.bf16.mxu0 0
        %976 = vmatpush1.bf16.xpose.msra.mxu0 0
        %977 = vmatprep.subr.bf16.mxu0 0
        %978 = vmatpush1.bf16.xpose.msra.mxu0 0
        %979 = vmatprep.subr.bf16.mxu0 0
        %980 = vmatpush1.bf16.xpose.msra.mxu0 0
        %981 = vmatprep.subr.bf16.mxu0 0
        %982 = vmatpush1.bf16.xpose.msra.mxu0 0
        %983 = vmatprep.subr.bf16.mxu0 0
        %984 = vmatpush1.bf16.xpose.msra.mxu0 0
        %985 = vmatprep.subr.bf16.mxu0 0
        %986 = vmatpush1.bf16.xpose.msra.mxu0 0
        %987 = vmatprep.subr.bf16.mxu0 0
        %988 = vmatpush1.bf16.xpose.msra.mxu0 0
        %989 = vmatprep.subr.bf16.mxu0 0
        %990 = vmatpush1.bf16.xpose.msra.mxu0 0
        %991 = vmatprep.subr.bf16.mxu0 0
        %992 = vmatpush1.bf16.xpose.msra.mxu0 0
        %993 = vmatprep.subr.bf16.mxu0 0
        %994 = vmatpush1.bf16.xpose.msra.mxu0 0
        %995 = vmatprep.subr.bf16.mxu0 0
        %996 = vmatpush1.bf16.xpose.msra.mxu0 0
        %997 = vmatprep.subr.bf16.mxu0 0
        %998 = vmatpush1.bf16.xpose.msra.mxu0 0
        %999 = vmatprep.subr.bf16.mxu0 0
        %1000 = vmatpush1.bf16.xpose.msra.mxu0 0
        %1001 = vmatprep.mubr.bf16.mxu0 0
        %1002 = vmatmul.mubr.bf16.gmra.mrb[0].mxu0 %v964
        %v1003 = vpop.f32.mrb[0].mxu0
        %v1004 = vadd.f32 %v960, %v1003
        %v1005 = vpop.f32.mrb[0].mxu0
        %v1006 = vpop.f32.mrb[0].mxu0
        %v1007 = vpop.f32.mrb[0].mxu0
        %1008 = vdwg.mxu0
        %v1009 = vsel %vm962, %v1004, -inf
        %1010 = vmax.xlane.f32.xlu0 %v1009
        %v1011 = vpop.xlane.xlu0 %1010
        %v1012 = vsub.f32 %v1004, %v1011
        %v1013 = vmul.f32 %v1012, 1.442695
        %v1014 = vpow.pop %v1013
        %v1015 = vsel %vm962, %v1014, 0.0
        %1016 = vadd.xlane.f32.xlu0 %v1015
        %v1017 = vpop.xlane.xlu0 %1016
        %v1018 = vrcp.pop %v1017
        %v1019 = vmul.f32 %v1014, %v1018
        %v1020 = vpack.c.bf16 %v1019, %v1019
        %v1022 = vunpack.c.l.b16 %v954
        %v1023 = vpack.c.b16 %v1022, %v1022
        %1024 = vrot.lane.b32.xlu0 %v1023, 96
        %v1025 = vpop.permute.xlu0 %1024
        %v1027 = vsel %vm962, %v1020, 0
        %vm1029 = vcmask 1043456
        %v1031 = vsel %vm1029, %v1025, 0
        %1033 = vmatprep.subr.bf16.mxu0 0
        %1034 = vmatpush1.bf16.msra.mxu0 %v1031
        %1035 = vmatprep.subr.bf16.mxu0 0
        %1036 = vmatpush1.bf16.msra.mxu0 0
        %1037 = vmatprep.subr.bf16.mxu0 0
        %1038 = vmatpush1.bf16.msra.mxu0 0
        %1039 = vmatprep.subr.bf16.mxu0 0
        %1040 = vmatpush1.bf16.msra.mxu0 0
        %1041 = vmatprep.subr.bf16.mxu0 0
        %1042 = vmatpush1.bf16.msra.mxu0 0
        %1043 = vmatprep.subr.bf16.mxu0 0
        %1044 = vmatpush1.bf16.msra.mxu0 0
        %1045 = vmatprep.subr.bf16.mxu0 0
        %1046 = vmatpush1.bf16.msra.mxu0 0
        %1047 = vmatprep.subr.bf16.mxu0 0
        %1048 = vmatpush1.bf16.msra.mxu0 0
        %1049 = vmatprep.subr.bf16.mxu0 0
        %1050 = vmatpush1.bf16.msra.mxu0 0
        %1051 = vmatprep.subr.bf16.mxu0 0
        %1052 = vmatpush1.bf16.msra.mxu0 0
        %1053 = vmatprep.subr.bf16.mxu0 0
        %1054 = vmatpush1.bf16.msra.mxu0 0
        %1055 = vmatprep.subr.bf16.mxu0 0
        %1056 = vmatpush1.bf16.msra.mxu0 0
        %1057 = vmatprep.subr.bf16.mxu0 0
        %1058 = vmatpush1.bf16.msra.mxu0 0
        %1059 = vmatprep.subr.bf16.mxu0 0
        %1060 = vmatpush1.bf16.msra.mxu0 0
        %1061 = vmatprep.subr.bf16.mxu0 0
        %1062 = vmatpush1.bf16.msra.mxu0 0
        %1063 = vmatprep.subr.bf16.mxu0 0
        %1064 = vmatpush1.bf16.msra.mxu0 0
        %1065 = vmatprep.mubr.bf16.mxu0 0
        %1066 = vmatmul.mubr.bf16.gmra.mrb[0].mxu0 %v1027
        %v1067 = vpop.f32.mrb[0].mxu0
        %v1068 = vadd.f32 0.0, %v1067
        %v1069 = vpop.f32.mrb[0].mxu0
        %v1070 = vpop.f32.mrb[0].mxu0
        %v1071 = vpop.f32.mrb[0].mxu0
        %1072 = vdwg.mxu0
        %v1073 = vpack.c.bf16 %v1068, %v1068
        %vm1074 = vcmask 60416
        %1075 = vst.msk [vmem:[#allocation4] sm:$0xf] %vm1074, %v1073
        %1077 = vrot.lane.b32.xlu0 %v953, 96
        %v1078 = vpop.permute.xlu0 %1077
        %v1080 = vsel %vm962, %v1078, 0
        %v1083 = vsel %vm962, %v955, 0
        %1085 = vmatprep.subr.bf16.mxu0 0
        %1086 = vmatpush1.bf16.xpose.msra.mxu0 %v1083
        %1087 = vmatprep.subr.bf16.mxu0 0
        %1088 = vmatpush1.bf16.xpose.msra.mxu0 0
        %1089 = vmatprep.subr.bf16.mxu0 0
        %1090 = vmatpush1.bf16.xpose.msra.mxu0 0
        %1091 = vmatprep.subr.bf16.mxu0 0
        %1092 = vmatpush1.bf16.xpose.msra.mxu0 0
        %1093 = vmatprep.subr.bf16.mxu0 0
        %1094 = vmatpush1.bf16.xpose.msra.mxu0 0
        %1095 = vmatprep.subr.bf16.mxu0 0
        %1096 = vmatpush1.bf16.xpose.msra.mxu0 0
        %1097 = vmatprep.subr.bf16.mxu0 0
        %1098 = vmatpush1.bf16.xpose.msra.mxu0 0
        %1099 = vmatprep.subr.bf16.mxu0 0
        %1100 = vmatpush1.bf16.xpose.msra.mxu0 0
        %1101 = vmatprep.subr.bf16.mxu0 0
        %1102 = vmatpush1.bf16.xpose.msra.mxu0 0
        %1103 = vmatprep.subr.bf16.mxu0 0
        %1104 = vmatpush1.bf16.xpose.msra.mxu0 0
        %1105 = vmatprep.subr.bf16.mxu0 0
        %1106 = vmatpush1.bf16.xpose.msra.mxu0 0
        %1107 = vmatprep.subr.bf16.mxu0 0
        %1108 = vmatpush1.bf16.xpose.msra.mxu0 0
        %1109 = vmatprep.subr.bf16.mxu0 0
        %1110 = vmatpush1.bf16.xpose.msra.mxu0 0
        %1111 = vmatprep.subr.bf16.mxu0 0
        %1112 = vmatpush1.bf16.xpose.msra.mxu0 0
        %1113 = vmatprep.subr.bf16.mxu0 0
        %1114 = vmatpush1.bf16.xpose.msra.mxu0 0
        %1115 = vmatprep.subr.bf16.mxu0 0
        %1116 = vmatpush1.bf16.xpose.msra.mxu0 0
        %1117 = vmatprep.mubr.bf16.mxu0 0
        %1118 = vmatmul.mubr.bf16.gmra.mrb[0].mxu0 %v1080
        %v1119 = vpop.f32.mrb[0].mxu0
        %v1120 = vadd.f32 %v960, %v1119
        %v1121 = vpop.f32.mrb[0].mxu0
        %v1122 = vpop.f32.mrb[0].mxu0
        %v1123 = vpop.f32.mrb[0].mxu0
        %1124 = vdwg.mxu0
        %v1125 = vsel %vm962, %v1120, -inf
        %1126 = vmax.xlane.f32.xlu0 %v1125
        %v1127 = vpop.xlane.xlu0 %1126
        %v1128 = vsub.f32 %v1120, %v1127
        %v1129 = vmul.f32 %v1128, 1.442695
        %v1130 = vpow.pop %v1129
        %v1131 = vsel %vm962, %v1130, 0.0
        %1132 = vadd.xlane.f32.xlu0 %v1131
        %v1133 = vpop.xlane.xlu0 %1132
        %v1134 = vrcp.pop %v1133
        %v1135 = vmul.f32 %v1130, %v1134
        %v1136 = vpack.c.bf16 %v1135, %v1135
        %v1138 = vunpack.c.l.b16 %v955
        %v1139 = vpack.c.b16 %v1138, %v1138
        %1140 = vrot.lane.b32.xlu0 %v1139, 96
        %v1141 = vpop.permute.xlu0 %1140
        %v1143 = vsel %vm962, %v1136, 0
        %v1146 = vsel %vm1029, %v1141, 0
        %1148 = vmatprep.subr.bf16.mxu0 0
        %1149 = vmatpush1.bf16.msra.mxu0 %v1146
        %1150 = vmatprep.subr.bf16.mxu0 0
        %1151 = vmatpush1.bf16.msra.mxu0 0
        %1152 = vmatprep.subr.bf16.mxu0 0
        %1153 = vmatpush1.bf16.msra.mxu0 0
        %1154 = vmatprep.subr.bf16.mxu0 0
        %1155 = vmatpush1.bf16.msra.mxu0 0
        %1156 = vmatprep.subr.bf16.mxu0 0
        %1157 = vmatpush1.bf16.msra.mxu0 0
        %1158 = vmatprep.subr.bf16.mxu0 0
        %1159 = vmatpush1.bf16.msra.mxu0 0
        %1160 = vmatprep.subr.bf16.mxu0 0
        %1161 = vmatpush1.bf16.msra.mxu0 0
        %1162 = vmatprep.subr.bf16.mxu0 0
        %1163 = vmatpush1.bf16.msra.mxu0 0
        %1164 = vmatprep.subr.bf16.mxu0 0
        %1165 = vmatpush1.bf16.msra.mxu0 0
        %1166 = vmatprep.subr.bf16.mxu0 0
        %1167 = vmatpush1.bf16.msra.mxu0 0
        %1168 = vmatprep.subr.bf16.mxu0 0
        %1169 = vmatpush1.bf16.msra.mxu0 0
        %1170 = vmatprep.subr.bf16.mxu0 0
        %1171 = vmatpush1.bf16.msra.mxu0 0
        %1172 = vmatprep.subr.bf16.mxu0 0
        %1173 = vmatpush1.bf16.msra.mxu0 0
        %1174 = vmatprep.subr.bf16.mxu0 0
        %1175 = vmatpush1.bf16.msra.mxu0 0
        %1176 = vmatprep.subr.bf16.mxu0 0
        %1177 = vmatpush1.bf16.msra.mxu0 0
        %1178 = vmatprep.subr.bf16.mxu0 0
        %1179 = vmatpush1.bf16.msra.mxu0 0
        %1180 = vmatprep.mubr.bf16.mxu0 0
        %1181 = vmatmul.mubr.bf16.gmra.mrb[0].mxu0 %v1143
        %v1182 = vpop.f32.mrb[0].mxu0
        %v1183 = vadd.f32 0.0, %v1182
        %v1184 = vpop.f32.mrb[0].mxu0
        %v1185 = vpop.f32.mrb[0].mxu0
        %v1186 = vpop.f32.mrb[0].mxu0
        %1187 = vdwg.mxu0
        %v1188 = vpack.c.bf16 %v1183, %v1183
        %v1190 = vunpack.c.l.b16 %v1188
        %v1191 = vpack.c.b16 %v1190, %v1190
        %1192 = vrot.lane.b32.xlu0 %v1191, 32
        %v1193 = vpop.permute.xlu0 %1192
        %vm1195 = vcmask 322816
        %1196 = vst.msk [vmem:[#allocation4] sm:$0xf] %vm1195, %v1193
        %1197 = vrot.lane.b32.xlu0 %v953, 120
        %v1198 = vpop.permute.xlu0 %1197
        %1199 = vrot.lane.b32.xlu0 %v1023, 120
        %v1200 = vpop.permute.xlu0 %1199
        %v1202 = vsel %vm962, %v1198, 0
        %v1205 = vsel %vm962, %v1200, 0
        %1207 = vmatprep.subr.bf16.mxu0 0
        %1208 = vmatpush1.bf16.xpose.msra.mxu0 %v1205
        %1209 = vmatprep.subr.bf16.mxu0 0
        %1210 = vmatpush1.bf16.xpose.msra.mxu0 0
        %1211 = vmatprep.subr.bf16.mxu0 0
        %1212 = vmatpush1.bf16.xpose.msra.mxu0 0
        %1213 = vmatprep.subr.bf16.mxu0 0
        %1214 = vmatpush1.bf16.xpose.msra.mxu0 0
        %1215 = vmatprep.subr.bf16.mxu0 0
        %1216 = vmatpush1.bf16.xpose.msra.mxu0 0
        %1217 = vmatprep.subr.bf16.mxu0 0
        %1218 = vmatpush1.bf16.xpose.msra.mxu0 0
        %1219 = vmatprep.subr.bf16.mxu0 0
        %1220 = vmatpush1.bf16.xpose.msra.mxu0 0
        %1221 = vmatprep.subr.bf16.mxu0 0
        %1222 = vmatpush1.bf16.xpose.msra.mxu0 0
        %1223 = vmatprep.subr.bf16.mxu0 0
        %1224 = vmatpush1.bf16.xpose.msra.mxu0 0
        %1225 = vmatprep.subr.bf16.mxu0 0
        %1226 = vmatpush1.bf16.xpose.msra.mxu0 0
        %1227 = vmatprep.subr.bf16.mxu0 0
        %1228 = vmatpush1.bf16.xpose.msra.mxu0 0
        %1229 = vmatprep.subr.bf16.mxu0 0
        %1230 = vmatpush1.bf16.xpose.msra.mxu0 0
        %1231 = vmatprep.subr.bf16.mxu0 0
        %1232 = vmatpush1.bf16.xpose.msra.mxu0 0
        %1233 = vmatprep.subr.bf16.mxu0 0
        %1234 = vmatpush1.bf16.xpose.msra.mxu0 0
        %1235 = vmatprep.subr.bf16.mxu0 0
        %1236 = vmatpush1.bf16.xpose.msra.mxu0 0
        %1237 = vmatprep.subr.bf16.mxu0 0
        %1238 = vmatpush1.bf16.xpose.msra.mxu0 0
        %1239 = vmatprep.mubr.bf16.mxu0 0
        %1240 = vmatmul.mubr.bf16.gmra.mrb[0].mxu0 %v1202
        %v1241 = vpop.f32.mrb[0].mxu0
        %v1242 = vadd.f32 %v960, %v1241
        %v1243 = vpop.f32.mrb[0].mxu0
        %v1244 = vpop.f32.mrb[0].mxu0
        %v1245 = vpop.f32.mrb[0].mxu0
        %1246 = vdwg.mxu0
        %v1247 = vsel %vm962, %v1242, -inf
        %1248 = vmax.xlane.f32.xlu0 %v1247
        %v1249 = vpop.xlane.xlu0 %1248
        %v1250 = vsub.f32 %v1242, %v1249
        %v1251 = vmul.f32 %v1250, 1.442695
        %v1252 = vpow.pop %v1251
        %v1253 = vsel %vm962, %v1252, 0.0
        %1254 = vadd.xlane.f32.xlu0 %v1253
        %v1255 = vpop.xlane.xlu0 %1254
        %v1256 = vrcp.pop %v1255
        %v1257 = vmul.f32 %v1252, %v1256
        %v1258 = vpack.c.bf16 %v1257, %v1257
        %1259 = vrot.lane.b32.xlu0 %v1023, 88
        %v1260 = vpop.permute.xlu0 %1259
        %v1262 = vsel %vm962, %v1258, 0
        %v1265 = vsel %vm1029, %v1260, 0
        %1267 = vmatprep.subr.bf16.mxu0 0
        %1268 = vmatpush1.bf16.msra.mxu0 %v1265
        %1269 = vmatprep.subr.bf16.mxu0 0
        %1270 = vmatpush1.bf16.msra.mxu0 0
        %1271 = vmatprep.subr.bf16.mxu0 0
        %1272 = vmatpush1.bf16.msra.mxu0 0
        %1273 = vmatprep.subr.bf16.mxu0 0
        %1274 = vmatpush1.bf16.msra.mxu0 0
        %1275 = vmatprep.subr.bf16.mxu0 0
        %1276 = vmatpush1.bf16.msra.mxu0 0
        %1277 = vmatprep.subr.bf16.mxu0 0
        %1278 = vmatpush1.bf16.msra.mxu0 0
        %1279 = vmatprep.subr.bf16.mxu0 0
        %1280 = vmatpush1.bf16.msra.mxu0 0
        %1281 = vmatprep.subr.bf16.mxu0 0
        %1282 = vmatpush1.bf16.msra.mxu0 0
        %1283 = vmatprep.subr.bf16.mxu0 0
        %1284 = vmatpush1.bf16.msra.mxu0 0
        %1285 = vmatprep.subr.bf16.mxu0 0
        %1286 = vmatpush1.bf16.msra.mxu0 0
        %1287 = vmatprep.subr.bf16.mxu0 0
        %1288 = vmatpush1.bf16.msra.mxu0 0
        %1289 = vmatprep.subr.bf16.mxu0 0
        %1290 = vmatpush1.bf16.msra.mxu0 0
        %1291 = vmatprep.subr.bf16.mxu0 0
        %1292 = vmatpush1.bf16.msra.mxu0 0
        %1293 = vmatprep.subr.bf16.mxu0 0
        %1294 = vmatpush1.bf16.msra.mxu0 0
        %1295 = vmatprep.subr.bf16.mxu0 0
        %1296 = vmatpush1.bf16.msra.mxu0 0
        %1297 = vmatprep.subr.bf16.mxu0 0
        %1298 = vmatpush1.bf16.msra.mxu0 0
        %1299 = vmatprep.mubr.bf16.mxu0 0
        %1300 = vmatmul.mubr.bf16.gmra.mrb[0].mxu0 %v1262
        %v1301 = vpop.f32.mrb[0].mxu0
        %v1302 = vadd.f32 0.0, %v1301
        %v1303 = vpop.f32.mrb[0].mxu0
        %v1304 = vpop.f32.mrb[0].mxu0
        %v1305 = vpop.f32.mrb[0].mxu0
        %1306 = vdwg.mxu0
        %v1307 = vpack.c.bf16 %v1302, %v1302
        %v1309 = vunpack.c.l.b16 %v1307
        %v1310 = vpack.c.b16 %v1309, %v1309
        %1311 = vrot.lane.b32.xlu0 %v1310, 8
        %v1312 = vpop.permute.xlu0 %1311
        %vm1314 = vcmask 126016
        %1315 = vst.msk [vmem:[#allocation4] sm:$0xf] %vm1314, %v1312
        %1316 = vrot.lane.b32.xlu0 %v953, 88
        %v1317 = vpop.permute.xlu0 %1316
        %1318 = vrot.lane.b32.xlu0 %v1139, 120
        %v1319 = vpop.permute.xlu0 %1318
        %v1321 = vsel %vm962, %v1317, 0
        %v1324 = vsel %vm962, %v1319, 0
        %1326 = vmatprep.subr.bf16.mxu0 0
        %1327 = vmatpush1.bf16.xpose.msra.mxu0 %v1324
        %1328 = vmatprep.subr.bf16.mxu0 0
        %1329 = vmatpush1.bf16.xpose.msra.mxu0 0
        %1330 = vmatprep.subr.bf16.mxu0 0
        %1331 = vmatpush1.bf16.xpose.msra.mxu0 0
        %1332 = vmatprep.subr.bf16.mxu0 0
        %1333 = vmatpush1.bf16.xpose.msra.mxu0 0
        %1334 = vmatprep.subr.bf16.mxu0 0
        %1335 = vmatpush1.bf16.xpose.msra.mxu0 0
        %1336 = vmatprep.subr.bf16.mxu0 0
        %1337 = vmatpush1.bf16.xpose.msra.mxu0 0
        %1338 = vmatprep.subr.bf16.mxu0 0
        %1339 = vmatpush1.bf16.xpose.msra.mxu0 0
        %1340 = vmatprep.subr.bf16.mxu0 0
        %1341 = vmatpush1.bf16.xpose.msra.mxu0 0
        %1342 = vmatprep.subr.bf16.mxu0 0
        %1343 = vmatpush1.bf16.xpose.msra.mxu0 0
        %1344 = vmatprep.subr.bf16.mxu0 0
        %1345 = vmatpush1.bf16.xpose.msra.mxu0 0
        %1346 = vmatprep.subr.bf16.mxu0 0
        %1347 = vmatpush1.bf16.xpose.msra.mxu0 0
        %1348 = vmatprep.subr.bf16.mxu0 0
        %1349 = vmatpush1.bf16.xpose.msra.mxu0 0
        %1350 = vmatprep.subr.bf16.mxu0 0
        %1351 = vmatpush1.bf16.xpose.msra.mxu0 0
        %1352 = vmatprep.subr.bf16.mxu0 0
        %1353 = vmatpush1.bf16.xpose.msra.mxu0 0
        %1354 = vmatprep.subr.bf16.mxu0 0
        %1355 = vmatpush1.bf16.xpose.msra.mxu0 0
        %1356 = vmatprep.subr.bf16.mxu0 0
        %1357 = vmatpush1.bf16.xpose.msra.mxu0 0
        %1358 = vmatprep.mubr.bf16.mxu0 0
        %1359 = vmatmul.mubr.bf16.gmra.mrb[0].mxu0 %v1321
        %v1360 = vpop.f32.mrb[0].mxu0
        %v1361 = vadd.f32 %v960, %v1360
        %v1362 = vpop.f32.mrb[0].mxu0
        %v1363 = vpop.f32.mrb[0].mxu0
        %v1364 = vpop.f32.mrb[0].mxu0
        %1365 = vdwg.mxu0
        %v1366 = vsel %vm962, %v1361, -inf
        %1367 = vmax.xlane.f32.xlu0 %v1366
        %v1368 = vpop.xlane.xlu0 %1367
        %v1369 = vsub.f32 %v1361, %v1368
        %v1370 = vmul.f32 %v1369, 1.442695
        %v1371 = vpow.pop %v1370
        %v1372 = vsel %vm962, %v1371, 0.0
        %1373 = vadd.xlane.f32.xlu0 %v1372
        %v1374 = vpop.xlane.xlu0 %1373
        %v1375 = vrcp.pop %v1374
        %v1376 = vmul.f32 %v1371, %v1375
        %v1377 = vpack.c.bf16 %v1376, %v1376
        %1378 = vrot.lane.b32.xlu0 %v1139, 88
        %v1379 = vpop.permute.xlu0 %1378
        %v1381 = vsel %vm962, %v1377, 0
        %v1384 = vsel %vm1029, %v1379, 0
        %1386 = vmatprep.subr.bf16.mxu0 0
        %1387 = vmatpush1.bf16.msra.mxu0 %v1384
        %1388 = vmatprep.subr.bf16.mxu0 0
        %1389 = vmatpush1.bf16.msra.mxu0 0
        %1390 = vmatprep.subr.bf16.mxu0 0
        %1391 = vmatpush1.bf16.msra.mxu0 0
        %1392 = vmatprep.subr.bf16.mxu0 0
        %1393 = vmatpush1.bf16.msra.mxu0 0
        %1394 = vmatprep.subr.bf16.mxu0 0
        %1395 = vmatpush1.bf16.msra.mxu0 0
        %1396 = vmatprep.subr.bf16.mxu0 0
        %1397 = vmatpush1.bf16.msra.mxu0 0
        %1398 = vmatprep.subr.bf16.mxu0 0
        %1399 = vmatpush1.bf16.msra.mxu0 0
        %1400 = vmatprep.subr.bf16.mxu0 0
        %1401 = vmatpush1.bf16.msra.mxu0 0
        %1402 = vmatprep.subr.bf16.mxu0 0
        %1403 = vmatpush1.bf16.msra.mxu0 0
        %1404 = vmatprep.subr.bf16.mxu0 0
        %1405 = vmatpush1.bf16.msra.mxu0 0
        %1406 = vmatprep.subr.bf16.mxu0 0
        %1407 = vmatpush1.bf16.msra.mxu0 0
        %1408 = vmatprep.subr.bf16.mxu0 0
        %1409 = vmatpush1.bf16.msra.mxu0 0
        %1410 = vmatprep.subr.bf16.mxu0 0
        %1411 = vmatpush1.bf16.msra.mxu0 0
        %1412 = vmatprep.subr.bf16.mxu0 0
        %1413 = vmatpush1.bf16.msra.mxu0 0
        %1414 = vmatprep.subr.bf16.mxu0 0
        %1415 = vmatpush1.bf16.msra.mxu0 0
        %1416 = vmatprep.subr.bf16.mxu0 0
        %1417 = vmatpush1.bf16.msra.mxu0 0
        %1418 = vmatprep.mubr.bf16.mxu0 0
        %1419 = vmatmul.mubr.bf16.gmra.mrb[0].mxu0 %v1381
        %v1420 = vpop.f32.mrb[0].mxu0
        %v1421 = vadd.f32 0.0, %v1420
        %v1422 = vpop.f32.mrb[0].mxu0
        %v1423 = vpop.f32.mrb[0].mxu0
        %v1424 = vpop.f32.mrb[0].mxu0
        %1425 = vdwg.mxu0
        %v1426 = vpack.c.bf16 %v1421, %v1421
        %v1428 = vunpack.c.l.b16 %v1426
        %v1429 = vpack.c.b16 %v1428, %v1428
        %1430 = vrot.lane.b32.xlu0 %v1429, 40
        %v1431 = vpop.permute.xlu0 %1430
        %vm1433 = vcmask 388416
        %1434 = vst.msk [vmem:[#allocation4] sm:$0xf] %vm1433, %v1431
        %1435 = vrot.lane.b32.xlu0 %v953, 112
        %v1436 = vpop.permute.xlu0 %1435
        %1437 = vrot.lane.b32.xlu0 %v1023, 112
        %v1438 = vpop.permute.xlu0 %1437
        %v1440 = vsel %vm962, %v1436, 0
        %v1443 = vsel %vm962, %v1438, 0
        %1445 = vmatprep.subr.bf16.mxu0 0
        %1446 = vmatpush1.bf16.xpose.msra.mxu0 %v1443
        %1447 = vmatprep.subr.bf16.mxu0 0
        %1448 = vmatpush1.bf16.xpose.msra.mxu0 0
        %1449 = vmatprep.subr.bf16.mxu0 0
        %1450 = vmatpush1.bf16.xpose.msra.mxu0 0
        %1451 = vmatprep.subr.bf16.mxu0 0
        %1452 = vmatpush1.bf16.xpose.msra.mxu0 0
        %1453 = vmatprep.subr.bf16.mxu0 0
        %1454 = vmatpush1.bf16.xpose.msra.mxu0 0
        %1455 = vmatprep.subr.bf16.mxu0 0
        %1456 = vmatpush1.bf16.xpose.msra.mxu0 0
        %1457 = vmatprep.subr.bf16.mxu0 0
        %1458 = vmatpush1.bf16.xpose.msra.mxu0 0
        %1459 = vmatprep.subr.bf16.mxu0 0
        %1460 = vmatpush1.bf16.xpose.msra.mxu0 0
        %1461 = vmatprep.subr.bf16.mxu0 0
        %1462 = vmatpush1.bf16.xpose.msra.mxu0 0
        %1463 = vmatprep.subr.bf16.mxu0 0
        %1464 = vmatpush1.bf16.xpose.msra.mxu0 0
        %1465 = vmatprep.subr.bf16.mxu0 0
        %1466 = vmatpush1.bf16.xpose.msra.mxu0 0
        %1467 = vmatprep.subr.bf16.mxu0 0
        %1468 = vmatpush1.bf16.xpose.msra.mxu0 0
        %1469 = vmatprep.subr.bf16.mxu0 0
        %1470 = vmatpush1.bf16.xpose.msra.mxu0 0
        %1471 = vmatprep.subr.bf16.mxu0 0
        %1472 = vmatpush1.bf16.xpose.msra.mxu0 0
        %1473 = vmatprep.subr.bf16.mxu0 0
        %1474 = vmatpush1.bf16.xpose.msra.mxu0 0
        %1475 = vmatprep.subr.bf16.mxu0 0
        %1476 = vmatpush1.bf16.xpose.msra.mxu0 0
        %1477 = vmatprep.mubr.bf16.mxu0 0
        %1478 = vmatmul.mubr.bf16.gmra.mrb[0].mxu0 %v1440
        %v1479 = vpop.f32.mrb[0].mxu0
        %v1480 = vadd.f32 %v960, %v1479
        %v1481 = vpop.f32.mrb[0].mxu0
        %v1482 = vpop.f32.mrb[0].mxu0
        %v1483 = vpop.f32.mrb[0].mxu0
        %1484 = vdwg.mxu0
        %v1485 = vsel %vm962, %v1480, -inf
        %1486 = vmax.xlane.f32.xlu0 %v1485
        %v1487 = vpop.xlane.xlu0 %1486
        %v1488 = vsub.f32 %v1480, %v1487
        %v1489 = vmul.f32 %v1488, 1.442695
        %v1490 = vpow.pop %v1489
        %v1491 = vsel %vm962, %v1490, 0.0
        %1492 = vadd.xlane.f32.xlu0 %v1491
        %v1493 = vpop.xlane.xlu0 %1492
        %v1494 = vrcp.pop %v1493
        %v1495 = vmul.f32 %v1490, %v1494
        %v1496 = vpack.c.bf16 %v1495, %v1495
        %1497 = vrot.lane.b32.xlu0 %v1023, 80
        %v1498 = vpop.permute.xlu0 %1497
        %v1500 = vsel %vm962, %v1496, 0
        %v1503 = vsel %vm1029, %v1498, 0
        %1505 = vmatprep.subr.bf16.mxu0 0
        %1506 = vmatpush1.bf16.msra.mxu0 %v1503
        %1507 = vmatprep.subr.bf16.mxu0 0
        %1508 = vmatpush1.bf16.msra.mxu0 0
        %1509 = vmatprep.subr.bf16.mxu0 0
        %1510 = vmatpush1.bf16.msra.mxu0 0
        %1511 = vmatprep.subr.bf16.mxu0 0
        %1512 = vmatpush1.bf16.msra.mxu0 0
        %1513 = vmatprep.subr.bf16.mxu0 0
        %1514 = vmatpush1.bf16.msra.mxu0 0
        %1515 = vmatprep.subr.bf16.mxu0 0
        %1516 = vmatpush1.bf16.msra.mxu0 0
        %1517 = vmatprep.subr.bf16.mxu0 0
        %1518 = vmatpush1.bf16.msra.mxu0 0
        %1519 = vmatprep.subr.bf16.mxu0 0
        %1520 = vmatpush1.bf16.msra.mxu0 0
        %1521 = vmatprep.subr.bf16.mxu0 0
        %1522 = vmatpush1.bf16.msra.mxu0 0
        %1523 = vmatprep.subr.bf16.mxu0 0
        %1524 = vmatpush1.bf16.msra.mxu0 0
        %1525 = vmatprep.subr.bf16.mxu0 0
        %1526 = vmatpush1.bf16.msra.mxu0 0
        %1527 = vmatprep.subr.bf16.mxu0 0
        %1528 = vmatpush1.bf16.msra.mxu0 0
        %1529 = vmatprep.subr.bf16.mxu0 0
        %1530 = vmatpush1.bf16.msra.mxu0 0
        %1531 = vmatprep.subr.bf16.mxu0 0
        %1532 = vmatpush1.bf16.msra.mxu0 0
        %1533 = vmatprep.subr.bf16.mxu0 0
        %1534 = vmatpush1.bf16.msra.mxu0 0
        %1535 = vmatprep.subr.bf16.mxu0 0
        %1536 = vmatpush1.bf16.msra.mxu0 0
        %1537 = vmatprep.mubr.bf16.mxu0 0
        %1538 = vmatmul.mubr.bf16.gmra.mrb[0].mxu0 %v1500
        %v1539 = vpop.f32.mrb[0].mxu0
        %v1540 = vadd.f32 0.0, %v1539
        %v1541 = vpop.f32.mrb[0].mxu0
        %v1542 = vpop.f32.mrb[0].mxu0
        %v1543 = vpop.f32.mrb[0].mxu0
        %1544 = vdwg.mxu0
        %v1545 = vpack.c.bf16 %v1540, %v1540
        %v1547 = vunpack.c.l.b16 %v1545
        %v1548 = vpack.c.b16 %v1547, %v1547
        %1549 = vrot.lane.b32.xlu0 %v1548, 16
        %v1550 = vpop.permute.xlu0 %1549
        %vm1552 = vcmask 191616
        %1553 = vst.msk [vmem:[#allocation4] sm:$0xf] %vm1552, %v1550
        %1554 = vrot.lane.b32.xlu0 %v953, 80
        %v1555 = vpop.permute.xlu0 %1554
        %1556 = vrot.lane.b32.xlu0 %v1139, 112
        %v1557 = vpop.permute.xlu0 %1556
        %v1559 = vsel %vm962, %v1555, 0
        %v1562 = vsel %vm962, %v1557, 0
        %1564 = vmatprep.subr.bf16.mxu0 0
        %1565 = vmatpush1.bf16.xpose.msra.mxu0 %v1562
        %1566 = vmatprep.subr.bf16.mxu0 0
        %1567 = vmatpush1.bf16.xpose.msra.mxu0 0
        %1568 = vmatprep.subr.bf16.mxu0 0
        %1569 = vmatpush1.bf16.xpose.msra.mxu0 0
        %1570 = vmatprep.subr.bf16.mxu0 0
        %1571 = vmatpush1.bf16.xpose.msra.mxu0 0
        %1572 = vmatprep.subr.bf16.mxu0 0
        %1573 = vmatpush1.bf16.xpose.msra.mxu0 0
        %1574 = vmatprep.subr.bf16.mxu0 0
        %1575 = vmatpush1.bf16.xpose.msra.mxu0 0
        %1576 = vmatprep.subr.bf16.mxu0 0
        %1577 = vmatpush1.bf16.xpose.msra.mxu0 0
        %1578 = vmatprep.subr.bf16.mxu0 0
        %1579 = vmatpush1.bf16.xpose.msra.mxu0 0
        %1580 = vmatprep.subr.bf16.mxu0 0
        %1581 = vmatpush1.bf16.xpose.msra.mxu0 0
        %1582 = vmatprep.subr.bf16.mxu0 0
        %1583 = vmatpush1.bf16.xpose.msra.mxu0 0
        %1584 = vmatprep.subr.bf16.mxu0 0
        %1585 = vmatpush1.bf16.xpose.msra.mxu0 0
        %1586 = vmatprep.subr.bf16.mxu0 0
        %1587 = vmatpush1.bf16.xpose.msra.mxu0 0
        %1588 = vmatprep.subr.bf16.mxu0 0
        %1589 = vmatpush1.bf16.xpose.msra.mxu0 0
        %1590 = vmatprep.subr.bf16.mxu0 0
        %1591 = vmatpush1.bf16.xpose.msra.mxu0 0
        %1592 = vmatprep.subr.bf16.mxu0 0
        %1593 = vmatpush1.bf16.xpose.msra.mxu0 0
        %1594 = vmatprep.subr.bf16.mxu0 0
        %1595 = vmatpush1.bf16.xpose.msra.mxu0 0
        %1596 = vmatprep.mubr.bf16.mxu0 0
        %1597 = vmatmul.mubr.bf16.gmra.mrb[0].mxu0 %v1559
        %v1598 = vpop.f32.mrb[0].mxu0
        %v1599 = vadd.f32 %v960, %v1598
        %v1600 = vpop.f32.mrb[0].mxu0
        %v1601 = vpop.f32.mrb[0].mxu0
        %v1602 = vpop.f32.mrb[0].mxu0
        %1603 = vdwg.mxu0
        %v1604 = vsel %vm962, %v1599, -inf
        %1605 = vmax.xlane.f32.xlu0 %v1604
        %v1606 = vpop.xlane.xlu0 %1605
        %v1607 = vsub.f32 %v1599, %v1606
        %v1608 = vmul.f32 %v1607, 1.442695
        %v1609 = vpow.pop %v1608
        %v1610 = vsel %vm962, %v1609, 0.0
        %1611 = vadd.xlane.f32.xlu0 %v1610
        %v1612 = vpop.xlane.xlu0 %1611
        %v1613 = vrcp.pop %v1612
        %v1614 = vmul.f32 %v1609, %v1613
        %v1615 = vpack.c.bf16 %v1614, %v1614
        %1616 = vrot.lane.b32.xlu0 %v1139, 80
        %v1617 = vpop.permute.xlu0 %1616
        %v1619 = vsel %vm962, %v1615, 0
        %v1622 = vsel %vm1029, %v1617, 0
        %1624 = vmatprep.subr.bf16.mxu0 0
        %1625 = vmatpush1.bf16.msra.mxu0 %v1622
        %1626 = vmatprep.subr.bf16.mxu0 0
        %1627 = vmatpush1.bf16.msra.mxu0 0
        %1628 = vmatprep.subr.bf16.mxu0 0
        %1629 = vmatpush1.bf16.msra.mxu0 0
        %1630 = vmatprep.subr.bf16.mxu0 0
        %1631 = vmatpush1.bf16.msra.mxu0 0
        %1632 = vmatprep.subr.bf16.mxu0 0
        %1633 = vmatpush1.bf16.msra.mxu0 0
        %1634 = vmatprep.subr.bf16.mxu0 0
        %1635 = vmatpush1.bf16.msra.mxu0 0
        %1636 = vmatprep.subr.bf16.mxu0 0
        %1637 = vmatpush1.bf16.msra.mxu0 0
        %1638 = vmatprep.subr.bf16.mxu0 0
        %1639 = vmatpush1.bf16.msra.mxu0 0
        %1640 = vmatprep.subr.bf16.mxu0 0
        %1641 = vmatpush1.bf16.msra.mxu0 0
        %1642 = vmatprep.subr.bf16.mxu0 0
        %1643 = vmatpush1.bf16.msra.mxu0 0
        %1644 = vmatprep.subr.bf16.mxu0 0
        %1645 = vmatpush1.bf16.msra.mxu0 0
        %1646 = vmatprep.subr.bf16.mxu0 0
        %1647 = vmatpush1.bf16.msra.mxu0 0
        %1648 = vmatprep.subr.bf16.mxu0 0
        %1649 = vmatpush1.bf16.msra.mxu0 0
        %1650 = vmatprep.subr.bf16.mxu0 0
        %1651 = vmatpush1.bf16.msra.mxu0 0
        %1652 = vmatprep.subr.bf16.mxu0 0
        %1653 = vmatpush1.bf16.msra.mxu0 0
        %1654 = vmatprep.subr.bf16.mxu0 0
        %1655 = vmatpush1.bf16.msra.mxu0 0
        %1656 = vmatprep.mubr.bf16.mxu0 0
        %1657 = vmatmul.mubr.bf16.gmra.mrb[0].mxu0 %v1619
        %v1658 = vpop.f32.mrb[0].mxu0
        %v1659 = vadd.f32 0.0, %v1658
        %v1660 = vpop.f32.mrb[0].mxu0
        %v1661 = vpop.f32.mrb[0].mxu0
        %v1662 = vpop.f32.mrb[0].mxu0
        %1663 = vdwg.mxu0
        %v1664 = vpack.c.bf16 %v1659, %v1659
        %v1666 = vunpack.c.l.b16 %v1664
        %v1667 = vpack.c.b16 %v1666, %v1666
        %1668 = vrot.lane.b32.xlu0 %v1667, 48
        %v1669 = vpop.permute.xlu0 %1668
        %vm1671 = vcmask 454016
        %1672 = vst.msk [vmem:[#allocation4] sm:$0xf] %vm1671, %v1669
        %1673 = vrot.lane.b32.xlu0 %v953, 104
        %v1674 = vpop.permute.xlu0 %1673
        %1675 = vrot.lane.b32.xlu0 %v1023, 104
        %v1676 = vpop.permute.xlu0 %1675
        %v1678 = vsel %vm962, %v1674, 0
        %v1681 = vsel %vm962, %v1676, 0
        %1683 = vmatprep.subr.bf16.mxu0 0
        %1684 = vmatpush1.bf16.xpose.msra.mxu0 %v1681
        %1685 = vmatprep.subr.bf16.mxu0 0
        %1686 = vmatpush1.bf16.xpose.msra.mxu0 0
        %1687 = vmatprep.subr.bf16.mxu0 0
        %1688 = vmatpush1.bf16.xpose.msra.mxu0 0
        %1689 = vmatprep.subr.bf16.mxu0 0
        %1690 = vmatpush1.bf16.xpose.msra.mxu0 0
        %1691 = vmatprep.subr.bf16.mxu0 0
        %1692 = vmatpush1.bf16.xpose.msra.mxu0 0
        %1693 = vmatprep.subr.bf16.mxu0 0
        %1694 = vmatpush1.bf16.xpose.msra.mxu0 0
        %1695 = vmatprep.subr.bf16.mxu0 0
        %1696 = vmatpush1.bf16.xpose.msra.mxu0 0
        %1697 = vmatprep.subr.bf16.mxu0 0
        %1698 = vmatpush1.bf16.xpose.msra.mxu0 0
        %1699 = vmatprep.subr.bf16.mxu0 0
        %1700 = vmatpush1.bf16.xpose.msra.mxu0 0
        %1701 = vmatprep.subr.bf16.mxu0 0
        %1702 = vmatpush1.bf16.xpose.msra.mxu0 0
        %1703 = vmatprep.subr.bf16.mxu0 0
        %1704 = vmatpush1.bf16.xpose.msra.mxu0 0
        %1705 = vmatprep.subr.bf16.mxu0 0
        %1706 = vmatpush1.bf16.xpose.msra.mxu0 0
        %1707 = vmatprep.subr.bf16.mxu0 0
        %1708 = vmatpush1.bf16.xpose.msra.mxu0 0
        %1709 = vmatprep.subr.bf16.mxu0 0
        %1710 = vmatpush1.bf16.xpose.msra.mxu0 0
        %1711 = vmatprep.subr.bf16.mxu0 0
        %1712 = vmatpush1.bf16.xpose.msra.mxu0 0
        %1713 = vmatprep.subr.bf16.mxu0 0
        %1714 = vmatpush1.bf16.xpose.msra.mxu0 0
        %1715 = vmatprep.mubr.bf16.mxu0 0
        %1716 = vmatmul.mubr.bf16.gmra.mrb[0].mxu0 %v1678
        %v1717 = vpop.f32.mrb[0].mxu0
        %v1718 = vadd.f32 %v960, %v1717
        %v1719 = vpop.f32.mrb[0].mxu0
        %v1720 = vpop.f32.mrb[0].mxu0
        %v1721 = vpop.f32.mrb[0].mxu0
        %1722 = vdwg.mxu0
        %v1723 = vsel %vm962, %v1718, -inf
        %1724 = vmax.xlane.f32.xlu0 %v1723
        %v1725 = vpop.xlane.xlu0 %1724
        %v1726 = vsub.f32 %v1718, %v1725
        %v1727 = vmul.f32 %v1726, 1.442695
        %v1728 = vpow.pop %v1727
        %v1729 = vsel %vm962, %v1728, 0.0
        %1730 = vadd.xlane.f32.xlu0 %v1729
        %v1731 = vpop.xlane.xlu0 %1730
        %v1732 = vrcp.pop %v1731
        %v1733 = vmul.f32 %v1728, %v1732
        %v1734 = vpack.c.bf16 %v1733, %v1733
        %1735 = vrot.lane.b32.xlu0 %v1023, 72
        %v1736 = vpop.permute.xlu0 %1735
        %v1738 = vsel %vm962, %v1734, 0
        %v1741 = vsel %vm1029, %v1736, 0
        %1743 = vmatprep.subr.bf16.mxu0 0
        %1744 = vmatpush1.bf16.msra.mxu0 %v1741
        %1745 = vmatprep.subr.bf16.mxu0 0
        %1746 = vmatpush1.bf16.msra.mxu0 0
        %1747 = vmatprep.subr.bf16.mxu0 0
        %1748 = vmatpush1.bf16.msra.mxu0 0
        %1749 = vmatprep.subr.bf16.mxu0 0
        %1750 = vmatpush1.bf16.msra.mxu0 0
        %1751 = vmatprep.subr.bf16.mxu0 0
        %1752 = vmatpush1.bf16.msra.mxu0 0
        %1753 = vmatprep.subr.bf16.mxu0 0
        %1754 = vmatpush1.bf16.msra.mxu0 0
        %1755 = vmatprep.subr.bf16.mxu0 0
        %1756 = vmatpush1.bf16.msra.mxu0 0
        %1757 = vmatprep.subr.bf16.mxu0 0
        %1758 = vmatpush1.bf16.msra.mxu0 0
        %1759 = vmatprep.subr.bf16.mxu0 0
        %1760 = vmatpush1.bf16.msra.mxu0 0
        %1761 = vmatprep.subr.bf16.mxu0 0
        %1762 = vmatpush1.bf16.msra.mxu0 0
        %1763 = vmatprep.subr.bf16.mxu0 0
        %1764 = vmatpush1.bf16.msra.mxu0 0
        %1765 = vmatprep.subr.bf16.mxu0 0
        %1766 = vmatpush1.bf16.msra.mxu0 0
        %1767 = vmatprep.subr.bf16.mxu0 0
        %1768 = vmatpush1.bf16.msra.mxu0 0
        %1769 = vmatprep.subr.bf16.mxu0 0
        %1770 = vmatpush1.bf16.msra.mxu0 0
        %1771 = vmatprep.subr.bf16.mxu0 0
        %1772 = vmatpush1.bf16.msra.mxu0 0
        %1773 = vmatprep.subr.bf16.mxu0 0
        %1774 = vmatpush1.bf16.msra.mxu0 0
        %1775 = vmatprep.mubr.bf16.mxu0 0
        %1776 = vmatmul.mubr.bf16.gmra.mrb[0].mxu0 %v1738
        %v1777 = vpop.f32.mrb[0].mxu0
        %v1778 = vadd.f32 0.0, %v1777
        %v1779 = vpop.f32.mrb[0].mxu0
        %v1780 = vpop.f32.mrb[0].mxu0
        %v1781 = vpop.f32.mrb[0].mxu0
        %1782 = vdwg.mxu0
        %v1783 = vpack.c.bf16 %v1778, %v1778
        %v1785 = vunpack.c.l.b16 %v1783
        %v1786 = vpack.c.b16 %v1785, %v1785
        %1787 = vrot.lane.b32.xlu0 %v1786, 24
        %v1788 = vpop.permute.xlu0 %1787
        %vm1790 = vcmask 257216
        %1791 = vst.msk [vmem:[#allocation4] sm:$0xf] %vm1790, %v1788
        %1792 = vrot.lane.b32.xlu0 %v953, 72
        %v1793 = vpop.permute.xlu0 %1792
        %1794 = vrot.lane.b32.xlu0 %v1139, 104
        %v1795 = vpop.permute.xlu0 %1794
        %v1797 = vsel %vm962, %v1793, 0
        %v1800 = vsel %vm962, %v1795, 0
        %1802 = vmatprep.subr.bf16.mxu0 0
        %1803 = vmatpush1.bf16.xpose.msra.mxu0 %v1800
        %1804 = vmatprep.subr.bf16.mxu0 0
        %1805 = vmatpush1.bf16.xpose.msra.mxu0 0
        %1806 = vmatprep.subr.bf16.mxu0 0
        %1807 = vmatpush1.bf16.xpose.msra.mxu0 0
        %1808 = vmatprep.subr.bf16.mxu0 0
        %1809 = vmatpush1.bf16.xpose.msra.mxu0 0
        %1810 = vmatprep.subr.bf16.mxu0 0
        %1811 = vmatpush1.bf16.xpose.msra.mxu0 0
        %1812 = vmatprep.subr.bf16.mxu0 0
        %1813 = vmatpush1.bf16.xpose.msra.mxu0 0
        %1814 = vmatprep.subr.bf16.mxu0 0
        %1815 = vmatpush1.bf16.xpose.msra.mxu0 0
        %1816 = vmatprep.subr.bf16.mxu0 0
        %1817 = vmatpush1.bf16.xpose.msra.mxu0 0
        %1818 = vmatprep.subr.bf16.mxu0 0
        %1819 = vmatpush1.bf16.xpose.msra.mxu0 0
        %1820 = vmatprep.subr.bf16.mxu0 0
        %1821 = vmatpush1.bf16.xpose.msra.mxu0 0
        %1822 = vmatprep.subr.bf16.mxu0 0
        %1823 = vmatpush1.bf16.xpose.msra.mxu0 0
        %1824 = vmatprep.subr.bf16.mxu0 0
        %1825 = vmatpush1.bf16.xpose.msra.mxu0 0
        %1826 = vmatprep.subr.bf16.mxu0 0
        %1827 = vmatpush1.bf16.xpose.msra.mxu0 0
        %1828 = vmatprep.subr.bf16.mxu0 0
        %1829 = vmatpush1.bf16.xpose.msra.mxu0 0
        %1830 = vmatprep.subr.bf16.mxu0 0
        %1831 = vmatpush1.bf16.xpose.msra.mxu0 0
        %1832 = vmatprep.subr.bf16.mxu0 0
        %1833 = vmatpush1.bf16.xpose.msra.mxu0 0
        %1834 = vmatprep.mubr.bf16.mxu0 0
        %1835 = vmatmul.mubr.bf16.gmra.mrb[0].mxu0 %v1797
        %v1836 = vpop.f32.mrb[0].mxu0
        %v1837 = vadd.f32 %v960, %v1836
        %v1838 = vpop.f32.mrb[0].mxu0
        %v1839 = vpop.f32.mrb[0].mxu0
        %v1840 = vpop.f32.mrb[0].mxu0
        %1841 = vdwg.mxu0
        %v1842 = vsel %vm962, %v1837, -inf
        %1843 = vmax.xlane.f32.xlu0 %v1842
        %v1844 = vpop.xlane.xlu0 %1843
        %v1845 = vsub.f32 %v1837, %v1844
        %v1846 = vmul.f32 %v1845, 1.442695
        %v1847 = vpow.pop %v1846
        %v1848 = vsel %vm962, %v1847, 0.0
        %1849 = vadd.xlane.f32.xlu0 %v1848
        %v1850 = vpop.xlane.xlu0 %1849
        %v1851 = vrcp.pop %v1850
        %v1852 = vmul.f32 %v1847, %v1851
        %v1853 = vpack.c.bf16 %v1852, %v1852
        %1854 = vrot.lane.b32.xlu0 %v1139, 72
        %v1855 = vpop.permute.xlu0 %1854
        %v1857 = vsel %vm962, %v1853, 0
        %v1860 = vsel %vm1029, %v1855, 0
        %1862 = vmatprep.subr.bf16.mxu0 0
        %1863 = vmatpush1.bf16.msra.mxu0 %v1860
        %1864 = vmatprep.subr.bf16.mxu0 0
        %1865 = vmatpush1.bf16.msra.mxu0 0
        %1866 = vmatprep.subr.bf16.mxu0 0
        %1867 = vmatpush1.bf16.msra.mxu0 0
        %1868 = vmatprep.subr.bf16.mxu0 0
        %1869 = vmatpush1.bf16.msra.mxu0 0
        %1870 = vmatprep.subr.bf16.mxu0 0
        %1871 = vmatpush1.bf16.msra.mxu0 0
        %1872 = vmatprep.subr.bf16.mxu0 0
        %1873 = vmatpush1.bf16.msra.mxu0 0
        %1874 = vmatprep.subr.bf16.mxu0 0
        %1875 = vmatpush1.bf16.msra.mxu0 0
        %1876 = vmatprep.subr.bf16.mxu0 0
        %1877 = vmatpush1.bf16.msra.mxu0 0
        %1878 = vmatprep.subr.bf16.mxu0 0
        %1879 = vmatpush1.bf16.msra.mxu0 0
        %1880 = vmatprep.subr.bf16.mxu0 0
        %1881 = vmatpush1.bf16.msra.mxu0 0
        %1882 = vmatprep.subr.bf16.mxu0 0
        %1883 = vmatpush1.bf16.msra.mxu0 0
        %1884 = vmatprep.subr.bf16.mxu0 0
        %1885 = vmatpush1.bf16.msra.mxu0 0
        %1886 = vmatprep.subr.bf16.mxu0 0
        %1887 = vmatpush1.bf16.msra.mxu0 0
        %1888 = vmatprep.subr.bf16.mxu0 0
        %1889 = vmatpush1.bf16.msra.mxu0 0
        %1890 = vmatprep.subr.bf16.mxu0 0
        %1891 = vmatpush1.bf16.msra.mxu0 0
        %1892 = vmatprep.subr.bf16.mxu0 0
        %1893 = vmatpush1.bf16.msra.mxu0 0
        %1894 = vmatprep.mubr.bf16.mxu0 0
        %1895 = vmatmul.mubr.bf16.gmra.mrb[0].mxu0 %v1857
        %v1896 = vpop.f32.mrb[0].mxu0
        %v1897 = vadd.f32 0.0, %v1896
        %v1898 = vpop.f32.mrb[0].mxu0
        %v1899 = vpop.f32.mrb[0].mxu0
        %v1900 = vpop.f32.mrb[0].mxu0
        %1901 = vdwg.mxu0
        %v1902 = vpack.c.bf16 %v1897, %v1897
        %v1904 = vunpack.c.l.b16 %v1902
        %v1905 = vpack.c.b16 %v1904, %v1904
        %1906 = vrot.lane.b32.xlu0 %v1905, 56
        %v1907 = vpop.permute.xlu0 %1906
        %vm1909 = vcmask 519616
        %1910 = vst.msk [vmem:[#allocation4] sm:$0xf] %vm1909, %v1907
        %v1911 = vld [vmem:[#allocation4] sm:$0xf]
        %v1912 = vld [vmem:[%s10] sm:$0xf]
        %v1913 = vld [vmem:[%s10 + $0x4] sm:$0xf]
        %v1914 = vld [vmem:[%s10 + $0x8] sm:$0xf]
        %v1915 = vld [vmem:[%s10 + $0xc] sm:$0xf]
        %v1916 = vld [vmem:[%s10 + $0x10] sm:$0xf]
        %v1917 = vld [vmem:[%s10 + $0x14] sm:$0xf]
        %v1918 = vld [vmem:[%s10 + $0x18] sm:$0xf]
        %v1919 = vld [vmem:[%s10 + $0x1c] sm:$0xf]
        %v1920 = vld [vmem:[%s11] sm:$0x1]
        %v1922 = vlaneseq
        %v1923 = vshrl.u32 %v1922, 7
        %v1924 = vsub.s32 0, %v1923
        %v1925 = vrot.slane %v1920, %v1924
        %v1935 = vunpack.c.l.b16 %v1912
        %v1936 = vunpack.c.l.b16 %v1913
        %v1937 = vunpack.c.l.b16 %v1914
        %v1938 = vunpack.c.l.b16 %v1915
        %v1939 = vunpack.c.l.b16 %v1916
        %v1940 = vunpack.c.l.b16 %v1917
        %v1941 = vunpack.c.l.b16 %v1918
        %v1942 = vunpack.c.l.b16 %v1919
        %v1943 = vpack.c.b16 %v1936, %v1935
        %v1944 = vpack.c.b16 %v1938, %v1937
        %v1945 = vpack.c.b16 %v1940, %v1939
        %v1946 = vpack.c.b16 %v1942, %v1941
        %vm1951 = vcmask 523264
        %v1953 = vsel %vm1951, %v1911, 0
        %1955 = vmatprep.subr.bf16.mxu0 0
        %1956 = vmatpush1.bf16.msra.mxu0 %v1943
        %1957 = vmatprep.subr.bf16.mxu0 0
        %1958 = vmatpush1.bf16.msra.mxu0 %v1944
        %1959 = vmatprep.subr.bf16.mxu0 0
        %1960 = vmatpush1.bf16.msra.mxu0 %v1945
        %1961 = vmatprep.subr.bf16.mxu0 0
        %1962 = vmatpush1.bf16.msra.mxu0 %v1946
        %1963 = vmatprep.subr.bf16.mxu0 0
        %1964 = vmatpush1.bf16.msra.mxu0 0
        %1965 = vmatprep.subr.bf16.mxu0 0
        %1966 = vmatpush1.bf16.msra.mxu0 0
        %1967 = vmatprep.subr.bf16.mxu0 0
        %1968 = vmatpush1.bf16.msra.mxu0 0
        %1969 = vmatprep.subr.bf16.mxu0 0
        %1970 = vmatpush1.bf16.msra.mxu0 0
        %1971 = vmatprep.subr.bf16.mxu0 0
        %1972 = vmatpush1.bf16.msra.mxu0 0
        %1973 = vmatprep.subr.bf16.mxu0 0
        %1974 = vmatpush1.bf16.msra.mxu0 0
        %1975 = vmatprep.subr.bf16.mxu0 0
        %1976 = vmatpush1.bf16.msra.mxu0 0
        %1977 = vmatprep.subr.bf16.mxu0 0
        %1978 = vmatpush1.bf16.msra.mxu0 0
        %1979 = vmatprep.subr.bf16.mxu0 0
        %1980 = vmatpush1.bf16.msra.mxu0 0
        %1981 = vmatprep.subr.bf16.mxu0 0
        %1982 = vmatpush1.bf16.msra.mxu0 0
        %1983 = vmatprep.subr.bf16.mxu0 0
        %1984 = vmatpush1.bf16.msra.mxu0 0
        %1985 = vmatprep.subr.bf16.mxu0 0
        %1986 = vmatpush1.bf16.msra.mxu0 0
        %1987 = vmatprep.mubr.bf16.mxu0 0
        %1988 = vmatmul.mubr.bf16.gmra.mrb[0].mxu0 %v1953
        %v1989 = vpop.f32.mrb[0].mxu0
        %v1990 = vadd.f32 %v1925, %v1989
        %v1991 = vpop.f32.mrb[0].mxu0
        %v1992 = vpop.f32.mrb[0].mxu0
        %v1993 = vpop.f32.mrb[0].mxu0
        %1994 = vdwg.mxu0
        %v1995 = vadd.f32 %v1990, %v883
        %v1996 = vld [vmem:[%s12] sm:$0x1]
        %v1997 = vld [vmem:[%s13] sm:$0x1]
        %v1998 = vsel %vm909, %v1995, 0.0
        %1999 = vadd.xlane.f32.xlu0 %v1998
        %v2000 = vpop.xlane.xlu0 %1999
        %v2001 = vrcp.pop 32.0
        %v2002 = vmul.f32 %v2000, %v2001
        %v2003 = vsub.f32 %v1995, %v2002
        %v2004 = vmul.f32 %v2003, %v2003
        %v2005 = vsel %vm909, %v2004, 0.0
        %2006 = vadd.xlane.f32.xlu0 %v2005
        %v2007 = vpop.xlane.xlu0 %2006
        %v2008 = vmul.f32 %v2007, %v2001
        %v2009 = vadd.f32 %v2008, 1e-05
        %v2010 = vrsqrt.pop %v2009
        %v2011 = vmul.f32 %v2003, %v2010
        %v2013 = vlaneseq
        %v2014 = vshrl.u32 %v2013, 7
        %v2015 = vsub.s32 0, %v2014
        %v2016 = vrot.slane %v1996, %v2015
        %v2018 = vmul.f32 %v2011, %v2016
        %v2020 = vlaneseq
        %v2021 = vshrl.u32 %v2020, 7
        %v2022 = vsub.s32 0, %v2021
        %v2023 = vrot.slane %v1997, %v2022
        %v2025 = vadd.f32 %v2018, %v2023
        %v2026 = vpack.c.bf16 %v2025, %v2025
        %v2027 = vld [vmem:[%s14] sm:$0xf]
        %v2028 = vld [vmem:[%s14 + $0x4] sm:$0xf]
        %v2029 = vld [vmem:[%s14 + $0x8] sm:$0xf]
        %v2030 = vld [vmem:[%s14 + $0xc] sm:$0xf]
        %v2031 = vld [vmem:[%s15] sm:$0x1]
        %v2033 = vlaneseq
        %v2034 = vshrl.u32 %v2033, 7
        %v2035 = vsub.s32 0, %v2034
        %v2036 = vrot.slane %v2031, %v2035
        %v2042 = vunpack.c.l.b16 %v2027
        %v2043 = vunpack.c.l.b16 %v2028
        %v2044 = vunpack.c.l.b16 %v2029
        %v2045 = vunpack.c.l.b16 %v2030
        %v2046 = vpack.c.b16 %v2043, %v2042
        %v2047 = vpack.c.b16 %v2045, %v2044
        %v2051 = vsel %vm909, %v2026, 0
        %2053 = vmatprep.subr.bf16.mxu0 0
        %2054 = vmatpush1.bf16.msra.mxu0 %v2046
        %2055 = vmatprep.subr.bf16.mxu0 0
        %2056 = vmatpush1.bf16.msra.mxu0 %v2047
        %2057 = vmatprep.subr.bf16.mxu0 0
        %2058 = vmatpush1.bf16.msra.mxu0 0
        %2059 = vmatprep.subr.bf16.mxu0 0
        %2060 = vmatpush1.bf16.msra.mxu0 0
        %2061 = vmatprep.subr.bf16.mxu0 0
        %2062 = vmatpush1.bf16.msra.mxu0 0
        %2063 = vmatprep.subr.bf16.mxu0 0
        %2064 = vmatpush1.bf16.msra.mxu0 0
        %2065 = vmatprep.subr.bf16.mxu0 0
        %2066 = vmatpush1.bf16.msra.mxu0 0
        %2067 = vmatprep.subr.bf16.mxu0 0
        %2068 = vmatpush1.bf16.msra.mxu0 0
        %2069 = vmatprep.subr.bf16.mxu0 0
        %2070 = vmatpush1.bf16.msra.mxu0 0
        %2071 = vmatprep.subr.bf16.mxu0 0
        %2072 = vmatpush1.bf16.msra.mxu0 0
        %2073 = vmatprep.subr.bf16.mxu0 0
        %2074 = vmatpush1.bf16.msra.mxu0 0
        %2075 = vmatprep.subr.bf16.mxu0 0
        %2076 = vmatpush1.bf16.msra.mxu0 0
        %2077 = vmatprep.subr.bf16.mxu0 0
        %2078 = vmatpush1.bf16.msra.mxu0 0
        %2079 = vmatprep.subr.bf16.mxu0 0
        %2080 = vmatpush1.bf16.msra.mxu0 0
        %2081 = vmatprep.subr.bf16.mxu0 0
        %2082 = vmatpush1.bf16.msra.mxu0 0
        %2083 = vmatprep.subr.bf16.mxu0 0
        %2084 = vmatpush1.bf16.msra.mxu0 0
        %2085 = vmatprep.mubr.bf16.mxu0 0
        %2086 = vmatmul.mubr.bf16.gmra.mrb[0].mxu0 %v2051
        %v2087 = vpop.f32.mrb[0].mxu0
        %v2088 = vadd.f32 %v2036, %v2087
        %v2089 = vpop.f32.mrb[0].mxu0
        %v2090 = vpop.f32.mrb[0].mxu0
        %v2091 = vpop.f32.mrb[0].mxu0
        %2092 = vdwg.mxu0
        %v2093 = vmax.f32 %v2088, 0.0
        %v2094 = vpack.c.bf16 %v2093, %v2093
        %v2095 = vld [vmem:[%s16] sm:$0xf]
        %v2096 = vld [vmem:[%s16 + $0x4] sm:$0xf]
        %v2097 = vld [vmem:[%s16 + $0x8] sm:$0xf]
        %v2098 = vld [vmem:[%s16 + $0xc] sm:$0xf]
        %v2099 = vld [vmem:[%s16 + $0x10] sm:$0xf]
        %v2100 = vld [vmem:[%s16 + $0x14] sm:$0xf]
        %v2101 = vld [vmem:[%s16 + $0x18] sm:$0xf]
        %v2102 = vld [vmem:[%s16 + $0x1c] sm:$0xf]
        %v2103 = vld [vmem:[%s17] sm:$0x1]
        %v2105 = vlaneseq
        %v2106 = vshrl.u32 %v2105, 7
        %v2107 = vsub.s32 0, %v2106
        %v2108 = vrot.slane %v2103, %v2107
        %v2118 = vunpack.c.l.b16 %v2095
        %v2119 = vunpack.c.l.b16 %v2096
        %v2120 = vunpack.c.l.b16 %v2097
        %v2121 = vunpack.c.l.b16 %v2098
        %v2122 = vunpack.c.l.b16 %v2099
        %v2123 = vunpack.c.l.b16 %v2100
        %v2124 = vunpack.c.l.b16 %v2101
        %v2125 = vunpack.c.l.b16 %v2102
        %v2126 = vpack.c.b16 %v2119, %v2118
        %v2127 = vpack.c.b16 %v2121, %v2120
        %v2128 = vpack.c.b16 %v2123, %v2122
        %v2129 = vpack.c.b16 %v2125, %v2124
        %v2135 = vsel %vm1951, %v2094, 0
        %2137 = vmatprep.subr.bf16.mxu0 0
        %2138 = vmatpush1.bf16.msra.mxu0 %v2126
        %2139 = vmatprep.subr.bf16.mxu0 0
        %2140 = vmatpush1.bf16.msra.mxu0 %v2127
        %2141 = vmatprep.subr.bf16.mxu0 0
        %2142 = vmatpush1.bf16.msra.mxu0 %v2128
        %2143 = vmatprep.subr.bf16.mxu0 0
        %2144 = vmatpush1.bf16.msra.mxu0 %v2129
        %2145 = vmatprep.subr.bf16.mxu0 0
        %2146 = vmatpush1.bf16.msra.mxu0 0
        %2147 = vmatprep.subr.bf16.mxu0 0
        %2148 = vmatpush1.bf16.msra.mxu0 0
        %2149 = vmatprep.subr.bf16.mxu0 0
        %2150 = vmatpush1.bf16.msra.mxu0 0
        %2151 = vmatprep.subr.bf16.mxu0 0
        %2152 = vmatpush1.bf16.msra.mxu0 0
        %2153 = vmatprep.subr.bf16.mxu0 0
        %2154 = vmatpush1.bf16.msra.mxu0 0
        %2155 = vmatprep.subr.bf16.mxu0 0
        %2156 = vmatpush1.bf16.msra.mxu0 0
        %2157 = vmatprep.subr.bf16.mxu0 0
        %2158 = vmatpush1.bf16.msra.mxu0 0
        %2159 = vmatprep.subr.bf16.mxu0 0
        %2160 = vmatpush1.bf16.msra.mxu0 0
        %2161 = vmatprep.subr.bf16.mxu0 0
        %2162 = vmatpush1.bf16.msra.mxu0 0
        %2163 = vmatprep.subr.bf16.mxu0 0
        %2164 = vmatpush1.bf16.msra.mxu0 0
        %2165 = vmatprep.subr.bf16.mxu0 0
        %2166 = vmatpush1.bf16.msra.mxu0 0
        %2167 = vmatprep.subr.bf16.mxu0 0
        %2168 = vmatpush1.bf16.msra.mxu0 0
        %2169 = vmatprep.mubr.bf16.mxu0 0
        %2170 = vmatmul.mubr.bf16.gmra.mrb[0].mxu0 %v2135
        %v2171 = vpop.f32.mrb[0].mxu0
        %v2172 = vadd.f32 %v2108, %v2171
        %v2173 = vpop.f32.mrb[0].mxu0
        %v2174 = vpop.f32.mrb[0].mxu0
        %v2175 = vpop.f32.mrb[0].mxu0
        %2176 = vdwg.mxu0
        %v2177 = vadd.f32 %v2172, %v2025
        %v2178 = vld [vmem:[%s18] sm:$0x1]
        %v2179 = vld [vmem:[%s19] sm:$0x1]
        %v2180 = vsel %vm909, %v2177, 0.0
        %2181 = vadd.xlane.f32.xlu0 %v2180
        %v2182 = vpop.xlane.xlu0 %2181
        %v2183 = vmul.f32 %v2182, %v2001
        %v2184 = vsub.f32 %v2177, %v2183
        %v2185 = vmul.f32 %v2184, %v2184
        %v2186 = vsel %vm909, %v2185, 0.0
        %2187 = vadd.xlane.f32.xlu0 %v2186
        %v2188 = vpop.xlane.xlu0 %2187
        %v2189 = vmul.f32 %v2188, %v2001
        %v2190 = vadd.f32 %v2189, 1e-05
        %v2191 = vrsqrt.pop %v2190
        %v2192 = vmul.f32 %v2184, %v2191
        %v2194 = vlaneseq
        %v2195 = vshrl.u32 %v2194, 7
        %v2196 = vsub.s32 0, %v2195
        %v2197 = vrot.slane %v2178, %v2196
        %v2199 = vmul.f32 %v2192, %v2197
        %v2201 = vlaneseq
        %v2202 = vshrl.u32 %v2201, 7
        %v2203 = vsub.s32 0, %v2202
        %v2204 = vrot.slane %v2179, %v2203
        %v2206 = vadd.f32 %v2199, %v2204
        %2207 = vst.msk [vmem:[%s727] sm:$0xff] %vm909, %v2206
        %s2208 = sand.u32 %s504, 1
        %s2209 = scalar_lea.sflag [#allocation7], %s2208
        %s2210 = sand.u32 %s504, 1
        %s2211 = smul.addr %s2210, 8
        %s2212 = scalar_lea.vmem [#allocation10], %s2211
        // Predicated region
        $region113: #{tpu_custom_call.1} parent=99 // pred_check
          %p2213 = pneg %p514
        $region114: #{tpu_custom_call.1} parent=99 // pred_check_branch
          %2215 = sbr.rel (%p2213) target = $region116
        $region115: #{tpu_custom_call.1} parent=99 // pred_region
          %s2217 = ssub.s32 128, 128
          %2218 = vsyncadd %s2209, %s2217
          %s2219 = sadd.s32 %s45, %s44
          %s2220 = smul.addr %s2219, 128
          %s2221 = scalar_lea.hbm %s20, %s2220
          %s2223 = sshll.u32 %s2212, 4
          %s2224 = int_to_ptr.vmem [resolvable:$true] %s2223
          %2226 = dma.vmem_to_hbm [thread:$0]  %s2224, 128, %s2221, %s2209
        $region116: #{tpu_custom_call.1} parent=99 // pred_fallthru
          _
      $region100: #{tpu_custom_call.1} parent=5 // pred_fallthru
        _
      %p2227 = scmp.le.s32.totalorder 2, %s35
      // Predicated region
      $region117: #{tpu_custom_call.1} parent=5 // pred_check
        %p2228 = pneg %p2227
      $region118: #{tpu_custom_call.1} parent=5 // pred_check_branch
        %2230 = sbr.rel (%p2228) target = $region120
      $region119: #{tpu_custom_call.1} parent=5 // pred_region
        %s2231 = ssub.s32 %s35, 2
        // Predicated region
        $region121: #{tpu_custom_call.1} parent=119 // pred_check
          %p2232 = pneg %p520
        $region122: #{tpu_custom_call.1} parent=119 // pred_check_branch
          %2234 = sbr.rel (%p2232) target = $region124
        $region123: #{tpu_custom_call.1} parent=119 // pred_region
          %s2235 = sand.u32 %s505, 1
          %s2236 = scalar_lea.sflag [#allocation7], %s2235
          %s2237 = sand.u32 %s505, 1
          %s2238 = smul.addr %s2237, 8
          %s2239 = scalar_lea.vmem [#allocation10], %s2238
          %2240 = dma.done %s2236, 128
        $region124: #{tpu_custom_call.1} parent=119 // pred_fallthru
          _
      $region120: #{tpu_custom_call.1} parent=5 // pred_fallthru
        _
    $region6: #{tpu_custom_call.1} parent=1 // loop_footer
      %s39 = sadd.s32 1, %s35
    $region7: #{tpu_custom_call.1} parent=1 // loop_footer_branch
      %34 = sbr.rel target = $region3
    $region8: #{tpu_custom_call.1} parent=1 // loop_exit
      _
    %2241 = vsyncpa [#allocation6], 1
    %s2242 = scalar_lea.sflag [#allocation6], 1
    %2243 = vsyncpa %s2242, 1
    %2244 = vsyncpa [#allocation9], 1
    %s2245 = scalar_lea.sflag [#allocation9], 1
    %2246 = vsyncpa %s2245, 1
    %2247 = vsyncpa [#allocation7], 1
    %s2248 = scalar_lea.sflag [#allocation7], 1
    %2249 = vsyncpa %s2248, 1

</llo_original>
